<compile_context>
chip_gen: v6e
topology: v6e:2x2x1
jax: 0.10.0
libtpu: 0.0.40
codegen_flags: <defaults>
</compile_context>

<pallas_src>
from functools import partial

import jax
import jax.numpy as jnp
from jax import lax
from jax.experimental import pallas as pl
from jax.experimental.pallas import tpu as pltpu

N_EMBED = 384
HIDDEN = 4 * N_EMBED
DROPOUT_P = 0.2
_DROP_THRESHOLD_U32 = int(round(DROPOUT_P * (1 << 32)))  # keep iff bits >= threshold


def _round_up(x, m):
    return ((x + m - 1) // m) * m


def _choose_row_tile(M, tm_max=512):
    """Row tile: multiple of 8, <= tm_max, minimizing padded rows."""
    n_tiles = max(1, -(-M // tm_max))          # ceil(M / tm_max)
    tm = _round_up(-(-M // n_tiles), 8)        # even split, rounded to sublane
    tm = min(tm, _round_up(M, 8))
    M_pad = _round_up(M, tm)
    return tm, M_pad


def _dropout_keep_mask(seed_ref, shape, tile_rows):
    """uint32 hash of (seed, global element index) -> boolean keep mask."""
    pid = pl.program_id(0).astype(jnp.uint32)
    rows = lax.broadcasted_iota(jnp.int32, shape, 0).astype(jnp.uint32)
    cols = lax.broadcasted_iota(jnp.int32, shape, 1).astype(jnp.uint32)
    gidx = (pid * jnp.uint32(tile_rows) + rows) * jnp.uint32(shape[1]) + cols

    h = gidx ^ (seed_ref[0].astype(jnp.uint32) * jnp.uint32(0x9E3779B9))
    # murmur-style 32-bit finalizer (wrapping uint32 arithmetic).
    h = h ^ (h >> 16)
    h = h * jnp.uint32(0x7FEB352D)
    h = h ^ (h >> 15)
    h = h * jnp.uint32(0x846CA68B)
    h = h ^ (h >> 16)
    return h >= jnp.uint32(_DROP_THRESHOLD_U32)


def ffn_kernel(seed_ref, x_ref, w1_ref, b1_ref, w2_ref, b2_ref, o_ref, *, training):
    # Cast the streamed f32 row tile to bf16 in VMEM (no extra HBM pass).
    xb = x_ref[...].astype(jnp.bfloat16)

    # First linear (bf16 MXU matmul, f32 accumulation) + bias + ReLU in f32.
    h = jnp.dot(xb, w1_ref[...], preferred_element_type=jnp.float32)
    h = jnp.maximum(h + b1_ref[...], 0.0)

    # Second linear + bias + ReLU.
    y = jnp.dot(h.astype(jnp.bfloat16), w2_ref[...],
                preferred_element_type=jnp.float32)
    y = jnp.maximum(y + b2_ref[...], 0.0)

    if training:
        # Inverted dropout: integer-threshold compare on raw uint32 hash bits
        # (no int->float convert), single select + scale on the VPU.
        keep = _dropout_keep_mask(seed_ref, y.shape, y.shape[0])
        y = jnp.where(keep, y * (1.0 / (1.0 - DROPOUT_P)), 0.0)
    # training=False -> Dropout is identity (eval mode).

    o_ref[...] = y.astype(o_ref.dtype)


def feed_forward(x, w1, b1, w2, b2, *, seed=0, training=False):
    """x: (B, T, C) float32.  Returns (B, T, C) float32."""
    B, T, C = x.shape
    assert C == N_EMBED
    M = B * T

    tm, M_pad = _choose_row_tile(M)
    grid = (M_pad // tm,)

    x2 = x.reshape(M, C)
    if M_pad != M:
        x2 = jnp.pad(x2, ((0, M_pad - M), (0, 0)))

    w1_bf = w1.astype(jnp.bfloat16)
    w2_bf = w2.astype(jnp.bfloat16)
    b1_2d = b1.reshape(1, HIDDEN).astype(jnp.float32)
    b2_2d = b2.reshape(1, C).astype(jnp.float32)
    seed_arr = jnp.array([seed], dtype=jnp.int32)

    kernel = partial(ffn_kernel, training=training)

    flops = 2 * M_pad * (C * HIDDEN + HIDDEN * C)
    bytes_accessed = (
        M_pad * C * 4                      # f32 input rows
        + w1_bf.size * 2 + w2_bf.size * 2  # bf16 weights
        + b1_2d.size * 4 + b2_2d.size * 4  # f32 biases
        + M_pad * C * 4                    # f32 output rows
    )
    cost = pl.CostEstimate(flops=flops, transcendentals=0,
                           bytes_accessed=bytes_accessed)

    out2 = pl.pallas_call(
        kernel,
        out_shape=jax.ShapeDtypeStruct((M_pad, C), jnp.float32),
        grid_spec=pltpu.PrefetchScalarGridSpec(
            num_scalar_prefetch=1,
            grid=grid,
            in_specs=[
                pl.BlockSpec((tm, C), lambda i, seed: (i, 0)),          # x rows (f32)
                pl.BlockSpec((C, HIDDEN), lambda i, seed: (0, 0)),      # W1 (bf16, resident)
                pl.BlockSpec((1, HIDDEN), lambda i, seed: (0, 0)),      # b1 (f32)
                pl.BlockSpec((HIDDEN, C), lambda i, seed: (0, 0)),      # W2 (bf16, resident)
                pl.BlockSpec((1, C), lambda i, seed: (0, 0)),           # b2 (f32)
            ],
            out_specs=pl.BlockSpec((tm, C), lambda i, seed: (i, 0)),
        ),
        compiler_params=pltpu.CompilerParams(
            dimension_semantics=("parallel",),       # shards row tiles across TCs on v7x
            vmem_limit_bytes=32 * 1024 * 1024,       # safe on v5e/v6e/v7x
        ),
        cost_estimate=cost,
    )(seed_arr, x2, w1_bf, b1_2d, w2_bf, b2_2d)

    return out2[:M].reshape(B, T, C)


def _init_params(key):
    """Deterministic init mimicking torch.nn.Linear defaults."""
    k1, k2, k3, k4 = jax.random.split(key, 4)
    bound1 = 1.0 / (N_EMBED ** 0.5)
    bound2 = 1.0 / (HIDDEN ** 0.5)
    # Stored as (in, out) so the kernel computes x @ W (== torch's x @ W.T).
    w1 = jax.random.uniform(k1, (N_EMBED, HIDDEN), jnp.float32, -bound1, bound1)
    b1 = jax.random.uniform(k2, (HIDDEN,), jnp.float32, -bound1, bound1)
    w2 = jax.random.uniform(k3, (HIDDEN, N_EMBED), jnp.float32, -bound2, bound2)
    b2 = jax.random.uniform(k4, (N_EMBED,), jnp.float32, -bound2, bound2)
    return w1, b1, w2, b2


def _reference(x2, w1, b1, w2, b2):
    """Pure-JAX reference mirroring the kernel's bf16 matmul / f32 epilogue."""
    xb = x2.astype(jnp.bfloat16)
    w1b = w1.astype(jnp.bfloat16)
    w2b = w2.astype(jnp.bfloat16)
    h = jnp.maximum(jnp.dot(xb, w1b, preferred_element_type=jnp.float32) + b1, 0.0)
    y = jnp.maximum(
        jnp.dot(h.astype(jnp.bfloat16), w2b, preferred_element_type=jnp.float32) + b2,
        0.0)
    return y  # eval-mode dropout = identity


if __name__ == "__main__":
    key = jax.random.PRNGKey(0)
    kx, kp = jax.random.split(key)

    B, T = 2, 8  # small shapes; n_embed fixed at 384 by the module
    x = jax.random.normal(kx, (B, T, N_EMBED), jnp.float32)
    w1, b1, w2, b2 = _init_params(kp)

    # Eval-mode forward (dropout disabled) -> deterministic, checkable.
    out = feed_forward(x, w1, b1, w2, b2, training=False)
    out = jax.block_until_ready(out)

    ref = _reference(x.reshape(-1, N_EMBED), w1, b1, w2, b2).reshape(B, T, N_EMBED)
    assert out.shape == (B, T, N_EMBED)
    assert jnp.allclose(out, ref, atol=1e-2, rtol=1e-2), "mismatch vs reference"

    # Also exercise the training-mode (dropout) path once.
    out_train = feed_forward(x, w1, b1, w2, b2, seed=123, training=True)
    out_train = jax.block_until_ready(out_train)
    assert out_train.shape == (B, T, N_EMBED)
    assert bool(jnp.all(jnp.isfinite(out_train)))

    print("KERNEL_OK")
</pallas_src>

<mosaic_0001>
module attributes {stable_mosaic.version = 11 : i64} {
  func.func @ffn_kernel(%arg0: i32, %arg1: memref<1xi32, #tpu.memory_space<smem>>, %arg2: memref<16x384xf32, #tpu.memory_space<vmem>>, %arg3: memref<384x1536xbf16, #tpu.memory_space<vmem>>, %arg4: memref<1x1536xf32, #tpu.memory_space<vmem>>, %arg5: memref<1536x384xbf16, #tpu.memory_space<vmem>>, %arg6: memref<1x384xf32, #tpu.memory_space<vmem>>, %arg7: memref<16x384xf32, #tpu.memory_space<vmem>>) attributes {dimension_semantics = [#tpu.dimension_semantics<parallel>], iteration_bounds = array<i64: 1>, scalar_prefetch = 1 : i64, scratch_operands = 0 : i64, tpu.core_type = #tpu.core_type<tc>, window_params = [{transform_indices = @transform_0, window_bounds = array<i64: 16, 384>}, {pipeline_mode = #tpu.pipeline_mode<synchronous>, transform_indices = @transform_1, window_bounds = array<i64: 384, 1536>}, {pipeline_mode = #tpu.pipeline_mode<synchronous>, transform_indices = @transform_2, window_bounds = array<i64: 1, 1536>}, {pipeline_mode = #tpu.pipeline_mode<synchronous>, transform_indices = @transform_3, window_bounds = array<i64: 1536, 384>}, {pipeline_mode = #tpu.pipeline_mode<synchronous>, transform_indices = @transform_4, window_bounds = array<i64: 1, 384>}, {transform_indices = @transform_5, window_bounds = array<i64: 16, 384>}]} {
    %c0 = arith.constant 0 : index
    %c0_0 = arith.constant 0 : index
    %0 = vector.load %arg2[%c0, %c0_0] : memref<16x384xf32, #tpu.memory_space<vmem>>, vector<16x384xf32>
    %1 = arith.truncf %0 : vector<16x384xf32> to vector<16x384xbf16>
    %c0_1 = arith.constant 0 : index
    %c0_2 = arith.constant 0 : index
    %2 = vector.load %arg3[%c0_1, %c0_2] : memref<384x1536xbf16, #tpu.memory_space<vmem>>, vector<384x1536xbf16>
    %cst = arith.constant dense<0.000000e+00> : vector<16x1536xf32>
    %3 = tpu.matmul %1, %2, %cst {dimension_numbers = #tpu.dot_dimension_numbers<[1], [0], [0], [1], [0, 0, 1, 1], [], []>} : vector<16x384xbf16>, vector<384x1536xbf16>, vector<16x1536xf32> -> vector<16x1536xf32>
    %c0_3 = arith.constant 0 : index
    %c0_4 = arith.constant 0 : index
    %4 = vector.load %arg4[%c0_3, %c0_4] : memref<1x1536xf32, #tpu.memory_space<vmem>>, vector<1x1536xf32>
    %5 = vector.broadcast %4 : vector<1x1536xf32> to vector<16x1536xf32>
    %6 = arith.addf %3, %5 : vector<16x1536xf32>
    %cst_5 = arith.constant 0.000000e+00 : f32
    %7 = vector.broadcast %cst_5 : f32 to vector<16x1536xf32>
    %8 = arith.maximumf %6, %7 : vector<16x1536xf32>
    %9 = arith.truncf %8 : vector<16x1536xf32> to vector<16x1536xbf16>
    %c0_6 = arith.constant 0 : index
    %c0_7 = arith.constant 0 : index
    %10 = vector.load %arg5[%c0_6, %c0_7] : memref<1536x384xbf16, #tpu.memory_space<vmem>>, vector<1536x384xbf16>
    %cst_8 = arith.constant dense<0.000000e+00> : vector<16x384xf32>
    %11 = tpu.matmul %9, %10, %cst_8 {dimension_numbers = #tpu.dot_dimension_numbers<[1], [0], [0], [1], [0, 0, 1, 1], [], []>} : vector<16x1536xbf16>, vector<1536x384xbf16>, vector<16x384xf32> -> vector<16x384xf32>
    %c0_9 = arith.constant 0 : index
    %c0_10 = arith.constant 0 : index
    %12 = vector.load %arg6[%c0_9, %c0_10] : memref<1x384xf32, #tpu.memory_space<vmem>>, vector<1x384xf32>
    %13 = vector.broadcast %12 : vector<1x384xf32> to vector<16x384xf32>
    %14 = arith.addf %11, %13 : vector<16x384xf32>
    %cst_11 = arith.constant 0.000000e+00 : f32
    %15 = vector.broadcast %cst_11 : f32 to vector<16x384xf32>
    %16 = arith.maximumf %14, %15 : vector<16x384xf32>
    %c0_12 = arith.constant 0 : index
    %c0_13 = arith.constant 0 : index
    %17 = vector.load %arg7[%c0_12, %c0_13] : memref<16x384xf32, #tpu.memory_space<vmem>>, vector<16x384xf32>
    tpu.vector_store %arg7[%c0_12, %c0_13], %16 {strides = array<i32>} : memref<16x384xf32, #tpu.memory_space<vmem>>, vector<16x384xf32>,
    return
  }
  func.func @transform_0(%arg0: i32, %arg1: memref<1xi32, #tpu.memory_space<smem>>) -> (i32, i32) {
    %c0_i32 = arith.constant 0 : i32
    %c0_i32_0 = arith.constant 0 : i32
    return %arg0, %c0_i32 : i32, i32
  }
  func.func @transform_1(%arg0: i32, %arg1: memref<1xi32, #tpu.memory_space<smem>>) -> (i32, i32) {
    %c0_i32 = arith.constant 0 : i32
    %c0_i32_0 = arith.constant 0 : i32
    %c0_i32_1 = arith.constant 0 : i32
    return %c0_i32, %c0_i32_0 : i32, i32
  }
  func.func @transform_2(%arg0: i32, %arg1: memref<1xi32, #tpu.memory_space<smem>>) -> (i32, i32) {
    %c0_i32 = arith.constant 0 : i32
    %c0_i32_0 = arith.constant 0 : i32
    %c0_i32_1 = arith.constant 0 : i32
    return %c0_i32, %c0_i32_0 : i32, i32
  }
  func.func @transform_3(%arg0: i32, %arg1: memref<1xi32, #tpu.memory_space<smem>>) -> (i32, i32) {
    %c0_i32 = arith.constant 0 : i32
    %c0_i32_0 = arith.constant 0 : i32
    %c0_i32_1 = arith.constant 0 : i32
    return %c0_i32, %c0_i32_0 : i32, i32
  }
  func.func @transform_4(%arg0: i32, %arg1: memref<1xi32, #tpu.memory_space<smem>>) -> (i32, i32) {
    %c0_i32 = arith.constant 0 : i32
    %c0_i32_0 = arith.constant 0 : i32
    %c0_i32_1 = arith.constant 0 : i32
    return %c0_i32, %c0_i32_0 : i32, i32
  }
  func.func @transform_5(%arg0: i32, %arg1: memref<1xi32, #tpu.memory_space<smem>>) -> (i32, i32) {
    %c0_i32 = arith.constant 0 : i32
    %c0_i32_0 = arith.constant 0 : i32
    return %arg0, %c0_i32 : i32, i32
  }
}

</mosaic_0001>

<llo_original>
// kernel: tpu_custom_call.1
$region0: #{tpu_custom_call.1}
  #allocation0 [shape = 'u32[]', space=smem, size = 0x4, offset = 0x4, fixed_abs, tag = 'smem constant byte address 0x4 - core index']
  #allocation1 [shape = 'u32[144,128]{1,0:T(1,128)}', space=vmem, size = 0x12000, scoped, tag = 'internal scratch']
  #allocation2 [shape = 's32[1]{0}', space=sflag, size = 0x4, scoped, tag = 'scoped memory for tpu_custom_call.1']
  #allocation3 [shape = 's32[1]{0:T(128)S(6)}', space=smem, size = 0x200, scoped, tag = 'prefetched SMEM operand 0']
  %s0 = inlined_call_operand.<no memory space> [shape: s32[1], index: 0, kind: input, shape index: {}]
  %s1 = inlined_call_operand.hbm [shape: f32[16,384], index: 1, kind: input, shape index: {}]
  %s2 = inlined_call_operand.hbm [shape: bf16[384,1536], index: 2, kind: input, shape index: {}]
  %s3 = inlined_call_operand.hbm [shape: f32[1,1536], index: 3, kind: input, shape index: {}]
  %s4 = inlined_call_operand.hbm [shape: bf16[1536,384], index: 4, kind: input, shape index: {}]
  %s5 = inlined_call_operand.hbm [shape: f32[1,384], index: 5, kind: input, shape index: {}]
  %s6 = inlined_call_operand.hbm [shape: f32[16,384], index: 6, kind: output, shape index: {}]
  %s7 = sld [smem:[#allocation0]]
  $region50: #{tpu_custom_call.1} parent=0
    _
  %s9 = ssub.s32 1, %s7
  %s10 = scalar_select 0, %s9, %s7
  %11 = sst [smem:[#allocation3]] %s0
  $region1: #{tpu_custom_call.1} parent=0
    #allocation4 [shape = 'u8[24576]{0}', space=vmem, size = 0x6000, scoped, tag = 'input window, operand 1, single buffered']
    #allocation5 [shape = 's32[1]{0}', space=sflag, size = 0x4, scoped, tag = 'scoped memory for tpu_custom_call.1']
    #allocation6 [shape = 's32[1]{0}', space=sflag, size = 0x4, scoped, tag = 'scoped memory for tpu_custom_call.1']
    #allocation7 [shape = 'u8[1179648]{0}', space=vmem, size = 0x120000, scoped, tag = 'input window, operand 2, single buffered']
    #allocation8 [shape = 's32[1]{0}', space=sflag, size = 0x4, scoped, tag = 'scoped memory for tpu_custom_call.1']
    #allocation9 [shape = 'u8[6144]{0}', space=vmem, size = 0x1800, scoped, tag = 'input window, operand 3, single buffered']
    #allocation10 [shape = 'u8[1179648]{0}', space=vmem, size = 0x120000, scoped, tag = 'input window, operand 4, single buffered']
    #allocation11 [shape = 's32[1]{0}', space=sflag, size = 0x4, scoped, tag = 'scoped memory for tpu_custom_call.1']
    #allocation12 [shape = 'u8[1536]{0}', space=vmem, size = 0x800, scoped, tag = 'input window, operand 5, single buffered']
    #allocation13 [shape = 'u8[24576]{0}', space=vmem, size = 0x6000, scoped, tag = 'output window, operand 0, single buffered']
    %12 = vsyncpa [#allocation5], 0
    %13 = vsyncpa [#allocation8], 0
    %14 = vsyncpa [#allocation11], 0
    %15 = vsyncpa [#allocation6], 0
    // Predicated region
    $region2: #{tpu_custom_call.1} parent=1 // pred_check
      _
    $region3: #{tpu_custom_call.1} parent=1 // pred_check_branch
      %17 = sbr.rel (0) target = $region5
    $region4: #{tpu_custom_call.1} parent=1 // pred_region
      %s19 = ssub.s32 768, 768
      %20 = vsyncadd [#allocation5], %s19
      %s21 = sshll.u32 [#allocation4], 4
      %s22 = int_to_ptr.vmem [resolvable:$true] %s21
      %27 = dma.hbm_to_vmem [thread:$0]  %s1, 768, %s22, [#allocation5], 384, 384, 24
    $region5: #{tpu_custom_call.1} parent=1 // pred_fallthru
      _
    // Predicated region
    $region6: #{tpu_custom_call.1} parent=1 // pred_check
      _
    $region7: #{tpu_custom_call.1} parent=1 // pred_check_branch
      %29 = sbr.rel (0) target = $region9
    $region8: #{tpu_custom_call.1} parent=1 // pred_region
      %s31 = ssub.s32 36864, 36864
      %32 = vsyncadd [#allocation8], %s31
      %s33 = sshll.u32 [#allocation7], 4
      %s34 = int_to_ptr.vmem [resolvable:$true] %s33
      %39 = dma.hbm_to_vmem [thread:$0]  %s2, 36864, %s34, [#allocation8], 768, 768, 48
    $region9: #{tpu_custom_call.1} parent=1 // pred_fallthru
      _
    // Predicated region
    $region10: #{tpu_custom_call.1} parent=1 // pred_check
      _
    $region11: #{tpu_custom_call.1} parent=1 // pred_check_branch
      %41 = sbr.rel (0) target = $region13
    $region12: #{tpu_custom_call.1} parent=1 // pred_region
      %s43 = ssub.s32 192, 192
      %44 = vsyncadd [#allocation8], %s43
      %s46 = sshll.u32 [#allocation9], 4
      %s47 = int_to_ptr.vmem [resolvable:$true] %s46
      %49 = dma.hbm_to_vmem [thread:$0]  %s3, 192, %s47, [#allocation8]
    $region13: #{tpu_custom_call.1} parent=1 // pred_fallthru
      _
    // Predicated region
    $region14: #{tpu_custom_call.1} parent=1 // pred_check
      _
    $region15: #{tpu_custom_call.1} parent=1 // pred_check_branch
      %51 = sbr.rel (0) target = $region17
    $region16: #{tpu_custom_call.1} parent=1 // pred_region
      %s53 = ssub.s32 36864, 36864
      %54 = vsyncadd [#allocation11], %s53
      %s55 = sshll.u32 [#allocation10], 4
      %s56 = int_to_ptr.vmem [resolvable:$true] %s55
      %61 = dma.hbm_to_vmem [thread:$0]  %s4, 36864, %s56, [#allocation11], 192, 192, 12
    $region17: #{tpu_custom_call.1} parent=1 // pred_fallthru
      _
    // Predicated region
    $region18: #{tpu_custom_call.1} parent=1 // pred_check
      _
    $region19: #{tpu_custom_call.1} parent=1 // pred_check_branch
      %63 = sbr.rel (0) target = $region21
    $region20: #{tpu_custom_call.1} parent=1 // pred_region
      %s65 = ssub.s32 48, 48
      %66 = vsyncadd [#allocation11], %s65
      %s68 = sshll.u32 [#allocation12], 4
      %s69 = int_to_ptr.vmem [resolvable:$true] %s68
      %71 = dma.hbm_to_vmem [thread:$0]  %s5, 48, %s69, [#allocation11]
    $region21: #{tpu_custom_call.1} parent=1 // pred_fallthru
      _
    // Predicated region
    $region22: #{tpu_custom_call.1} parent=1 // pred_check
      _
    $region23: #{tpu_custom_call.1} parent=1 // pred_check_branch
      %73 = sbr.rel (0) target = $region25
    $region24: #{tpu_custom_call.1} parent=1 // pred_region
      %74 = dma.done [#allocation5], 768
    $region25: #{tpu_custom_call.1} parent=1 // pred_fallthru
      _
    // Predicated region
    $region26: #{tpu_custom_call.1} parent=1 // pred_check
      _
    $region27: #{tpu_custom_call.1} parent=1 // pred_check_branch
      %76 = sbr.rel (0) target = $region29
    $region28: #{tpu_custom_call.1} parent=1 // pred_region
      %77 = dma.done [#allocation8], 36864
    $region29: #{tpu_custom_call.1} parent=1 // pred_fallthru
      _
    // Predicated region
    $region30: #{tpu_custom_call.1} parent=1 // pred_check
      _
    $region31: #{tpu_custom_call.1} parent=1 // pred_check_branch
      %79 = sbr.rel (0) target = $region33
    $region32: #{tpu_custom_call.1} parent=1 // pred_region
      %80 = dma.done [#allocation8], 192
    $region33: #{tpu_custom_call.1} parent=1 // pred_fallthru
      _
    // Predicated region
    $region34: #{tpu_custom_call.1} parent=1 // pred_check
      _
    $region35: #{tpu_custom_call.1} parent=1 // pred_check_branch
      %82 = sbr.rel (0) target = $region37
    $region36: #{tpu_custom_call.1} parent=1 // pred_region
      %83 = dma.done [#allocation11], 36864
    $region37: #{tpu_custom_call.1} parent=1 // pred_fallthru
      _
    // Predicated region
    $region38: #{tpu_custom_call.1} parent=1 // pred_check
      _
    $region39: #{tpu_custom_call.1} parent=1 // pred_check_branch
      %85 = sbr.rel (0) target = $region41
    $region40: #{tpu_custom_call.1} parent=1 // pred_region
      %86 = dma.done [#allocation11], 48
    $region41: #{tpu_custom_call.1} parent=1 // pred_fallthru
      _
    %v88 = vld [vmem:[#allocation4] sm:$0xff]
    %v89 = vld [vmem:[#allocation4 + $0x8] sm:$0xff]
    %v90 = vld [vmem:[#allocation4 + $0x10] sm:$0xff]
    %v91 = vld [vmem:[#allocation4 + $0x18] sm:$0xff]
    %v92 = vld [vmem:[#allocation4 + $0x20] sm:$0xff]
    %v93 = vld [vmem:[#allocation4 + $0x28] sm:$0xff]
    %v94 = vpack.c.bf16 %v91, %v88
    %v95 = vpack.c.bf16 %v92, %v89
    %v96 = vpack.c.bf16 %v93, %v90
    %v97 = vld [vmem:[#allocation7] sm:$0xff]
    %v98 = vld [vmem:[#allocation7 + $0x8] sm:$0xff]
    %v99 = vld [vmem:[#allocation7 + $0x10] sm:$0xff]
    %v100 = vld [vmem:[#allocation7 + $0x18] sm:$0xff]
    %v101 = vld [vmem:[#allocation7 + $0x20] sm:$0xff]
    %v102 = vld [vmem:[#allocation7 + $0x28] sm:$0xff]
    %v103 = vld [vmem:[#allocation7 + $0x30] sm:$0xff]
    %v104 = vld [vmem:[#allocation7 + $0x38] sm:$0xff]
    %v105 = vld [vmem:[#allocation7 + $0x40] sm:$0xff]
    %v106 = vld [vmem:[#allocation7 + $0x48] sm:$0xff]
    %v107 = vld [vmem:[#allocation7 + $0x50] sm:$0xff]
    %v108 = vld [vmem:[#allocation7 + $0x58] sm:$0xff]
    %v109 = vld [vmem:[#allocation7 + $0x60] sm:$0xff]
    %v110 = vld [vmem:[#allocation7 + $0x68] sm:$0xff]
    %v111 = vld [vmem:[#allocation7 + $0x70] sm:$0xff]
    %v112 = vld [vmem:[#allocation7 + $0x78] sm:$0xff]
    %v113 = vld [vmem:[#allocation7 + $0x80] sm:$0xff]
    %v114 = vld [vmem:[#allocation7 + $0x88] sm:$0xff]
    %v115 = vld [vmem:[#allocation7 + $0x90] sm:$0xff]
    %v116 = vld [vmem:[#allocation7 + $0x98] sm:$0xff]
    %v117 = vld [vmem:[#allocation7 + $0xa0] sm:$0xff]
    %v118 = vld [vmem:[#allocation7 + $0xa8] sm:$0xff]
    %v119 = vld [vmem:[#allocation7 + $0xb0] sm:$0xff]
    %v120 = vld [vmem:[#allocation7 + $0xb8] sm:$0xff]
    %v121 = vld [vmem:[#allocation7 + $0xc0] sm:$0xff]
    %v122 = vld [vmem:[#allocation7 + $0xc8] sm:$0xff]
    %v123 = vld [vmem:[#allocation7 + $0xd0] sm:$0xff]
    %v124 = vld [vmem:[#allocation7 + $0xd8] sm:$0xff]
    %v125 = vld [vmem:[#allocation7 + $0xe0] sm:$0xff]
    %v126 = vld [vmem:[#allocation7 + $0xe8] sm:$0xff]
    %v127 = vld [vmem:[#allocation7 + $0xf0] sm:$0xff]
    %v128 = vld [vmem:[#allocation7 + $0xf8] sm:$0xff]
    %v129 = vld [vmem:[#allocation7 + $0x100] sm:$0xff]
    %v130 = vld [vmem:[#allocation7 + $0x108] sm:$0xff]
    %v131 = vld [vmem:[#allocation7 + $0x110] sm:$0xff]
    %v132 = vld [vmem:[#allocation7 + $0x118] sm:$0xff]
    %v133 = vld [vmem:[#allocation7 + $0x120] sm:$0xff]
    %v134 = vld [vmem:[#allocation7 + $0x128] sm:$0xff]
    %v135 = vld [vmem:[#allocation7 + $0x130] sm:$0xff]
    %v136 = vld [vmem:[#allocation7 + $0x138] sm:$0xff]
    %v137 = vld [vmem:[#allocation7 + $0x140] sm:$0xff]
    %v138 = vld [vmem:[#allocation7 + $0x148] sm:$0xff]
    %v139 = vld [vmem:[#allocation7 + $0x150] sm:$0xff]
    %v140 = vld [vmem:[#allocation7 + $0x158] sm:$0xff]
    %v141 = vld [vmem:[#allocation7 + $0x160] sm:$0xff]
    %v142 = vld [vmem:[#allocation7 + $0x168] sm:$0xff]
    %v143 = vld [vmem:[#allocation7 + $0x170] sm:$0xff]
    %v144 = vld [vmem:[#allocation7 + $0x178] sm:$0xff]
    %v145 = vld [vmem:[#allocation7 + $0x180] sm:$0xff]
    %v146 = vld [vmem:[#allocation7 + $0x188] sm:$0xff]
    %v147 = vld [vmem:[#allocation7 + $0x190] sm:$0xff]
    %v148 = vld [vmem:[#allocation7 + $0x198] sm:$0xff]
    %v149 = vld [vmem:[#allocation7 + $0x1a0] sm:$0xff]
    %v150 = vld [vmem:[#allocation7 + $0x1a8] sm:$0xff]
    %v151 = vld [vmem:[#allocation7 + $0x1b0] sm:$0xff]
    %v152 = vld [vmem:[#allocation7 + $0x1b8] sm:$0xff]
    %v153 = vld [vmem:[#allocation7 + $0x1c0] sm:$0xff]
    %v154 = vld [vmem:[#allocation7 + $0x1c8] sm:$0xff]
    %v155 = vld [vmem:[#allocation7 + $0x1d0] sm:$0xff]
    %v156 = vld [vmem:[#allocation7 + $0x1d8] sm:$0xff]
    %v157 = vld [vmem:[#allocation7 + $0x1e0] sm:$0xff]
    %v158 = vld [vmem:[#allocation7 + $0x1e8] sm:$0xff]
    %v159 = vld [vmem:[#allocation7 + $0x1f0] sm:$0xff]
    %v160 = vld [vmem:[#allocation7 + $0x1f8] sm:$0xff]
    %v161 = vld [vmem:[#allocation7 + $0x200] sm:$0xff]
    %v162 = vld [vmem:[#allocation7 + $0x208] sm:$0xff]
    %v163 = vld [vmem:[#allocation7 + $0x210] sm:$0xff]
    %v164 = vld [vmem:[#allocation7 + $0x218] sm:$0xff]
    %v165 = vld [vmem:[#allocation7 + $0x220] sm:$0xff]
    %v166 = vld [vmem:[#allocation7 + $0x228] sm:$0xff]
    %v167 = vld [vmem:[#allocation7 + $0x230] sm:$0xff]
    %v168 = vld [vmem:[#allocation7 + $0x238] sm:$0xff]
    %v169 = vld [vmem:[#allocation7 + $0x240] sm:$0xff]
    %v170 = vld [vmem:[#allocation7 + $0x248] sm:$0xff]
    %v171 = vld [vmem:[#allocation7 + $0x250] sm:$0xff]
    %v172 = vld [vmem:[#allocation7 + $0x258] sm:$0xff]
    %v173 = vld [vmem:[#allocation7 + $0x260] sm:$0xff]
    %v174 = vld [vmem:[#allocation7 + $0x268] sm:$0xff]
    %v175 = vld [vmem:[#allocation7 + $0x270] sm:$0xff]
    %v176 = vld [vmem:[#allocation7 + $0x278] sm:$0xff]
    %v177 = vld [vmem:[#allocation7 + $0x280] sm:$0xff]
    %v178 = vld [vmem:[#allocation7 + $0x288] sm:$0xff]
    %v179 = vld [vmem:[#allocation7 + $0x290] sm:$0xff]
    %v180 = vld [vmem:[#allocation7 + $0x298] sm:$0xff]
    %v181 = vld [vmem:[#allocation7 + $0x2a0] sm:$0xff]
    %v182 = vld [vmem:[#allocation7 + $0x2a8] sm:$0xff]
    %v183 = vld [vmem:[#allocation7 + $0x2b0] sm:$0xff]
    %v184 = vld [vmem:[#allocation7 + $0x2b8] sm:$0xff]
    %v185 = vld [vmem:[#allocation7 + $0x2c0] sm:$0xff]
    %v186 = vld [vmem:[#allocation7 + $0x2c8] sm:$0xff]
    %v187 = vld [vmem:[#allocation7 + $0x2d0] sm:$0xff]
    %v188 = vld [vmem:[#allocation7 + $0x2d8] sm:$0xff]
    %v189 = vld [vmem:[#allocation7 + $0x2e0] sm:$0xff]
    %v190 = vld [vmem:[#allocation7 + $0x2e8] sm:$0xff]
    %v191 = vld [vmem:[#allocation7 + $0x2f0] sm:$0xff]
    %v192 = vld [vmem:[#allocation7 + $0x2f8] sm:$0xff]
    %v193 = vld [vmem:[#allocation7 + $0x300] sm:$0xff]
    %v194 = vld [vmem:[#allocation7 + $0x308] sm:$0xff]
    %v195 = vld [vmem:[#allocation7 + $0x310] sm:$0xff]
    %v196 = vld [vmem:[#allocation7 + $0x318] sm:$0xff]
    %v197 = vld [vmem:[#allocation7 + $0x320] sm:$0xff]
    %v198 = vld [vmem:[#allocation7 + $0x328] sm:$0xff]
    %v199 = vld [vmem:[#allocation7 + $0x330] sm:$0xff]
    %v200 = vld [vmem:[#allocation7 + $0x338] sm:$0xff]
    %v201 = vld [vmem:[#allocation7 + $0x340] sm:$0xff]
    %v202 = vld [vmem:[#allocation7 + $0x348] sm:$0xff]
    %v203 = vld [vmem:[#allocation7 + $0x350] sm:$0xff]
    %v204 = vld [vmem:[#allocation7 + $0x358] sm:$0xff]
    %v205 = vld [vmem:[#allocation7 + $0x360] sm:$0xff]
    %v206 = vld [vmem:[#allocation7 + $0x368] sm:$0xff]
    %v207 = vld [vmem:[#allocation7 + $0x370] sm:$0xff]
    %v208 = vld [vmem:[#allocation7 + $0x378] sm:$0xff]
    %v209 = vld [vmem:[#allocation7 + $0x380] sm:$0xff]
    %v210 = vld [vmem:[#allocation7 + $0x388] sm:$0xff]
    %v211 = vld [vmem:[#allocation7 + $0x390] sm:$0xff]
    %v212 = vld [vmem:[#allocation7 + $0x398] sm:$0xff]
    %v213 = vld [vmem:[#allocation7 + $0x3a0] sm:$0xff]
    %v214 = vld [vmem:[#allocation7 + $0x3a8] sm:$0xff]
    %v215 = vld [vmem:[#allocation7 + $0x3b0] sm:$0xff]
    %v216 = vld [vmem:[#allocation7 + $0x3b8] sm:$0xff]
    %v217 = vld [vmem:[#allocation7 + $0x3c0] sm:$0xff]
    %v218 = vld [vmem:[#allocation7 + $0x3c8] sm:$0xff]
    %v219 = vld [vmem:[#allocation7 + $0x3d0] sm:$0xff]
    %v220 = vld [vmem:[#allocation7 + $0x3d8] sm:$0xff]
    %v221 = vld [vmem:[#allocation7 + $0x3e0] sm:$0xff]
    %v222 = vld [vmem:[#allocation7 + $0x3e8] sm:$0xff]
    %v223 = vld [vmem:[#allocation7 + $0x3f0] sm:$0xff]
    %v224 = vld [vmem:[#allocation7 + $0x3f8] sm:$0xff]
    %v225 = vld [vmem:[#allocation7 + $0x400] sm:$0xff]
    %v226 = vld [vmem:[#allocation7 + $0x408] sm:$0xff]
    %v227 = vld [vmem:[#allocation7 + $0x410] sm:$0xff]
    %v228 = vld [vmem:[#allocation7 + $0x418] sm:$0xff]
    %v229 = vld [vmem:[#allocation7 + $0x420] sm:$0xff]
    %v230 = vld [vmem:[#allocation7 + $0x428] sm:$0xff]
    %v231 = vld [vmem:[#allocation7 + $0x430] sm:$0xff]
    %v232 = vld [vmem:[#allocation7 + $0x438] sm:$0xff]
    %v233 = vld [vmem:[#allocation7 + $0x440] sm:$0xff]
    %v234 = vld [vmem:[#allocation7 + $0x448] sm:$0xff]
    %v235 = vld [vmem:[#allocation7 + $0x450] sm:$0xff]
    %v236 = vld [vmem:[#allocation7 + $0x458] sm:$0xff]
    %v237 = vld [vmem:[#allocation7 + $0x460] sm:$0xff]
    %v238 = vld [vmem:[#allocation7 + $0x468] sm:$0xff]
    %v239 = vld [vmem:[#allocation7 + $0x470] sm:$0xff]
    %v240 = vld [vmem:[#allocation7 + $0x478] sm:$0xff]
    %v241 = vld [vmem:[#allocation7 + $0x480] sm:$0xff]
    %v242 = vld [vmem:[#allocation7 + $0x488] sm:$0xff]
    %v243 = vld [vmem:[#allocation7 + $0x490] sm:$0xff]
    %v244 = vld [vmem:[#allocation7 + $0x498] sm:$0xff]
    %v245 = vld [vmem:[#allocation7 + $0x4a0] sm:$0xff]
    %v246 = vld [vmem:[#allocation7 + $0x4a8] sm:$0xff]
    %v247 = vld [vmem:[#allocation7 + $0x4b0] sm:$0xff]
    %v248 = vld [vmem:[#allocation7 + $0x4b8] sm:$0xff]
    %v249 = vld [vmem:[#allocation7 + $0x4c0] sm:$0xff]
    %v250 = vld [vmem:[#allocation7 + $0x4c8] sm:$0xff]
    %v251 = vld [vmem:[#allocation7 + $0x4d0] sm:$0xff]
    %v252 = vld [vmem:[#allocation7 + $0x4d8] sm:$0xff]
    %v253 = vld [vmem:[#allocation7 + $0x4e0] sm:$0xff]
    %v254 = vld [vmem:[#allocation7 + $0x4e8] sm:$0xff]
    %v255 = vld [vmem:[#allocation7 + $0x4f0] sm:$0xff]
    %v256 = vld [vmem:[#allocation7 + $0x4f8] sm:$0xff]
    %v257 = vld [vmem:[#allocation7 + $0x500] sm:$0xff]
    %v258 = vld [vmem:[#allocation7 + $0x508] sm:$0xff]
    %v259 = vld [vmem:[#allocation7 + $0x510] sm:$0xff]
    %v260 = vld [vmem:[#allocation7 + $0x518] sm:$0xff]
    %v261 = vld [vmem:[#allocation7 + $0x520] sm:$0xff]
    %v262 = vld [vmem:[#allocation7 + $0x528] sm:$0xff]
    %v263 = vld [vmem:[#allocation7 + $0x530] sm:$0xff]
    %v264 = vld [vmem:[#allocation7 + $0x538] sm:$0xff]
    %v265 = vld [vmem:[#allocation7 + $0x540] sm:$0xff]
    %v266 = vld [vmem:[#allocation7 + $0x548] sm:$0xff]
    %v267 = vld [vmem:[#allocation7 + $0x550] sm:$0xff]
    %v268 = vld [vmem:[#allocation7 + $0x558] sm:$0xff]
    %v269 = vld [vmem:[#allocation7 + $0x560] sm:$0xff]
    %v270 = vld [vmem:[#allocation7 + $0x568] sm:$0xff]
    %v271 = vld [vmem:[#allocation7 + $0x570] sm:$0xff]
    %v272 = vld [vmem:[#allocation7 + $0x578] sm:$0xff]
    %v273 = vld [vmem:[#allocation7 + $0x580] sm:$0xff]
    %v274 = vld [vmem:[#allocation7 + $0x588] sm:$0xff]
    %v275 = vld [vmem:[#allocation7 + $0x590] sm:$0xff]
    %v276 = vld [vmem:[#allocation7 + $0x598] sm:$0xff]
    %v277 = vld [vmem:[#allocation7 + $0x5a0] sm:$0xff]
    %v278 = vld [vmem:[#allocation7 + $0x5a8] sm:$0xff]
    %v279 = vld [vmem:[#allocation7 + $0x5b0] sm:$0xff]
    %v280 = vld [vmem:[#allocation7 + $0x5b8] sm:$0xff]
    %v281 = vld [vmem:[#allocation7 + $0x5c0] sm:$0xff]
    %v282 = vld [vmem:[#allocation7 + $0x5c8] sm:$0xff]
    %v283 = vld [vmem:[#allocation7 + $0x5d0] sm:$0xff]
    %v284 = vld [vmem:[#allocation7 + $0x5d8] sm:$0xff]
    %v285 = vld [vmem:[#allocation7 + $0x5e0] sm:$0xff]
    %v286 = vld [vmem:[#allocation7 + $0x5e8] sm:$0xff]
    %v287 = vld [vmem:[#allocation7 + $0x5f0] sm:$0xff]
    %v288 = vld [vmem:[#allocation7 + $0x5f8] sm:$0xff]
    %v289 = vld [vmem:[#allocation7 + $0x600] sm:$0xff]
    %v290 = vld [vmem:[#allocation7 + $0x608] sm:$0xff]
    %v291 = vld [vmem:[#allocation7 + $0x610] sm:$0xff]
    %v292 = vld [vmem:[#allocation7 + $0x618] sm:$0xff]
    %v293 = vld [vmem:[#allocation7 + $0x620] sm:$0xff]
    %v294 = vld [vmem:[#allocation7 + $0x628] sm:$0xff]
    %v295 = vld [vmem:[#allocation7 + $0x630] sm:$0xff]
    %v296 = vld [vmem:[#allocation7 + $0x638] sm:$0xff]
    %v297 = vld [vmem:[#allocation7 + $0x640] sm:$0xff]
    %v298 = vld [vmem:[#allocation7 + $0x648] sm:$0xff]
    %v299 = vld [vmem:[#allocation7 + $0x650] sm:$0xff]
    %v300 = vld [vmem:[#allocation7 + $0x658] sm:$0xff]
    %v301 = vld [vmem:[#allocation7 + $0x660] sm:$0xff]
    %v302 = vld [vmem:[#allocation7 + $0x668] sm:$0xff]
    %v303 = vld [vmem:[#allocation7 + $0x670] sm:$0xff]
    %v304 = vld [vmem:[#allocation7 + $0x678] sm:$0xff]
    %v305 = vld [vmem:[#allocation7 + $0x680] sm:$0xff]
    %v306 = vld [vmem:[#allocation7 + $0x688] sm:$0xff]
    %v307 = vld [vmem:[#allocation7 + $0x690] sm:$0xff]
    %v308 = vld [vmem:[#allocation7 + $0x698] sm:$0xff]
    %v309 = vld [vmem:[#allocation7 + $0x6a0] sm:$0xff]
    %v310 = vld [vmem:[#allocation7 + $0x6a8] sm:$0xff]
    %v311 = vld [vmem:[#allocation7 + $0x6b0] sm:$0xff]
    %v312 = vld [vmem:[#allocation7 + $0x6b8] sm:$0xff]
    %v313 = vld [vmem:[#allocation7 + $0x6c0] sm:$0xff]
    %v314 = vld [vmem:[#allocation7 + $0x6c8] sm:$0xff]
    %v315 = vld [vmem:[#allocation7 + $0x6d0] sm:$0xff]
    %v316 = vld [vmem:[#allocation7 + $0x6d8] sm:$0xff]
    %v317 = vld [vmem:[#allocation7 + $0x6e0] sm:$0xff]
    %v318 = vld [vmem:[#allocation7 + $0x6e8] sm:$0xff]
    %v319 = vld [vmem:[#allocation7 + $0x6f0] sm:$0xff]
    %v320 = vld [vmem:[#allocation7 + $0x6f8] sm:$0xff]
    %v321 = vld [vmem:[#allocation7 + $0x700] sm:$0xff]
    %v322 = vld [vmem:[#allocation7 + $0x708] sm:$0xff]
    %v323 = vld [vmem:[#allocation7 + $0x710] sm:$0xff]
    %v324 = vld [vmem:[#allocation7 + $0x718] sm:$0xff]
    %v325 = vld [vmem:[#allocation7 + $0x720] sm:$0xff]
    %v326 = vld [vmem:[#allocation7 + $0x728] sm:$0xff]
    %v327 = vld [vmem:[#allocation7 + $0x730] sm:$0xff]
    %v328 = vld [vmem:[#allocation7 + $0x738] sm:$0xff]
    %v329 = vld [vmem:[#allocation7 + $0x740] sm:$0xff]
    %v330 = vld [vmem:[#allocation7 + $0x748] sm:$0xff]
    %v331 = vld [vmem:[#allocation7 + $0x750] sm:$0xff]
    %v332 = vld [vmem:[#allocation7 + $0x758] sm:$0xff]
    %v333 = vld [vmem:[#allocation7 + $0x760] sm:$0xff]
    %v334 = vld [vmem:[#allocation7 + $0x768] sm:$0xff]
    %v335 = vld [vmem:[#allocation7 + $0x770] sm:$0xff]
    %v336 = vld [vmem:[#allocation7 + $0x778] sm:$0xff]
    %v337 = vld [vmem:[#allocation7 + $0x780] sm:$0xff]
    %v338 = vld [vmem:[#allocation7 + $0x788] sm:$0xff]
    %v339 = vld [vmem:[#allocation7 + $0x790] sm:$0xff]
    %v340 = vld [vmem:[#allocation7 + $0x798] sm:$0xff]
    %v341 = vld [vmem:[#allocation7 + $0x7a0] sm:$0xff]
    %v342 = vld [vmem:[#allocation7 + $0x7a8] sm:$0xff]
    %v343 = vld [vmem:[#allocation7 + $0x7b0] sm:$0xff]
    %v344 = vld [vmem:[#allocation7 + $0x7b8] sm:$0xff]
    %v345 = vld [vmem:[#allocation7 + $0x7c0] sm:$0xff]
    %v346 = vld [vmem:[#allocation7 + $0x7c8] sm:$0xff]
    %v347 = vld [vmem:[#allocation7 + $0x7d0] sm:$0xff]
    %v348 = vld [vmem:[#allocation7 + $0x7d8] sm:$0xff]
    %v349 = vld [vmem:[#allocation7 + $0x7e0] sm:$0xff]
    %v350 = vld [vmem:[#allocation7 + $0x7e8] sm:$0xff]
    %v351 = vld [vmem:[#allocation7 + $0x7f0] sm:$0xff]
    %v352 = vld [vmem:[#allocation7 + $0x7f8] sm:$0xff]
    %v353 = vld [vmem:[#allocation7 + $0x800] sm:$0xff]
    %v354 = vld [vmem:[#allocation7 + $0x808] sm:$0xff]
    %v355 = vld [vmem:[#allocation7 + $0x810] sm:$0xff]
    %v356 = vld [vmem:[#allocation7 + $0x818] sm:$0xff]
    %v357 = vld [vmem:[#allocation7 + $0x820] sm:$0xff]
    %v358 = vld [vmem:[#allocation7 + $0x828] sm:$0xff]
    %v359 = vld [vmem:[#allocation7 + $0x830] sm:$0xff]
    %v360 = vld [vmem:[#allocation7 + $0x838] sm:$0xff]
    %v361 = vld [vmem:[#allocation7 + $0x840] sm:$0xff]
    %v362 = vld [vmem:[#allocation7 + $0x848] sm:$0xff]
    %v363 = vld [vmem:[#allocation7 + $0x850] sm:$0xff]
    %v364 = vld [vmem:[#allocation7 + $0x858] sm:$0xff]
    %v365 = vld [vmem:[#allocation7 + $0x860] sm:$0xff]
    %v366 = vld [vmem:[#allocation7 + $0x868] sm:$0xff]
    %v367 = vld [vmem:[#allocation7 + $0x870] sm:$0xff]
    %v368 = vld [vmem:[#allocation7 + $0x878] sm:$0xff]
    %v369 = vld [vmem:[#allocation7 + $0x880] sm:$0xff]
    %v370 = vld [vmem:[#allocation7 + $0x888] sm:$0xff]
    %v371 = vld [vmem:[#allocation7 + $0x890] sm:$0xff]
    %v372 = vld [vmem:[#allocation7 + $0x898] sm:$0xff]
    %v373 = vld [vmem:[#allocation7 + $0x8a0] sm:$0xff]
    %v374 = vld [vmem:[#allocation7 + $0x8a8] sm:$0xff]
    %v375 = vld [vmem:[#allocation7 + $0x8b0] sm:$0xff]
    %v376 = vld [vmem:[#allocation7 + $0x8b8] sm:$0xff]
    %v377 = vld [vmem:[#allocation7 + $0x8c0] sm:$0xff]
    %v378 = vld [vmem:[#allocation7 + $0x8c8] sm:$0xff]
    %v379 = vld [vmem:[#allocation7 + $0x8d0] sm:$0xff]
    %v380 = vld [vmem:[#allocation7 + $0x8d8] sm:$0xff]
    %v381 = vld [vmem:[#allocation7 + $0x8e0] sm:$0xff]
    %v382 = vld [vmem:[#allocation7 + $0x8e8] sm:$0xff]
    %v383 = vld [vmem:[#allocation7 + $0x8f0] sm:$0xff]
    %v384 = vld [vmem:[#allocation7 + $0x8f8] sm:$0xff]
    %v385 = vld [vmem:[#allocation9] sm:$0xff]
    %v386 = vld [vmem:[#allocation9 + $0x8] sm:$0xf]
    %v389 = vlaneseq
    %v390 = vshrl.u32 %v389, 7
    %v391 = vsub.s32 0, %v390
    %v392 = vrot.slane %v385, %v391
    %v393 = vlaneseq
    %v394 = vshrl.u32 %v393, 7
    %v395 = vsub.s32 1, %v394
    %v396 = vrot.slane %v385, %v395
    %v397 = vlaneseq
    %v398 = vshrl.u32 %v397, 7
    %v399 = vsub.s32 2, %v398
    %v400 = vrot.slane %v385, %v399
    %v401 = vlaneseq
    %v402 = vshrl.u32 %v401, 7
    %v403 = vsub.s32 3, %v402
    %v404 = vrot.slane %v385, %v403
    %v405 = vlaneseq
    %v406 = vshrl.u32 %v405, 7
    %v407 = vsub.s32 4, %v406
    %v408 = vrot.slane %v385, %v407
    %v409 = vlaneseq
    %v410 = vshrl.u32 %v409, 7
    %v411 = vsub.s32 5, %v410
    %v412 = vrot.slane %v385, %v411
    %v413 = vlaneseq
    %v414 = vshrl.u32 %v413, 7
    %v415 = vsub.s32 6, %v414
    %v416 = vrot.slane %v385, %v415
    %v417 = vlaneseq
    %v418 = vshrl.u32 %v417, 7
    %v419 = vsub.s32 7, %v418
    %v420 = vrot.slane %v385, %v419
    %v421 = vlaneseq
    %v422 = vshrl.u32 %v421, 7
    %v423 = vsub.s32 0, %v422
    %v424 = vrot.slane %v386, %v423
    %v425 = vlaneseq
    %v426 = vshrl.u32 %v425, 7
    %v427 = vsub.s32 1, %v426
    %v428 = vrot.slane %v386, %v427
    %v429 = vlaneseq
    %v430 = vshrl.u32 %v429, 7
    %v431 = vsub.s32 2, %v430
    %v432 = vrot.slane %v386, %v431
    %v433 = vlaneseq
    %v434 = vshrl.u32 %v433, 7
    %v435 = vsub.s32 3, %v434
    %v436 = vrot.slane %v386, %v435
    %v737 = vunpack.c.l.b16 %v97
    %v738 = vunpack.c.h.b16 %v97
    %v739 = vunpack.c.l.b16 %v98
    %v740 = vunpack.c.h.b16 %v98
    %v741 = vunpack.c.l.b16 %v99
    %v742 = vunpack.c.h.b16 %v99
    %v743 = vunpack.c.l.b16 %v100
    %v744 = vunpack.c.h.b16 %v100
    %v745 = vunpack.c.l.b16 %v101
    %v746 = vunpack.c.h.b16 %v101
    %v747 = vunpack.c.l.b16 %v102
    %v748 = vunpack.c.h.b16 %v102
    %v749 = vunpack.c.l.b16 %v103
    %v750 = vunpack.c.h.b16 %v103
    %v751 = vunpack.c.l.b16 %v104
    %v752 = vunpack.c.h.b16 %v104
    %v753 = vunpack.c.l.b16 %v105
    %v754 = vunpack.c.h.b16 %v105
    %v755 = vunpack.c.l.b16 %v106
    %v756 = vunpack.c.h.b16 %v106
    %v757 = vunpack.c.l.b16 %v107
    %v758 = vunpack.c.h.b16 %v107
    %v759 = vunpack.c.l.b16 %v108
    %v760 = vunpack.c.h.b16 %v108
    %v761 = vunpack.c.l.b16 %v109
    %v762 = vunpack.c.h.b16 %v109
    %v763 = vunpack.c.l.b16 %v110
    %v764 = vunpack.c.h.b16 %v110
    %v765 = vunpack.c.l.b16 %v111
    %v766 = vunpack.c.h.b16 %v111
    %v767 = vunpack.c.l.b16 %v112
    %v768 = vunpack.c.h.b16 %v112
    %v769 = vunpack.c.l.b16 %v113
    %v770 = vunpack.c.h.b16 %v113
    %v771 = vunpack.c.l.b16 %v114
    %v772 = vunpack.c.h.b16 %v114
    %v773 = vunpack.c.l.b16 %v115
    %v774 = vunpack.c.h.b16 %v115
    %v775 = vunpack.c.l.b16 %v116
    %v776 = vunpack.c.h.b16 %v116
    %v777 = vunpack.c.l.b16 %v117
    %v778 = vunpack.c.h.b16 %v117
    %v779 = vunpack.c.l.b16 %v118
    %v780 = vunpack.c.h.b16 %v118
    %v781 = vunpack.c.l.b16 %v119
    %v782 = vunpack.c.h.b16 %v119
    %v783 = vunpack.c.l.b16 %v120
    %v784 = vunpack.c.h.b16 %v120
    %v785 = vunpack.c.l.b16 %v121
    %v786 = vunpack.c.h.b16 %v121
    %v787 = vunpack.c.l.b16 %v122
    %v788 = vunpack.c.h.b16 %v122
    %v789 = vunpack.c.l.b16 %v123
    %v790 = vunpack.c.h.b16 %v123
    %v791 = vunpack.c.l.b16 %v124
    %v792 = vunpack.c.h.b16 %v124
    %v793 = vunpack.c.l.b16 %v125
    %v794 = vunpack.c.h.b16 %v125
    %v795 = vunpack.c.l.b16 %v126
    %v796 = vunpack.c.h.b16 %v126
    %v797 = vunpack.c.l.b16 %v127
    %v798 = vunpack.c.h.b16 %v127
    %v799 = vunpack.c.l.b16 %v128
    %v800 = vunpack.c.h.b16 %v128
    %v801 = vunpack.c.l.b16 %v129
    %v802 = vunpack.c.h.b16 %v129
    %v803 = vunpack.c.l.b16 %v130
    %v804 = vunpack.c.h.b16 %v130
    %v805 = vunpack.c.l.b16 %v131
    %v806 = vunpack.c.h.b16 %v131
    %v807 = vunpack.c.l.b16 %v132
    %v808 = vunpack.c.h.b16 %v132
    %v809 = vunpack.c.l.b16 %v133
    %v810 = vunpack.c.h.b16 %v133
    %v811 = vunpack.c.l.b16 %v134
    %v812 = vunpack.c.h.b16 %v134
    %v813 = vunpack.c.l.b16 %v135
    %v814 = vunpack.c.h.b16 %v135
    %v815 = vunpack.c.l.b16 %v136
    %v816 = vunpack.c.h.b16 %v136
    %v817 = vunpack.c.l.b16 %v137
    %v818 = vunpack.c.h.b16 %v137
    %v819 = vunpack.c.l.b16 %v138
    %v820 = vunpack.c.h.b16 %v138
    %v821 = vunpack.c.l.b16 %v139
    %v822 = vunpack.c.h.b16 %v139
    %v823 = vunpack.c.l.b16 %v140
    %v824 = vunpack.c.h.b16 %v140
    %v825 = vunpack.c.l.b16 %v141
    %v826 = vunpack.c.h.b16 %v141
    %v827 = vunpack.c.l.b16 %v142
    %v828 = vunpack.c.h.b16 %v142
    %v829 = vunpack.c.l.b16 %v143
    %v830 = vunpack.c.h.b16 %v143
    %v831 = vunpack.c.l.b16 %v144
    %v832 = vunpack.c.h.b16 %v144
    %v833 = vunpack.c.l.b16 %v145
    %v834 = vunpack.c.h.b16 %v145
    %v835 = vunpack.c.l.b16 %v146
    %v836 = vunpack.c.h.b16 %v146
    %v837 = vunpack.c.l.b16 %v147
    %v838 = vunpack.c.h.b16 %v147
    %v839 = vunpack.c.l.b16 %v148
    %v840 = vunpack.c.h.b16 %v148
    %v841 = vunpack.c.l.b16 %v149
    %v842 = vunpack.c.h.b16 %v149
    %v843 = vunpack.c.l.b16 %v150
    %v844 = vunpack.c.h.b16 %v150
    %v845 = vunpack.c.l.b16 %v151
    %v846 = vunpack.c.h.b16 %v151
    %v847 = vunpack.c.l.b16 %v152
    %v848 = vunpack.c.h.b16 %v152
    %v849 = vunpack.c.l.b16 %v153
    %v850 = vunpack.c.h.b16 %v153
    %v851 = vunpack.c.l.b16 %v154
    %v852 = vunpack.c.h.b16 %v154
    %v853 = vunpack.c.l.b16 %v155
    %v854 = vunpack.c.h.b16 %v155
    %v855 = vunpack.c.l.b16 %v156
    %v856 = vunpack.c.h.b16 %v156
    %v857 = vunpack.c.l.b16 %v157
    %v858 = vunpack.c.h.b16 %v157
    %v859 = vunpack.c.l.b16 %v158
    %v860 = vunpack.c.h.b16 %v158
    %v861 = vunpack.c.l.b16 %v159
    %v862 = vunpack.c.h.b16 %v159
    %v863 = vunpack.c.l.b16 %v160
    %v864 = vunpack.c.h.b16 %v160
    %v865 = vunpack.c.l.b16 %v161
    %v866 = vunpack.c.h.b16 %v161
    %v867 = vunpack.c.l.b16 %v162
    %v868 = vunpack.c.h.b16 %v162
    %v869 = vunpack.c.l.b16 %v163
    %v870 = vunpack.c.h.b16 %v163
    %v871 = vunpack.c.l.b16 %v164
    %v872 = vunpack.c.h.b16 %v164
    %v873 = vunpack.c.l.b16 %v165
    %v874 = vunpack.c.h.b16 %v165
    %v875 = vunpack.c.l.b16 %v166
    %v876 = vunpack.c.h.b16 %v166
    %v877 = vunpack.c.l.b16 %v167
    %v878 = vunpack.c.h.b16 %v167
    %v879 = vunpack.c.l.b16 %v168
    %v880 = vunpack.c.h.b16 %v168
    %v881 = vunpack.c.l.b16 %v169
    %v882 = vunpack.c.h.b16 %v169
    %v883 = vunpack.c.l.b16 %v170
    %v884 = vunpack.c.h.b16 %v170
    %v885 = vunpack.c.l.b16 %v171
    %v886 = vunpack.c.h.b16 %v171
    %v887 = vunpack.c.l.b16 %v172
    %v888 = vunpack.c.h.b16 %v172
    %v889 = vunpack.c.l.b16 %v173
    %v890 = vunpack.c.h.b16 %v173
    %v891 = vunpack.c.l.b16 %v174
    %v892 = vunpack.c.h.b16 %v174
    %v893 = vunpack.c.l.b16 %v175
    %v894 = vunpack.c.h.b16 %v175
    %v895 = vunpack.c.l.b16 %v176
    %v896 = vunpack.c.h.b16 %v176
    %v897 = vunpack.c.l.b16 %v177
    %v898 = vunpack.c.h.b16 %v177
    %v899 = vunpack.c.l.b16 %v178
    %v900 = vunpack.c.h.b16 %v178
    %v901 = vunpack.c.l.b16 %v179
    %v902 = vunpack.c.h.b16 %v179
    %v903 = vunpack.c.l.b16 %v180
    %v904 = vunpack.c.h.b16 %v180
    %v905 = vunpack.c.l.b16 %v181
    %v906 = vunpack.c.h.b16 %v181
    %v907 = vunpack.c.l.b16 %v182
    %v908 = vunpack.c.h.b16 %v182
    %v909 = vunpack.c.l.b16 %v183
    %v910 = vunpack.c.h.b16 %v183
    %v911 = vunpack.c.l.b16 %v184
    %v912 = vunpack.c.h.b16 %v184
    %v913 = vunpack.c.l.b16 %v185
    %v914 = vunpack.c.h.b16 %v185
    %v915 = vunpack.c.l.b16 %v186
    %v916 = vunpack.c.h.b16 %v186
    %v917 = vunpack.c.l.b16 %v187
    %v918 = vunpack.c.h.b16 %v187
    %v919 = vunpack.c.l.b16 %v188
    %v920 = vunpack.c.h.b16 %v188
    %v921 = vunpack.c.l.b16 %v189
    %v922 = vunpack.c.h.b16 %v189
    %v923 = vunpack.c.l.b16 %v190
    %v924 = vunpack.c.h.b16 %v190
    %v925 = vunpack.c.l.b16 %v191
    %v926 = vunpack.c.h.b16 %v191
    %v927 = vunpack.c.l.b16 %v192
    %v928 = vunpack.c.h.b16 %v192
    %v929 = vunpack.c.l.b16 %v193
    %v930 = vunpack.c.h.b16 %v193
    %v931 = vunpack.c.l.b16 %v194
    %v932 = vunpack.c.h.b16 %v194
    %v933 = vunpack.c.l.b16 %v195
    %v934 = vunpack.c.h.b16 %v195
    %v935 = vunpack.c.l.b16 %v196
    %v936 = vunpack.c.h.b16 %v196
    %v937 = vunpack.c.l.b16 %v197
    %v938 = vunpack.c.h.b16 %v197
    %v939 = vunpack.c.l.b16 %v198
    %v940 = vunpack.c.h.b16 %v198
    %v941 = vunpack.c.l.b16 %v199
    %v942 = vunpack.c.h.b16 %v199
    %v943 = vunpack.c.l.b16 %v200
    %v944 = vunpack.c.h.b16 %v200
    %v945 = vunpack.c.l.b16 %v201
    %v946 = vunpack.c.h.b16 %v201
    %v947 = vunpack.c.l.b16 %v202
    %v948 = vunpack.c.h.b16 %v202
    %v949 = vunpack.c.l.b16 %v203
    %v950 = vunpack.c.h.b16 %v203
    %v951 = vunpack.c.l.b16 %v204
    %v952 = vunpack.c.h.b16 %v204
    %v953 = vunpack.c.l.b16 %v205
    %v954 = vunpack.c.h.b16 %v205
    %v955 = vunpack.c.l.b16 %v206
    %v956 = vunpack.c.h.b16 %v206
    %v957 = vunpack.c.l.b16 %v207
    %v958 = vunpack.c.h.b16 %v207
    %v959 = vunpack.c.l.b16 %v208
    %v960 = vunpack.c.h.b16 %v208
    %v961 = vunpack.c.l.b16 %v209
    %v962 = vunpack.c.h.b16 %v209
    %v963 = vunpack.c.l.b16 %v210
    %v964 = vunpack.c.h.b16 %v210
    %v965 = vunpack.c.l.b16 %v211
    %v966 = vunpack.c.h.b16 %v211
    %v967 = vunpack.c.l.b16 %v212
    %v968 = vunpack.c.h.b16 %v212
    %v969 = vunpack.c.l.b16 %v213
    %v970 = vunpack.c.h.b16 %v213
    %v971 = vunpack.c.l.b16 %v214
    %v972 = vunpack.c.h.b16 %v214
    %v973 = vunpack.c.l.b16 %v215
    %v974 = vunpack.c.h.b16 %v215
    %v975 = vunpack.c.l.b16 %v216
    %v976 = vunpack.c.h.b16 %v216
    %v977 = vunpack.c.l.b16 %v217
    %v978 = vunpack.c.h.b16 %v217
    %v979 = vunpack.c.l.b16 %v218
    %v980 = vunpack.c.h.b16 %v218
    %v981 = vunpack.c.l.b16 %v219
    %v982 = vunpack.c.h.b16 %v219
    %v983 = vunpack.c.l.b16 %v220
    %v984 = vunpack.c.h.b16 %v220
    %v985 = vunpack.c.l.b16 %v221
    %v986 = vunpack.c.h.b16 %v221
    %v987 = vunpack.c.l.b16 %v222
    %v988 = vunpack.c.h.b16 %v222
    %v989 = vunpack.c.l.b16 %v223
    %v990 = vunpack.c.h.b16 %v223
    %v991 = vunpack.c.l.b16 %v224
    %v992 = vunpack.c.h.b16 %v224
    %v993 = vunpack.c.l.b16 %v225
    %v994 = vunpack.c.h.b16 %v225
    %v995 = vunpack.c.l.b16 %v226
    %v996 = vunpack.c.h.b16 %v226
    %v997 = vunpack.c.l.b16 %v227
    %v998 = vunpack.c.h.b16 %v227
    %v999 = vunpack.c.l.b16 %v228
    %v1000 = vunpack.c.h.b16 %v228
    %v1001 = vunpack.c.l.b16 %v229
    %v1002 = vunpack.c.h.b16 %v229
    %v1003 = vunpack.c.l.b16 %v230
    %v1004 = vunpack.c.h.b16 %v230
    %v1005 = vunpack.c.l.b16 %v231
    %v1006 = vunpack.c.h.b16 %v231
    %v1007 = vunpack.c.l.b16 %v232
    %v1008 = vunpack.c.h.b16 %v232
    %v1009 = vunpack.c.l.b16 %v233
    %v1010 = vunpack.c.h.b16 %v233
    %v1011 = vunpack.c.l.b16 %v234
    %v1012 = vunpack.c.h.b16 %v234
    %v1013 = vunpack.c.l.b16 %v235
    %v1014 = vunpack.c.h.b16 %v235
    %v1015 = vunpack.c.l.b16 %v236
    %v1016 = vunpack.c.h.b16 %v236
    %v1017 = vunpack.c.l.b16 %v237
    %v1018 = vunpack.c.h.b16 %v237
    %v1019 = vunpack.c.l.b16 %v238
    %v1020 = vunpack.c.h.b16 %v238
    %v1021 = vunpack.c.l.b16 %v239
    %v1022 = vunpack.c.h.b16 %v239
    %v1023 = vunpack.c.l.b16 %v240
    %v1024 = vunpack.c.h.b16 %v240
    %v1025 = vunpack.c.l.b16 %v241
    %v1026 = vunpack.c.h.b16 %v241
    %v1027 = vunpack.c.l.b16 %v242
    %v1028 = vunpack.c.h.b16 %v242
    %v1029 = vunpack.c.l.b16 %v243
    %v1030 = vunpack.c.h.b16 %v243
    %v1031 = vunpack.c.l.b16 %v244
    %v1032 = vunpack.c.h.b16 %v244
    %v1033 = vunpack.c.l.b16 %v245
    %v1034 = vunpack.c.h.b16 %v245
    %v1035 = vunpack.c.l.b16 %v246
    %v1036 = vunpack.c.h.b16 %v246
    %v1037 = vunpack.c.l.b16 %v247
    %v1038 = vunpack.c.h.b16 %v247
    %v1039 = vunpack.c.l.b16 %v248
    %v1040 = vunpack.c.h.b16 %v248
    %v1041 = vunpack.c.l.b16 %v249
    %v1042 = vunpack.c.h.b16 %v249
    %v1043 = vunpack.c.l.b16 %v250
    %v1044 = vunpack.c.h.b16 %v250
    %v1045 = vunpack.c.l.b16 %v251
    %v1046 = vunpack.c.h.b16 %v251
    %v1047 = vunpack.c.l.b16 %v252
    %v1048 = vunpack.c.h.b16 %v252
    %v1049 = vunpack.c.l.b16 %v253
    %v1050 = vunpack.c.h.b16 %v253
    %v1051 = vunpack.c.l.b16 %v254
    %v1052 = vunpack.c.h.b16 %v254
    %v1053 = vunpack.c.l.b16 %v255
    %v1054 = vunpack.c.h.b16 %v255
    %v1055 = vunpack.c.l.b16 %v256
    %v1056 = vunpack.c.h.b16 %v256
    %v1057 = vunpack.c.l.b16 %v257
    %v1058 = vunpack.c.h.b16 %v257
    %v1059 = vunpack.c.l.b16 %v258
    %v1060 = vunpack.c.h.b16 %v258
    %v1061 = vunpack.c.l.b16 %v259
    %v1062 = vunpack.c.h.b16 %v259
    %v1063 = vunpack.c.l.b16 %v260
    %v1064 = vunpack.c.h.b16 %v260
    %v1065 = vunpack.c.l.b16 %v261
    %v1066 = vunpack.c.h.b16 %v261
    %v1067 = vunpack.c.l.b16 %v262
    %v1068 = vunpack.c.h.b16 %v262
    %v1069 = vunpack.c.l.b16 %v263
    %v1070 = vunpack.c.h.b16 %v263
    %v1071 = vunpack.c.l.b16 %v264
    %v1072 = vunpack.c.h.b16 %v264
    %v1073 = vunpack.c.l.b16 %v265
    %v1074 = vunpack.c.h.b16 %v265
    %v1075 = vunpack.c.l.b16 %v266
    %v1076 = vunpack.c.h.b16 %v266
    %v1077 = vunpack.c.l.b16 %v267
    %v1078 = vunpack.c.h.b16 %v267
    %v1079 = vunpack.c.l.b16 %v268
    %v1080 = vunpack.c.h.b16 %v268
    %v1081 = vunpack.c.l.b16 %v269
    %v1082 = vunpack.c.h.b16 %v269
    %v1083 = vunpack.c.l.b16 %v270
    %v1084 = vunpack.c.h.b16 %v270
    %v1085 = vunpack.c.l.b16 %v271
    %v1086 = vunpack.c.h.b16 %v271
    %v1087 = vunpack.c.l.b16 %v272
    %v1088 = vunpack.c.h.b16 %v272
    %v1089 = vunpack.c.l.b16 %v273
    %v1090 = vunpack.c.h.b16 %v273
    %v1091 = vunpack.c.l.b16 %v274
    %v1092 = vunpack.c.h.b16 %v274
    %v1093 = vunpack.c.l.b16 %v275
    %v1094 = vunpack.c.h.b16 %v275
    %v1095 = vunpack.c.l.b16 %v276
    %v1096 = vunpack.c.h.b16 %v276
    %v1097 = vunpack.c.l.b16 %v277
    %v1098 = vunpack.c.h.b16 %v277
    %v1099 = vunpack.c.l.b16 %v278
    %v1100 = vunpack.c.h.b16 %v278
    %v1101 = vunpack.c.l.b16 %v279
    %v1102 = vunpack.c.h.b16 %v279
    %v1103 = vunpack.c.l.b16 %v280
    %v1104 = vunpack.c.h.b16 %v280
    %v1105 = vunpack.c.l.b16 %v281
    %v1106 = vunpack.c.h.b16 %v281
    %v1107 = vunpack.c.l.b16 %v282
    %v1108 = vunpack.c.h.b16 %v282
    %v1109 = vunpack.c.l.b16 %v283
    %v1110 = vunpack.c.h.b16 %v283
    %v1111 = vunpack.c.l.b16 %v284
    %v1112 = vunpack.c.h.b16 %v284
    %v1113 = vunpack.c.l.b16 %v285
    %v1114 = vunpack.c.h.b16 %v285
    %v1115 = vunpack.c.l.b16 %v286
    %v1116 = vunpack.c.h.b16 %v286
    %v1117 = vunpack.c.l.b16 %v287
    %v1118 = vunpack.c.h.b16 %v287
    %v1119 = vunpack.c.l.b16 %v288
    %v1120 = vunpack.c.h.b16 %v288
    %v1121 = vunpack.c.l.b16 %v289
    %v1122 = vunpack.c.h.b16 %v289
    %v1123 = vunpack.c.l.b16 %v290
    %v1124 = vunpack.c.h.b16 %v290
    %v1125 = vunpack.c.l.b16 %v291
    %v1126 = vunpack.c.h.b16 %v291
    %v1127 = vunpack.c.l.b16 %v292
    %v1128 = vunpack.c.h.b16 %v292
    %v1129 = vunpack.c.l.b16 %v293
    %v1130 = vunpack.c.h.b16 %v293
    %v1131 = vunpack.c.l.b16 %v294
    %v1132 = vunpack.c.h.b16 %v294
    %v1133 = vunpack.c.l.b16 %v295
    %v1134 = vunpack.c.h.b16 %v295
    %v1135 = vunpack.c.l.b16 %v296
    %v1136 = vunpack.c.h.b16 %v296
    %v1137 = vunpack.c.l.b16 %v297
    %v1138 = vunpack.c.h.b16 %v297
    %v1139 = vunpack.c.l.b16 %v298
    %v1140 = vunpack.c.h.b16 %v298
    %v1141 = vunpack.c.l.b16 %v299
    %v1142 = vunpack.c.h.b16 %v299
    %v1143 = vunpack.c.l.b16 %v300
    %v1144 = vunpack.c.h.b16 %v300
    %v1145 = vunpack.c.l.b16 %v301
    %v1146 = vunpack.c.h.b16 %v301
    %v1147 = vunpack.c.l.b16 %v302
    %v1148 = vunpack.c.h.b16 %v302
    %v1149 = vunpack.c.l.b16 %v303
    %v1150 = vunpack.c.h.b16 %v303
    %v1151 = vunpack.c.l.b16 %v304
    %v1152 = vunpack.c.h.b16 %v304
    %v1153 = vunpack.c.l.b16 %v305
    %v1154 = vunpack.c.h.b16 %v305
    %v1155 = vunpack.c.l.b16 %v306
    %v1156 = vunpack.c.h.b16 %v306
    %v1157 = vunpack.c.l.b16 %v307
    %v1158 = vunpack.c.h.b16 %v307
    %v1159 = vunpack.c.l.b16 %v308
    %v1160 = vunpack.c.h.b16 %v308
    %v1161 = vunpack.c.l.b16 %v309
    %v1162 = vunpack.c.h.b16 %v309
    %v1163 = vunpack.c.l.b16 %v310
    %v1164 = vunpack.c.h.b16 %v310
    %v1165 = vunpack.c.l.b16 %v311
    %v1166 = vunpack.c.h.b16 %v311
    %v1167 = vunpack.c.l.b16 %v312
    %v1168 = vunpack.c.h.b16 %v312
    %v1169 = vunpack.c.l.b16 %v313
    %v1170 = vunpack.c.h.b16 %v313
    %v1171 = vunpack.c.l.b16 %v314
    %v1172 = vunpack.c.h.b16 %v314
    %v1173 = vunpack.c.l.b16 %v315
    %v1174 = vunpack.c.h.b16 %v315
    %v1175 = vunpack.c.l.b16 %v316
    %v1176 = vunpack.c.h.b16 %v316
    %v1177 = vunpack.c.l.b16 %v317
    %v1178 = vunpack.c.h.b16 %v317
    %v1179 = vunpack.c.l.b16 %v318
    %v1180 = vunpack.c.h.b16 %v318
    %v1181 = vunpack.c.l.b16 %v319
    %v1182 = vunpack.c.h.b16 %v319
    %v1183 = vunpack.c.l.b16 %v320
    %v1184 = vunpack.c.h.b16 %v320
    %v1185 = vunpack.c.l.b16 %v321
    %v1186 = vunpack.c.h.b16 %v321
    %v1187 = vunpack.c.l.b16 %v322
    %v1188 = vunpack.c.h.b16 %v322
    %v1189 = vunpack.c.l.b16 %v323
    %v1190 = vunpack.c.h.b16 %v323
    %v1191 = vunpack.c.l.b16 %v324
    %v1192 = vunpack.c.h.b16 %v324
    %v1193 = vunpack.c.l.b16 %v325
    %v1194 = vunpack.c.h.b16 %v325
    %v1195 = vunpack.c.l.b16 %v326
    %v1196 = vunpack.c.h.b16 %v326
    %v1197 = vunpack.c.l.b16 %v327
    %v1198 = vunpack.c.h.b16 %v327
    %v1199 = vunpack.c.l.b16 %v328
    %v1200 = vunpack.c.h.b16 %v328
    %v1201 = vunpack.c.l.b16 %v329
    %v1202 = vunpack.c.h.b16 %v329
    %v1203 = vunpack.c.l.b16 %v330
    %v1204 = vunpack.c.h.b16 %v330
    %v1205 = vunpack.c.l.b16 %v331
    %v1206 = vunpack.c.h.b16 %v331
    %v1207 = vunpack.c.l.b16 %v332
    %v1208 = vunpack.c.h.b16 %v332
    %v1209 = vunpack.c.l.b16 %v333
    %v1210 = vunpack.c.h.b16 %v333
    %v1211 = vunpack.c.l.b16 %v334
    %v1212 = vunpack.c.h.b16 %v334
    %v1213 = vunpack.c.l.b16 %v335
    %v1214 = vunpack.c.h.b16 %v335
    %v1215 = vunpack.c.l.b16 %v336
    %v1216 = vunpack.c.h.b16 %v336
    %v1217 = vunpack.c.l.b16 %v337
    %v1218 = vunpack.c.h.b16 %v337
    %v1219 = vunpack.c.l.b16 %v338
    %v1220 = vunpack.c.h.b16 %v338
    %v1221 = vunpack.c.l.b16 %v339
    %v1222 = vunpack.c.h.b16 %v339
    %v1223 = vunpack.c.l.b16 %v340
    %v1224 = vunpack.c.h.b16 %v340
    %v1225 = vunpack.c.l.b16 %v341
    %v1226 = vunpack.c.h.b16 %v341
    %v1227 = vunpack.c.l.b16 %v342
    %v1228 = vunpack.c.h.b16 %v342
    %v1229 = vunpack.c.l.b16 %v343
    %v1230 = vunpack.c.h.b16 %v343
    %v1231 = vunpack.c.l.b16 %v344
    %v1232 = vunpack.c.h.b16 %v344
    %v1233 = vunpack.c.l.b16 %v345
    %v1234 = vunpack.c.h.b16 %v345
    %v1235 = vunpack.c.l.b16 %v346
    %v1236 = vunpack.c.h.b16 %v346
    %v1237 = vunpack.c.l.b16 %v347
    %v1238 = vunpack.c.h.b16 %v347
    %v1239 = vunpack.c.l.b16 %v348
    %v1240 = vunpack.c.h.b16 %v348
    %v1241 = vunpack.c.l.b16 %v349
    %v1242 = vunpack.c.h.b16 %v349
    %v1243 = vunpack.c.l.b16 %v350
    %v1244 = vunpack.c.h.b16 %v350
    %v1245 = vunpack.c.l.b16 %v351
    %v1246 = vunpack.c.h.b16 %v351
    %v1247 = vunpack.c.l.b16 %v352
    %v1248 = vunpack.c.h.b16 %v352
    %v1249 = vunpack.c.l.b16 %v353
    %v1250 = vunpack.c.h.b16 %v353
    %v1251 = vunpack.c.l.b16 %v354
    %v1252 = vunpack.c.h.b16 %v354
    %v1253 = vunpack.c.l.b16 %v355
    %v1254 = vunpack.c.h.b16 %v355
    %v1255 = vunpack.c.l.b16 %v356
    %v1256 = vunpack.c.h.b16 %v356
    %v1257 = vunpack.c.l.b16 %v357
    %v1258 = vunpack.c.h.b16 %v357
    %v1259 = vunpack.c.l.b16 %v358
    %v1260 = vunpack.c.h.b16 %v358
    %v1261 = vunpack.c.l.b16 %v359
    %v1262 = vunpack.c.h.b16 %v359
    %v1263 = vunpack.c.l.b16 %v360
    %v1264 = vunpack.c.h.b16 %v360
    %v1265 = vunpack.c.l.b16 %v361
    %v1266 = vunpack.c.h.b16 %v361
    %v1267 = vunpack.c.l.b16 %v362
    %v1268 = vunpack.c.h.b16 %v362
    %v1269 = vunpack.c.l.b16 %v363
    %v1270 = vunpack.c.h.b16 %v363
    %v1271 = vunpack.c.l.b16 %v364
    %v1272 = vunpack.c.h.b16 %v364
    %v1273 = vunpack.c.l.b16 %v365
    %v1274 = vunpack.c.h.b16 %v365
    %v1275 = vunpack.c.l.b16 %v366
    %v1276 = vunpack.c.h.b16 %v366
    %v1277 = vunpack.c.l.b16 %v367
    %v1278 = vunpack.c.h.b16 %v367
    %v1279 = vunpack.c.l.b16 %v368
    %v1280 = vunpack.c.h.b16 %v368
    %v1281 = vunpack.c.l.b16 %v369
    %v1282 = vunpack.c.h.b16 %v369
    %v1283 = vunpack.c.l.b16 %v370
    %v1284 = vunpack.c.h.b16 %v370
    %v1285 = vunpack.c.l.b16 %v371
    %v1286 = vunpack.c.h.b16 %v371
    %v1287 = vunpack.c.l.b16 %v372
    %v1288 = vunpack.c.h.b16 %v372
    %v1289 = vunpack.c.l.b16 %v373
    %v1290 = vunpack.c.h.b16 %v373
    %v1291 = vunpack.c.l.b16 %v374
    %v1292 = vunpack.c.h.b16 %v374
    %v1293 = vunpack.c.l.b16 %v375
    %v1294 = vunpack.c.h.b16 %v375
    %v1295 = vunpack.c.l.b16 %v376
    %v1296 = vunpack.c.h.b16 %v376
    %v1297 = vunpack.c.l.b16 %v377
    %v1298 = vunpack.c.h.b16 %v377
    %v1299 = vunpack.c.l.b16 %v378
    %v1300 = vunpack.c.h.b16 %v378
    %v1301 = vunpack.c.l.b16 %v379
    %v1302 = vunpack.c.h.b16 %v379
    %v1303 = vunpack.c.l.b16 %v380
    %v1304 = vunpack.c.h.b16 %v380
    %v1305 = vunpack.c.l.b16 %v381
    %v1306 = vunpack.c.h.b16 %v381
    %v1307 = vunpack.c.l.b16 %v382
    %v1308 = vunpack.c.h.b16 %v382
    %v1309 = vunpack.c.l.b16 %v383
    %v1310 = vunpack.c.h.b16 %v383
    %v1311 = vunpack.c.l.b16 %v384
    %v1312 = vunpack.c.h.b16 %v384
    %v1313 = vpack.c.b16 %v749, %v737
    %v1314 = vpack.c.b16 %v750, %v738
    %v1315 = vpack.c.b16 %v751, %v739
    %v1316 = vpack.c.b16 %v752, %v740
    %v1317 = vpack.c.b16 %v753, %v741
    %v1318 = vpack.c.b16 %v754, %v742
    %v1319 = vpack.c.b16 %v755, %v743
    %v1320 = vpack.c.b16 %v756, %v744
    %v1321 = vpack.c.b16 %v757, %v745
    %v1322 = vpack.c.b16 %v758, %v746
    %v1323 = vpack.c.b16 %v759, %v747
    %v1324 = vpack.c.b16 %v760, %v748
    %v1325 = vpack.c.b16 %v773, %v761
    %v1326 = vpack.c.b16 %v774, %v762
    %v1327 = vpack.c.b16 %v775, %v763
    %v1328 = vpack.c.b16 %v776, %v764
    %v1329 = vpack.c.b16 %v777, %v765
    %v1330 = vpack.c.b16 %v778, %v766
    %v1331 = vpack.c.b16 %v779, %v767
    %v1332 = vpack.c.b16 %v780, %v768
    %v1333 = vpack.c.b16 %v781, %v769
    %v1334 = vpack.c.b16 %v782, %v770
    %v1335 = vpack.c.b16 %v783, %v771
    %v1336 = vpack.c.b16 %v784, %v772
    %v1337 = vpack.c.b16 %v797, %v785
    %v1338 = vpack.c.b16 %v798, %v786
    %v1339 = vpack.c.b16 %v799, %v787
    %v1340 = vpack.c.b16 %v800, %v788
    %v1341 = vpack.c.b16 %v801, %v789
    %v1342 = vpack.c.b16 %v802, %v790
    %v1343 = vpack.c.b16 %v803, %v791
    %v1344 = vpack.c.b16 %v804, %v792
    %v1345 = vpack.c.b16 %v805, %v793
    %v1346 = vpack.c.b16 %v806, %v794
    %v1347 = vpack.c.b16 %v807, %v795
    %v1348 = vpack.c.b16 %v808, %v796
    %v1349 = vpack.c.b16 %v821, %v809
    %v1350 = vpack.c.b16 %v822, %v810
    %v1351 = vpack.c.b16 %v823, %v811
    %v1352 = vpack.c.b16 %v824, %v812
    %v1353 = vpack.c.b16 %v825, %v813
    %v1354 = vpack.c.b16 %v826, %v814
    %v1355 = vpack.c.b16 %v827, %v815
    %v1356 = vpack.c.b16 %v828, %v816
    %v1357 = vpack.c.b16 %v829, %v817
    %v1358 = vpack.c.b16 %v830, %v818
    %v1359 = vpack.c.b16 %v831, %v819
    %v1360 = vpack.c.b16 %v832, %v820
    %v1361 = vpack.c.b16 %v845, %v833
    %v1362 = vpack.c.b16 %v846, %v834
    %v1363 = vpack.c.b16 %v847, %v835
    %v1364 = vpack.c.b16 %v848, %v836
    %v1365 = vpack.c.b16 %v849, %v837
    %v1366 = vpack.c.b16 %v850, %v838
    %v1367 = vpack.c.b16 %v851, %v839
    %v1368 = vpack.c.b16 %v852, %v840
    %v1369 = vpack.c.b16 %v853, %v841
    %v1370 = vpack.c.b16 %v854, %v842
    %v1371 = vpack.c.b16 %v855, %v843
    %v1372 = vpack.c.b16 %v856, %v844
    %v1373 = vpack.c.b16 %v869, %v857
    %v1374 = vpack.c.b16 %v870, %v858
    %v1375 = vpack.c.b16 %v871, %v859
    %v1376 = vpack.c.b16 %v872, %v860
    %v1377 = vpack.c.b16 %v873, %v861
    %v1378 = vpack.c.b16 %v874, %v862
    %v1379 = vpack.c.b16 %v875, %v863
    %v1380 = vpack.c.b16 %v876, %v864
    %v1381 = vpack.c.b16 %v877, %v865
    %v1382 = vpack.c.b16 %v878, %v866
    %v1383 = vpack.c.b16 %v879, %v867
    %v1384 = vpack.c.b16 %v880, %v868
    %v1385 = vpack.c.b16 %v893, %v881
    %v1386 = vpack.c.b16 %v894, %v882
    %v1387 = vpack.c.b16 %v895, %v883
    %v1388 = vpack.c.b16 %v896, %v884
    %v1389 = vpack.c.b16 %v897, %v885
    %v1390 = vpack.c.b16 %v898, %v886
    %v1391 = vpack.c.b16 %v899, %v887
    %v1392 = vpack.c.b16 %v900, %v888
    %v1393 = vpack.c.b16 %v901, %v889
    %v1394 = vpack.c.b16 %v902, %v890
    %v1395 = vpack.c.b16 %v903, %v891
    %v1396 = vpack.c.b16 %v904, %v892
    %v1397 = vpack.c.b16 %v917, %v905
    %v1398 = vpack.c.b16 %v918, %v906
    %v1399 = vpack.c.b16 %v919, %v907
    %v1400 = vpack.c.b16 %v920, %v908
    %v1401 = vpack.c.b16 %v921, %v909
    %v1402 = vpack.c.b16 %v922, %v910
    %v1403 = vpack.c.b16 %v923, %v911
    %v1404 = vpack.c.b16 %v924, %v912
    %v1405 = vpack.c.b16 %v925, %v913
    %v1406 = vpack.c.b16 %v926, %v914
    %v1407 = vpack.c.b16 %v927, %v915
    %v1408 = vpack.c.b16 %v928, %v916
    %v1409 = vpack.c.b16 %v941, %v929
    %v1410 = vpack.c.b16 %v942, %v930
    %v1411 = vpack.c.b16 %v943, %v931
    %v1412 = vpack.c.b16 %v944, %v932
    %v1413 = vpack.c.b16 %v945, %v933
    %v1414 = vpack.c.b16 %v946, %v934
    %v1415 = vpack.c.b16 %v947, %v935
    %v1416 = vpack.c.b16 %v948, %v936
    %v1417 = vpack.c.b16 %v949, %v937
    %v1418 = vpack.c.b16 %v950, %v938
    %v1419 = vpack.c.b16 %v951, %v939
    %v1420 = vpack.c.b16 %v952, %v940
    %v1421 = vpack.c.b16 %v965, %v953
    %v1422 = vpack.c.b16 %v966, %v954
    %v1423 = vpack.c.b16 %v967, %v955
    %v1424 = vpack.c.b16 %v968, %v956
    %v1425 = vpack.c.b16 %v969, %v957
    %v1426 = vpack.c.b16 %v970, %v958
    %v1427 = vpack.c.b16 %v971, %v959
    %v1428 = vpack.c.b16 %v972, %v960
    %v1429 = vpack.c.b16 %v973, %v961
    %v1430 = vpack.c.b16 %v974, %v962
    %v1431 = vpack.c.b16 %v975, %v963
    %v1432 = vpack.c.b16 %v976, %v964
    %v1433 = vpack.c.b16 %v989, %v977
    %v1434 = vpack.c.b16 %v990, %v978
    %v1435 = vpack.c.b16 %v991, %v979
    %v1436 = vpack.c.b16 %v992, %v980
    %v1437 = vpack.c.b16 %v993, %v981
    %v1438 = vpack.c.b16 %v994, %v982
    %v1439 = vpack.c.b16 %v995, %v983
    %v1440 = vpack.c.b16 %v996, %v984
    %v1441 = vpack.c.b16 %v997, %v985
    %v1442 = vpack.c.b16 %v998, %v986
    %v1443 = vpack.c.b16 %v999, %v987
    %v1444 = vpack.c.b16 %v1000, %v988
    %v1445 = vpack.c.b16 %v1013, %v1001
    %v1446 = vpack.c.b16 %v1014, %v1002
    %v1447 = vpack.c.b16 %v1015, %v1003
    %v1448 = vpack.c.b16 %v1016, %v1004
    %v1449 = vpack.c.b16 %v1017, %v1005
    %v1450 = vpack.c.b16 %v1018, %v1006
    %v1451 = vpack.c.b16 %v1019, %v1007
    %v1452 = vpack.c.b16 %v1020, %v1008
    %v1453 = vpack.c.b16 %v1021, %v1009
    %v1454 = vpack.c.b16 %v1022, %v1010
    %v1455 = vpack.c.b16 %v1023, %v1011
    %v1456 = vpack.c.b16 %v1024, %v1012
    %v1457 = vpack.c.b16 %v1037, %v1025
    %v1458 = vpack.c.b16 %v1038, %v1026
    %v1459 = vpack.c.b16 %v1039, %v1027
    %v1460 = vpack.c.b16 %v1040, %v1028
    %v1461 = vpack.c.b16 %v1041, %v1029
    %v1462 = vpack.c.b16 %v1042, %v1030
    %v1463 = vpack.c.b16 %v1043, %v1031
    %v1464 = vpack.c.b16 %v1044, %v1032
    %v1465 = vpack.c.b16 %v1045, %v1033
    %v1466 = vpack.c.b16 %v1046, %v1034
    %v1467 = vpack.c.b16 %v1047, %v1035
    %v1468 = vpack.c.b16 %v1048, %v1036
    %v1469 = vpack.c.b16 %v1061, %v1049
    %v1470 = vpack.c.b16 %v1062, %v1050
    %v1471 = vpack.c.b16 %v1063, %v1051
    %v1472 = vpack.c.b16 %v1064, %v1052
    %v1473 = vpack.c.b16 %v1065, %v1053
    %v1474 = vpack.c.b16 %v1066, %v1054
    %v1475 = vpack.c.b16 %v1067, %v1055
    %v1476 = vpack.c.b16 %v1068, %v1056
    %v1477 = vpack.c.b16 %v1069, %v1057
    %v1478 = vpack.c.b16 %v1070, %v1058
    %v1479 = vpack.c.b16 %v1071, %v1059
    %v1480 = vpack.c.b16 %v1072, %v1060
    %v1481 = vpack.c.b16 %v1085, %v1073
    %v1482 = vpack.c.b16 %v1086, %v1074
    %v1483 = vpack.c.b16 %v1087, %v1075
    %v1484 = vpack.c.b16 %v1088, %v1076
    %v1485 = vpack.c.b16 %v1089, %v1077
    %v1486 = vpack.c.b16 %v1090, %v1078
    %v1487 = vpack.c.b16 %v1091, %v1079
    %v1488 = vpack.c.b16 %v1092, %v1080
    %v1489 = vpack.c.b16 %v1093, %v1081
    %v1490 = vpack.c.b16 %v1094, %v1082
    %v1491 = vpack.c.b16 %v1095, %v1083
    %v1492 = vpack.c.b16 %v1096, %v1084
    %v1493 = vpack.c.b16 %v1109, %v1097
    %v1494 = vpack.c.b16 %v1110, %v1098
    %v1495 = vpack.c.b16 %v1111, %v1099
    %v1496 = vpack.c.b16 %v1112, %v1100
    %v1497 = vpack.c.b16 %v1113, %v1101
    %v1498 = vpack.c.b16 %v1114, %v1102
    %v1499 = vpack.c.b16 %v1115, %v1103
    %v1500 = vpack.c.b16 %v1116, %v1104
    %v1501 = vpack.c.b16 %v1117, %v1105
    %v1502 = vpack.c.b16 %v1118, %v1106
    %v1503 = vpack.c.b16 %v1119, %v1107
    %v1504 = vpack.c.b16 %v1120, %v1108
    %v1505 = vpack.c.b16 %v1133, %v1121
    %v1506 = vpack.c.b16 %v1134, %v1122
    %v1507 = vpack.c.b16 %v1135, %v1123
    %v1508 = vpack.c.b16 %v1136, %v1124
    %v1509 = vpack.c.b16 %v1137, %v1125
    %v1510 = vpack.c.b16 %v1138, %v1126
    %v1511 = vpack.c.b16 %v1139, %v1127
    %v1512 = vpack.c.b16 %v1140, %v1128
    %v1513 = vpack.c.b16 %v1141, %v1129
    %v1514 = vpack.c.b16 %v1142, %v1130
    %v1515 = vpack.c.b16 %v1143, %v1131
    %v1516 = vpack.c.b16 %v1144, %v1132
    %v1517 = vpack.c.b16 %v1157, %v1145
    %v1518 = vpack.c.b16 %v1158, %v1146
    %v1519 = vpack.c.b16 %v1159, %v1147
    %v1520 = vpack.c.b16 %v1160, %v1148
    %v1521 = vpack.c.b16 %v1161, %v1149
    %v1522 = vpack.c.b16 %v1162, %v1150
    %v1523 = vpack.c.b16 %v1163, %v1151
    %v1524 = vpack.c.b16 %v1164, %v1152
    %v1525 = vpack.c.b16 %v1165, %v1153
    %v1526 = vpack.c.b16 %v1166, %v1154
    %v1527 = vpack.c.b16 %v1167, %v1155
    %v1528 = vpack.c.b16 %v1168, %v1156
    %v1529 = vpack.c.b16 %v1181, %v1169
    %v1530 = vpack.c.b16 %v1182, %v1170
    %v1531 = vpack.c.b16 %v1183, %v1171
    %v1532 = vpack.c.b16 %v1184, %v1172
    %v1533 = vpack.c.b16 %v1185, %v1173
    %v1534 = vpack.c.b16 %v1186, %v1174
    %v1535 = vpack.c.b16 %v1187, %v1175
    %v1536 = vpack.c.b16 %v1188, %v1176
    %v1537 = vpack.c.b16 %v1189, %v1177
    %v1538 = vpack.c.b16 %v1190, %v1178
    %v1539 = vpack.c.b16 %v1191, %v1179
    %v1540 = vpack.c.b16 %v1192, %v1180
    %v1541 = vpack.c.b16 %v1205, %v1193
    %v1542 = vpack.c.b16 %v1206, %v1194
    %v1543 = vpack.c.b16 %v1207, %v1195
    %v1544 = vpack.c.b16 %v1208, %v1196
    %v1545 = vpack.c.b16 %v1209, %v1197
    %v1546 = vpack.c.b16 %v1210, %v1198
    %v1547 = vpack.c.b16 %v1211, %v1199
    %v1548 = vpack.c.b16 %v1212, %v1200
    %v1549 = vpack.c.b16 %v1213, %v1201
    %v1550 = vpack.c.b16 %v1214, %v1202
    %v1551 = vpack.c.b16 %v1215, %v1203
    %v1552 = vpack.c.b16 %v1216, %v1204
    %v1553 = vpack.c.b16 %v1229, %v1217
    %v1554 = vpack.c.b16 %v1230, %v1218
    %v1555 = vpack.c.b16 %v1231, %v1219
    %v1556 = vpack.c.b16 %v1232, %v1220
    %v1557 = vpack.c.b16 %v1233, %v1221
    %v1558 = vpack.c.b16 %v1234, %v1222
    %v1559 = vpack.c.b16 %v1235, %v1223
    %v1560 = vpack.c.b16 %v1236, %v1224
    %v1561 = vpack.c.b16 %v1237, %v1225
    %v1562 = vpack.c.b16 %v1238, %v1226
    %v1563 = vpack.c.b16 %v1239, %v1227
    %v1564 = vpack.c.b16 %v1240, %v1228
    %v1565 = vpack.c.b16 %v1253, %v1241
    %v1566 = vpack.c.b16 %v1254, %v1242
    %v1567 = vpack.c.b16 %v1255, %v1243
    %v1568 = vpack.c.b16 %v1256, %v1244
    %v1569 = vpack.c.b16 %v1257, %v1245
    %v1570 = vpack.c.b16 %v1258, %v1246
    %v1571 = vpack.c.b16 %v1259, %v1247
    %v1572 = vpack.c.b16 %v1260, %v1248
    %v1573 = vpack.c.b16 %v1261, %v1249
    %v1574 = vpack.c.b16 %v1262, %v1250
    %v1575 = vpack.c.b16 %v1263, %v1251
    %v1576 = vpack.c.b16 %v1264, %v1252
    %v1577 = vpack.c.b16 %v1277, %v1265
    %v1578 = vpack.c.b16 %v1278, %v1266
    %v1579 = vpack.c.b16 %v1279, %v1267
    %v1580 = vpack.c.b16 %v1280, %v1268
    %v1581 = vpack.c.b16 %v1281, %v1269
    %v1582 = vpack.c.b16 %v1282, %v1270
    %v1583 = vpack.c.b16 %v1283, %v1271
    %v1584 = vpack.c.b16 %v1284, %v1272
    %v1585 = vpack.c.b16 %v1285, %v1273
    %v1586 = vpack.c.b16 %v1286, %v1274
    %v1587 = vpack.c.b16 %v1287, %v1275
    %v1588 = vpack.c.b16 %v1288, %v1276
    %v1589 = vpack.c.b16 %v1301, %v1289
    %v1590 = vpack.c.b16 %v1302, %v1290
    %v1591 = vpack.c.b16 %v1303, %v1291
    %v1592 = vpack.c.b16 %v1304, %v1292
    %v1593 = vpack.c.b16 %v1305, %v1293
    %v1594 = vpack.c.b16 %v1306, %v1294
    %v1595 = vpack.c.b16 %v1307, %v1295
    %v1596 = vpack.c.b16 %v1308, %v1296
    %v1597 = vpack.c.b16 %v1309, %v1297
    %v1598 = vpack.c.b16 %v1310, %v1298
    %v1599 = vpack.c.b16 %v1311, %v1299
    %v1600 = vpack.c.b16 %v1312, %v1300
    %1889 = vmatprep.subr.bf16.mxu0 %v1398
    %1890 = vmatpush1.bf16.msra.mxu0 %v1397
    %1891 = vmatprep.subr.bf16.mxu0 %v1386
    %1892 = vmatpush1.bf16.msra.mxu0 %v1385
    %1893 = vmatprep.subr.bf16.mxu0 %v1374
    %1894 = vmatpush1.bf16.msra.mxu0 %v1373
    %1895 = vmatprep.subr.bf16.mxu0 %v1362
    %1896 = vmatpush1.bf16.msra.mxu0 %v1361
    %1897 = vmatprep.subr.bf16.mxu0 %v1350
    %1898 = vmatpush1.bf16.msra.mxu0 %v1349
    %1899 = vmatprep.subr.bf16.mxu0 %v1338
    %1900 = vmatpush1.bf16.msra.mxu0 %v1337
    %1901 = vmatprep.subr.bf16.mxu0 %v1326
    %1902 = vmatpush1.bf16.msra.mxu0 %v1325
    %1903 = vmatprep.subr.bf16.mxu0 %v1314
    %1904 = vmatpush1.bf16.msra.mxu0 %v1313
    %1905 = vmatprep.subr.bf16.mxu0 %v1494
    %1906 = vmatpush2.bf16.msra.mxu0 %v1493
    %1907 = vmatprep.subr.bf16.mxu0 %v1482
    %1908 = vmatpush2.bf16.msra.mxu0 %v1481
    %1909 = vmatprep.subr.bf16.mxu0 %v1470
    %1910 = vmatpush2.bf16.msra.mxu0 %v1469
    %1911 = vmatprep.subr.bf16.mxu0 %v1458
    %1912 = vmatpush2.bf16.msra.mxu0 %v1457
    %1913 = vmatprep.subr.bf16.mxu0 %v1446
    %1914 = vmatpush2.bf16.msra.mxu0 %v1445
    %1915 = vmatprep.subr.bf16.mxu0 %v1434
    %1916 = vmatpush2.bf16.msra.mxu0 %v1433
    %1917 = vmatprep.subr.bf16.mxu0 %v1422
    %1918 = vmatpush2.bf16.msra.mxu0 %v1421
    %1919 = vmatprep.subr.bf16.mxu0 %v1410
    %1920 = vmatpush2.bf16.msra.mxu0 %v1409
    %1921 = vmatprep.mubr.bf16.mxu0 %v95
    %1922 = vmatmul.mubr.bf16.gmra.mxu0 %v94
    %v1923 = vpop.f32.mrf.mxu0
    %v1924 = vadd.f32 %v392, %v1923
    %v1925 = vpop.f32.mrf.mxu0
    %v1926 = vadd.f32 %v396, %v1925
    %v1927 = vpop.f32.mrf.mxu0
    %v1928 = vadd.f32 %v392, %v1927
    %v1929 = vpop.f32.mrf.mxu0
    %v1930 = vadd.f32 %v396, %v1929
    %1931 = vdwg.mxu0
    %1932 = vmatprep.subr.bf16.mxu0 %v1590
    %1933 = vmatpush1.bf16.msra.mxu0 %v1589
    %1934 = vmatprep.subr.bf16.mxu0 %v1578
    %1935 = vmatpush1.bf16.msra.mxu0 %v1577
    %1936 = vmatprep.subr.bf16.mxu0 %v1566
    %1937 = vmatpush1.bf16.msra.mxu0 %v1565
    %1938 = vmatprep.subr.bf16.mxu0 %v1554
    %1939 = vmatpush1.bf16.msra.mxu0 %v1553
    %1940 = vmatprep.subr.bf16.mxu0 %v1542
    %1941 = vmatpush1.bf16.msra.mxu0 %v1541
    %1942 = vmatprep.subr.bf16.mxu0 %v1530
    %1943 = vmatpush1.bf16.msra.mxu0 %v1529
    %1944 = vmatprep.subr.bf16.mxu0 %v1518
    %1945 = vmatpush1.bf16.msra.mxu0 %v1517
    %1946 = vmatprep.subr.bf16.mxu0 %v1506
    %1947 = vmatpush1.bf16.msra.mxu0 %v1505
    %1948 = vmatprep.subr.bf16.mxu0 0
    %1949 = vmatpush2.bf16.msra.mxu0 0
    %1950 = vmatprep.subr.bf16.mxu0 0
    %1951 = vmatpush2.bf16.msra.mxu0 0
    %1952 = vmatprep.subr.bf16.mxu0 0
    %1953 = vmatpush2.bf16.msra.mxu0 0
    %1954 = vmatprep.subr.bf16.mxu0 0
    %1955 = vmatpush2.bf16.msra.mxu0 0
    %1956 = vmatprep.subr.bf16.mxu0 0
    %1957 = vmatpush2.bf16.msra.mxu0 0
    %1958 = vmatprep.subr.bf16.mxu0 0
    %1959 = vmatpush2.bf16.msra.mxu0 0
    %1960 = vmatprep.subr.bf16.mxu0 0
    %1961 = vmatpush2.bf16.msra.mxu0 0
    %1962 = vmatprep.subr.bf16.mxu0 0
    %1963 = vmatpush2.bf16.msra.mxu0 0
    %1964 = vmatprep.mubr.bf16.mxu0 0
    %1965 = vmatmul.mubr.bf16.gmra.mxu0 %v96
    %v1966 = vpop.f32.mrf.mxu0
    %v1967 = vadd.f32 %v1924, %v1966
    %v1968 = vpop.f32.mrf.mxu0
    %v1969 = vadd.f32 %v1926, %v1968
    %v1970 = vpop.f32.mrf.mxu0
    %v1971 = vadd.f32 %v1928, %v1970
    %v1972 = vpop.f32.mrf.mxu0
    %v1973 = vadd.f32 %v1930, %v1972
    %1974 = vdwg.mxu0
    %1975 = vmatprep.subr.bf16.mxu0 %v1400
    %1976 = vmatpush1.bf16.msra.mxu0 %v1399
    %1977 = vmatprep.subr.bf16.mxu0 %v1388
    %1978 = vmatpush1.bf16.msra.mxu0 %v1387
    %1979 = vmatprep.subr.bf16.mxu0 %v1376
    %1980 = vmatpush1.bf16.msra.mxu0 %v1375
    %1981 = vmatprep.subr.bf16.mxu0 %v1364
    %1982 = vmatpush1.bf16.msra.mxu0 %v1363
    %1983 = vmatprep.subr.bf16.mxu0 %v1352
    %1984 = vmatpush1.bf16.msra.mxu0 %v1351
    %1985 = vmatprep.subr.bf16.mxu0 %v1340
    %1986 = vmatpush1.bf16.msra.mxu0 %v1339
    %1987 = vmatprep.subr.bf16.mxu0 %v1328
    %1988 = vmatpush1.bf16.msra.mxu0 %v1327
    %1989 = vmatprep.subr.bf16.mxu0 %v1316
    %1990 = vmatpush1.bf16.msra.mxu0 %v1315
    %1991 = vmatprep.subr.bf16.mxu0 %v1496
    %1992 = vmatpush2.bf16.msra.mxu0 %v1495
    %1993 = vmatprep.subr.bf16.mxu0 %v1484
    %1994 = vmatpush2.bf16.msra.mxu0 %v1483
    %1995 = vmatprep.subr.bf16.mxu0 %v1472
    %1996 = vmatpush2.bf16.msra.mxu0 %v1471
    %1997 = vmatprep.subr.bf16.mxu0 %v1460
    %1998 = vmatpush2.bf16.msra.mxu0 %v1459
    %1999 = vmatprep.subr.bf16.mxu0 %v1448
    %2000 = vmatpush2.bf16.msra.mxu0 %v1447
    %2001 = vmatprep.subr.bf16.mxu0 %v1436
    %2002 = vmatpush2.bf16.msra.mxu0 %v1435
    %2003 = vmatprep.subr.bf16.mxu0 %v1424
    %2004 = vmatpush2.bf16.msra.mxu0 %v1423
    %2005 = vmatprep.subr.bf16.mxu0 %v1412
    %2006 = vmatpush2.bf16.msra.mxu0 %v1411
    %2007 = vmatprep.mubr.bf16.mxu0 %v95
    %2008 = vmatmul.mubr.bf16.gmra.mxu0 %v94
    %v2009 = vpop.f32.mrf.mxu0
    %v2010 = vadd.f32 %v400, %v2009
    %v2011 = vpop.f32.mrf.mxu0
    %v2012 = vadd.f32 %v404, %v2011
    %v2013 = vpop.f32.mrf.mxu0
    %v2014 = vadd.f32 %v400, %v2013
    %v2015 = vpop.f32.mrf.mxu0
    %v2016 = vadd.f32 %v404, %v2015
    %2017 = vdwg.mxu0
    %2018 = vmatprep.subr.bf16.mxu0 %v1592
    %2019 = vmatpush1.bf16.msra.mxu0 %v1591
    %2020 = vmatprep.subr.bf16.mxu0 %v1580
    %2021 = vmatpush1.bf16.msra.mxu0 %v1579
    %2022 = vmatprep.subr.bf16.mxu0 %v1568
    %2023 = vmatpush1.bf16.msra.mxu0 %v1567
    %2024 = vmatprep.subr.bf16.mxu0 %v1556
    %2025 = vmatpush1.bf16.msra.mxu0 %v1555
    %2026 = vmatprep.subr.bf16.mxu0 %v1544
    %2027 = vmatpush1.bf16.msra.mxu0 %v1543
    %2028 = vmatprep.subr.bf16.mxu0 %v1532
    %2029 = vmatpush1.bf16.msra.mxu0 %v1531
    %2030 = vmatprep.subr.bf16.mxu0 %v1520
    %2031 = vmatpush1.bf16.msra.mxu0 %v1519
    %2032 = vmatprep.subr.bf16.mxu0 %v1508
    %2033 = vmatpush1.bf16.msra.mxu0 %v1507
    %2034 = vmatprep.subr.bf16.mxu0 0
    %2035 = vmatpush2.bf16.msra.mxu0 0
    %2036 = vmatprep.subr.bf16.mxu0 0
    %2037 = vmatpush2.bf16.msra.mxu0 0
    %2038 = vmatprep.subr.bf16.mxu0 0
    %2039 = vmatpush2.bf16.msra.mxu0 0
    %2040 = vmatprep.subr.bf16.mxu0 0
    %2041 = vmatpush2.bf16.msra.mxu0 0
    %2042 = vmatprep.subr.bf16.mxu0 0
    %2043 = vmatpush2.bf16.msra.mxu0 0
    %2044 = vmatprep.subr.bf16.mxu0 0
    %2045 = vmatpush2.bf16.msra.mxu0 0
    %2046 = vmatprep.subr.bf16.mxu0 0
    %2047 = vmatpush2.bf16.msra.mxu0 0
    %2048 = vmatprep.subr.bf16.mxu0 0
    %2049 = vmatpush2.bf16.msra.mxu0 0
    %2050 = vmatprep.mubr.bf16.mxu0 0
    %2051 = vmatmul.mubr.bf16.gmra.mxu0 %v96
    %v2052 = vpop.f32.mrf.mxu0
    %v2053 = vadd.f32 %v2010, %v2052
    %v2054 = vpop.f32.mrf.mxu0
    %v2055 = vadd.f32 %v2012, %v2054
    %v2056 = vpop.f32.mrf.mxu0
    %v2057 = vadd.f32 %v2014, %v2056
    %v2058 = vpop.f32.mrf.mxu0
    %v2059 = vadd.f32 %v2016, %v2058
    %2060 = vdwg.mxu0
    %2061 = vmatprep.subr.bf16.mxu0 %v1402
    %2062 = vmatpush1.bf16.msra.mxu0 %v1401
    %2063 = vmatprep.subr.bf16.mxu0 %v1390
    %2064 = vmatpush1.bf16.msra.mxu0 %v1389
    %2065 = vmatprep.subr.bf16.mxu0 %v1378
    %2066 = vmatpush1.bf16.msra.mxu0 %v1377
    %2067 = vmatprep.subr.bf16.mxu0 %v1366
    %2068 = vmatpush1.bf16.msra.mxu0 %v1365
    %2069 = vmatprep.subr.bf16.mxu0 %v1354
    %2070 = vmatpush1.bf16.msra.mxu0 %v1353
    %2071 = vmatprep.subr.bf16.mxu0 %v1342
    %2072 = vmatpush1.bf16.msra.mxu0 %v1341
    %2073 = vmatprep.subr.bf16.mxu0 %v1330
    %2074 = vmatpush1.bf16.msra.mxu0 %v1329
    %2075 = vmatprep.subr.bf16.mxu0 %v1318
    %2076 = vmatpush1.bf16.msra.mxu0 %v1317
    %2077 = vmatprep.subr.bf16.mxu0 %v1498
    %2078 = vmatpush2.bf16.msra.mxu0 %v1497
    %2079 = vmatprep.subr.bf16.mxu0 %v1486
    %2080 = vmatpush2.bf16.msra.mxu0 %v1485
    %2081 = vmatprep.subr.bf16.mxu0 %v1474
    %2082 = vmatpush2.bf16.msra.mxu0 %v1473
    %2083 = vmatprep.subr.bf16.mxu0 %v1462
    %2084 = vmatpush2.bf16.msra.mxu0 %v1461
    %2085 = vmatprep.subr.bf16.mxu0 %v1450
    %2086 = vmatpush2.bf16.msra.mxu0 %v1449
    %2087 = vmatprep.subr.bf16.mxu0 %v1438
    %2088 = vmatpush2.bf16.msra.mxu0 %v1437
    %2089 = vmatprep.subr.bf16.mxu0 %v1426
    %2090 = vmatpush2.bf16.msra.mxu0 %v1425
    %2091 = vmatprep.subr.bf16.mxu0 %v1414
    %2092 = vmatpush2.bf16.msra.mxu0 %v1413
    %2093 = vmatprep.mubr.bf16.mxu0 %v95
    %2094 = vmatmul.mubr.bf16.gmra.mxu0 %v94
    %v2095 = vpop.f32.mrf.mxu0
    %v2096 = vadd.f32 %v408, %v2095
    %v2097 = vpop.f32.mrf.mxu0
    %v2098 = vadd.f32 %v412, %v2097
    %v2099 = vpop.f32.mrf.mxu0
    %v2100 = vadd.f32 %v408, %v2099
    %v2101 = vpop.f32.mrf.mxu0
    %v2102 = vadd.f32 %v412, %v2101
    %2103 = vdwg.mxu0
    %2104 = vmatprep.subr.bf16.mxu0 %v1594
    %2105 = vmatpush1.bf16.msra.mxu0 %v1593
    %2106 = vmatprep.subr.bf16.mxu0 %v1582
    %2107 = vmatpush1.bf16.msra.mxu0 %v1581
    %2108 = vmatprep.subr.bf16.mxu0 %v1570
    %2109 = vmatpush1.bf16.msra.mxu0 %v1569
    %2110 = vmatprep.subr.bf16.mxu0 %v1558
    %2111 = vmatpush1.bf16.msra.mxu0 %v1557
    %2112 = vmatprep.subr.bf16.mxu0 %v1546
    %2113 = vmatpush1.bf16.msra.mxu0 %v1545
    %2114 = vmatprep.subr.bf16.mxu0 %v1534
    %2115 = vmatpush1.bf16.msra.mxu0 %v1533
    %2116 = vmatprep.subr.bf16.mxu0 %v1522
    %2117 = vmatpush1.bf16.msra.mxu0 %v1521
    %2118 = vmatprep.subr.bf16.mxu0 %v1510
    %2119 = vmatpush1.bf16.msra.mxu0 %v1509
    %2120 = vmatprep.subr.bf16.mxu0 0
    %2121 = vmatpush2.bf16.msra.mxu0 0
    %2122 = vmatprep.subr.bf16.mxu0 0
    %2123 = vmatpush2.bf16.msra.mxu0 0
    %2124 = vmatprep.subr.bf16.mxu0 0
    %2125 = vmatpush2.bf16.msra.mxu0 0
    %2126 = vmatprep.subr.bf16.mxu0 0
    %2127 = vmatpush2.bf16.msra.mxu0 0
    %2128 = vmatprep.subr.bf16.mxu0 0
    %2129 = vmatpush2.bf16.msra.mxu0 0
    %2130 = vmatprep.subr.bf16.mxu0 0
    %2131 = vmatpush2.bf16.msra.mxu0 0
    %2132 = vmatprep.subr.bf16.mxu0 0
    %2133 = vmatpush2.bf16.msra.mxu0 0
    %2134 = vmatprep.subr.bf16.mxu0 0
    %2135 = vmatpush2.bf16.msra.mxu0 0
    %2136 = vmatprep.mubr.bf16.mxu0 0
    %2137 = vmatmul.mubr.bf16.gmra.mxu0 %v96
    %v2138 = vpop.f32.mrf.mxu0
    %v2139 = vadd.f32 %v2096, %v2138
    %v2140 = vpop.f32.mrf.mxu0
    %v2141 = vadd.f32 %v2098, %v2140
    %v2142 = vpop.f32.mrf.mxu0
    %v2143 = vadd.f32 %v2100, %v2142
    %v2144 = vpop.f32.mrf.mxu0
    %v2145 = vadd.f32 %v2102, %v2144
    %2146 = vdwg.mxu0
    %2147 = vmatprep.subr.bf16.mxu0 %v1404
    %2148 = vmatpush1.bf16.msra.mxu0 %v1403
    %2149 = vmatprep.subr.bf16.mxu0 %v1392
    %2150 = vmatpush1.bf16.msra.mxu0 %v1391
    %2151 = vmatprep.subr.bf16.mxu0 %v1380
    %2152 = vmatpush1.bf16.msra.mxu0 %v1379
    %2153 = vmatprep.subr.bf16.mxu0 %v1368
    %2154 = vmatpush1.bf16.msra.mxu0 %v1367
    %2155 = vmatprep.subr.bf16.mxu0 %v1356
    %2156 = vmatpush1.bf16.msra.mxu0 %v1355
    %2157 = vmatprep.subr.bf16.mxu0 %v1344
    %2158 = vmatpush1.bf16.msra.mxu0 %v1343
    %2159 = vmatprep.subr.bf16.mxu0 %v1332
    %2160 = vmatpush1.bf16.msra.mxu0 %v1331
    %2161 = vmatprep.subr.bf16.mxu0 %v1320
    %2162 = vmatpush1.bf16.msra.mxu0 %v1319
    %2163 = vmatprep.subr.bf16.mxu0 %v1500
    %2164 = vmatpush2.bf16.msra.mxu0 %v1499
    %2165 = vmatprep.subr.bf16.mxu0 %v1488
    %2166 = vmatpush2.bf16.msra.mxu0 %v1487
    %2167 = vmatprep.subr.bf16.mxu0 %v1476
    %2168 = vmatpush2.bf16.msra.mxu0 %v1475
    %2169 = vmatprep.subr.bf16.mxu0 %v1464
    %2170 = vmatpush2.bf16.msra.mxu0 %v1463
    %2171 = vmatprep.subr.bf16.mxu0 %v1452
    %2172 = vmatpush2.bf16.msra.mxu0 %v1451
    %2173 = vmatprep.subr.bf16.mxu0 %v1440
    %2174 = vmatpush2.bf16.msra.mxu0 %v1439
    %2175 = vmatprep.subr.bf16.mxu0 %v1428
    %2176 = vmatpush2.bf16.msra.mxu0 %v1427
    %2177 = vmatprep.subr.bf16.mxu0 %v1416
    %2178 = vmatpush2.bf16.msra.mxu0 %v1415
    %2179 = vmatprep.mubr.bf16.mxu0 %v95
    %2180 = vmatmul.mubr.bf16.gmra.mxu0 %v94
    %v2181 = vpop.f32.mrf.mxu0
    %v2182 = vadd.f32 %v416, %v2181
    %v2183 = vpop.f32.mrf.mxu0
    %v2184 = vadd.f32 %v420, %v2183
    %v2185 = vpop.f32.mrf.mxu0
    %v2186 = vadd.f32 %v416, %v2185
    %v2187 = vpop.f32.mrf.mxu0
    %v2188 = vadd.f32 %v420, %v2187
    %2189 = vdwg.mxu0
    %2190 = vmatprep.subr.bf16.mxu0 %v1596
    %2191 = vmatpush1.bf16.msra.mxu0 %v1595
    %2192 = vmatprep.subr.bf16.mxu0 %v1584
    %2193 = vmatpush1.bf16.msra.mxu0 %v1583
    %2194 = vmatprep.subr.bf16.mxu0 %v1572
    %2195 = vmatpush1.bf16.msra.mxu0 %v1571
    %2196 = vmatprep.subr.bf16.mxu0 %v1560
    %2197 = vmatpush1.bf16.msra.mxu0 %v1559
    %2198 = vmatprep.subr.bf16.mxu0 %v1548
    %2199 = vmatpush1.bf16.msra.mxu0 %v1547
    %2200 = vmatprep.subr.bf16.mxu0 %v1536
    %2201 = vmatpush1.bf16.msra.mxu0 %v1535
    %2202 = vmatprep.subr.bf16.mxu0 %v1524
    %2203 = vmatpush1.bf16.msra.mxu0 %v1523
    %2204 = vmatprep.subr.bf16.mxu0 %v1512
    %2205 = vmatpush1.bf16.msra.mxu0 %v1511
    %2206 = vmatprep.subr.bf16.mxu0 0
    %2207 = vmatpush2.bf16.msra.mxu0 0
    %2208 = vmatprep.subr.bf16.mxu0 0
    %2209 = vmatpush2.bf16.msra.mxu0 0
    %2210 = vmatprep.subr.bf16.mxu0 0
    %2211 = vmatpush2.bf16.msra.mxu0 0
    %2212 = vmatprep.subr.bf16.mxu0 0
    %2213 = vmatpush2.bf16.msra.mxu0 0
    %2214 = vmatprep.subr.bf16.mxu0 0
    %2215 = vmatpush2.bf16.msra.mxu0 0
    %2216 = vmatprep.subr.bf16.mxu0 0
    %2217 = vmatpush2.bf16.msra.mxu0 0
    %2218 = vmatprep.subr.bf16.mxu0 0
    %2219 = vmatpush2.bf16.msra.mxu0 0
    %2220 = vmatprep.subr.bf16.mxu0 0
    %2221 = vmatpush2.bf16.msra.mxu0 0
    %2222 = vmatprep.mubr.bf16.mxu0 0
    %2223 = vmatmul.mubr.bf16.gmra.mxu0 %v96
    %v2224 = vpop.f32.mrf.mxu0
    %v2225 = vadd.f32 %v2182, %v2224
    %v2226 = vpop.f32.mrf.mxu0
    %v2227 = vadd.f32 %v2184, %v2226
    %v2228 = vpop.f32.mrf.mxu0
    %v2229 = vadd.f32 %v2186, %v2228
    %v2230 = vpop.f32.mrf.mxu0
    %v2231 = vadd.f32 %v2188, %v2230
    %2232 = vdwg.mxu0
    %2233 = vmatprep.subr.bf16.mxu0 %v1406
    %2234 = vmatpush1.bf16.msra.mxu0 %v1405
    %2235 = vmatprep.subr.bf16.mxu0 %v1394
    %2236 = vmatpush1.bf16.msra.mxu0 %v1393
    %2237 = vmatprep.subr.bf16.mxu0 %v1382
    %2238 = vmatpush1.bf16.msra.mxu0 %v1381
    %2239 = vmatprep.subr.bf16.mxu0 %v1370
    %2240 = vmatpush1.bf16.msra.mxu0 %v1369
    %2241 = vmatprep.subr.bf16.mxu0 %v1358
    %2242 = vmatpush1.bf16.msra.mxu0 %v1357
    %2243 = vmatprep.subr.bf16.mxu0 %v1346
    %2244 = vmatpush1.bf16.msra.mxu0 %v1345
    %2245 = vmatprep.subr.bf16.mxu0 %v1334
    %2246 = vmatpush1.bf16.msra.mxu0 %v1333
    %2247 = vmatprep.subr.bf16.mxu0 %v1322
    %2248 = vmatpush1.bf16.msra.mxu0 %v1321
    %2249 = vmatprep.subr.bf16.mxu0 %v1502
    %2250 = vmatpush2.bf16.msra.mxu0 %v1501
    %2251 = vmatprep.subr.bf16.mxu0 %v1490
    %2252 = vmatpush2.bf16.msra.mxu0 %v1489
    %2253 = vmatprep.subr.bf16.mxu0 %v1478
    %2254 = vmatpush2.bf16.msra.mxu0 %v1477
    %2255 = vmatprep.subr.bf16.mxu0 %v1466
    %2256 = vmatpush2.bf16.msra.mxu0 %v1465
    %2257 = vmatprep.subr.bf16.mxu0 %v1454
    %2258 = vmatpush2.bf16.msra.mxu0 %v1453
    %2259 = vmatprep.subr.bf16.mxu0 %v1442
    %2260 = vmatpush2.bf16.msra.mxu0 %v1441
    %2261 = vmatprep.subr.bf16.mxu0 %v1430
    %2262 = vmatpush2.bf16.msra.mxu0 %v1429
    %2263 = vmatprep.subr.bf16.mxu0 %v1418
    %2264 = vmatpush2.bf16.msra.mxu0 %v1417
    %2265 = vmatprep.mubr.bf16.mxu0 %v95
    %2266 = vmatmul.mubr.bf16.gmra.mxu0 %v94
    %v2267 = vpop.f32.mrf.mxu0
    %v2268 = vadd.f32 %v424, %v2267
    %v2269 = vpop.f32.mrf.mxu0
    %v2270 = vadd.f32 %v428, %v2269
    %v2271 = vpop.f32.mrf.mxu0
    %v2272 = vadd.f32 %v424, %v2271
    %v2273 = vpop.f32.mrf.mxu0
    %v2274 = vadd.f32 %v428, %v2273
    %2275 = vdwg.mxu0
    %2276 = vmatprep.subr.bf16.mxu0 %v1598
    %2277 = vmatpush1.bf16.msra.mxu0 %v1597
    %2278 = vmatprep.subr.bf16.mxu0 %v1586
    %2279 = vmatpush1.bf16.msra.mxu0 %v1585
    %2280 = vmatprep.subr.bf16.mxu0 %v1574
    %2281 = vmatpush1.bf16.msra.mxu0 %v1573
    %2282 = vmatprep.subr.bf16.mxu0 %v1562
    %2283 = vmatpush1.bf16.msra.mxu0 %v1561
    %2284 = vmatprep.subr.bf16.mxu0 %v1550
    %2285 = vmatpush1.bf16.msra.mxu0 %v1549
    %2286 = vmatprep.subr.bf16.mxu0 %v1538
    %2287 = vmatpush1.bf16.msra.mxu0 %v1537
    %2288 = vmatprep.subr.bf16.mxu0 %v1526
    %2289 = vmatpush1.bf16.msra.mxu0 %v1525
    %2290 = vmatprep.subr.bf16.mxu0 %v1514
    %2291 = vmatpush1.bf16.msra.mxu0 %v1513
    %2292 = vmatprep.subr.bf16.mxu0 0
    %2293 = vmatpush2.bf16.msra.mxu0 0
    %2294 = vmatprep.subr.bf16.mxu0 0
    %2295 = vmatpush2.bf16.msra.mxu0 0
    %2296 = vmatprep.subr.bf16.mxu0 0
    %2297 = vmatpush2.bf16.msra.mxu0 0
    %2298 = vmatprep.subr.bf16.mxu0 0
    %2299 = vmatpush2.bf16.msra.mxu0 0
    %2300 = vmatprep.subr.bf16.mxu0 0
    %2301 = vmatpush2.bf16.msra.mxu0 0
    %2302 = vmatprep.subr.bf16.mxu0 0
    %2303 = vmatpush2.bf16.msra.mxu0 0
    %2304 = vmatprep.subr.bf16.mxu0 0
    %2305 = vmatpush2.bf16.msra.mxu0 0
    %2306 = vmatprep.subr.bf16.mxu0 0
    %2307 = vmatpush2.bf16.msra.mxu0 0
    %2308 = vmatprep.mubr.bf16.mxu0 0
    %2309 = vmatmul.mubr.bf16.gmra.mxu0 %v96
    %v2310 = vpop.f32.mrf.mxu0
    %v2311 = vadd.f32 %v2268, %v2310
    %v2312 = vpop.f32.mrf.mxu0
    %v2313 = vadd.f32 %v2270, %v2312
    %v2314 = vpop.f32.mrf.mxu0
    %v2315 = vadd.f32 %v2272, %v2314
    %v2316 = vpop.f32.mrf.mxu0
    %v2317 = vadd.f32 %v2274, %v2316
    %2318 = vdwg.mxu0
    %2319 = vmatprep.subr.bf16.mxu0 %v1408
    %2320 = vmatpush1.bf16.msra.mxu0 %v1407
    %2321 = vmatprep.subr.bf16.mxu0 %v1396
    %2322 = vmatpush1.bf16.msra.mxu0 %v1395
    %2323 = vmatprep.subr.bf16.mxu0 %v1384
    %2324 = vmatpush1.bf16.msra.mxu0 %v1383
    %2325 = vmatprep.subr.bf16.mxu0 %v1372
    %2326 = vmatpush1.bf16.msra.mxu0 %v1371
    %2327 = vmatprep.subr.bf16.mxu0 %v1360
    %2328 = vmatpush1.bf16.msra.mxu0 %v1359
    %2329 = vmatprep.subr.bf16.mxu0 %v1348
    %2330 = vmatpush1.bf16.msra.mxu0 %v1347
    %2331 = vmatprep.subr.bf16.mxu0 %v1336
    %2332 = vmatpush1.bf16.msra.mxu0 %v1335
    %2333 = vmatprep.subr.bf16.mxu0 %v1324
    %2334 = vmatpush1.bf16.msra.mxu0 %v1323
    %2335 = vmatprep.subr.bf16.mxu0 %v1504
    %2336 = vmatpush2.bf16.msra.mxu0 %v1503
    %2337 = vmatprep.subr.bf16.mxu0 %v1492
    %2338 = vmatpush2.bf16.msra.mxu0 %v1491
    %2339 = vmatprep.subr.bf16.mxu0 %v1480
    %2340 = vmatpush2.bf16.msra.mxu0 %v1479
    %2341 = vmatprep.subr.bf16.mxu0 %v1468
    %2342 = vmatpush2.bf16.msra.mxu0 %v1467
    %2343 = vmatprep.subr.bf16.mxu0 %v1456
    %2344 = vmatpush2.bf16.msra.mxu0 %v1455
    %2345 = vmatprep.subr.bf16.mxu0 %v1444
    %2346 = vmatpush2.bf16.msra.mxu0 %v1443
    %2347 = vmatprep.subr.bf16.mxu0 %v1432
    %2348 = vmatpush2.bf16.msra.mxu0 %v1431
    %2349 = vmatprep.subr.bf16.mxu0 %v1420
    %2350 = vmatpush2.bf16.msra.mxu0 %v1419
    %2351 = vmatprep.mubr.bf16.mxu0 %v95
    %2352 = vmatmul.mubr.bf16.gmra.mxu0 %v94
    %v2353 = vpop.f32.mrf.mxu0
    %v2354 = vadd.f32 %v432, %v2353
    %v2355 = vpop.f32.mrf.mxu0
    %v2356 = vadd.f32 %v436, %v2355
    %v2357 = vpop.f32.mrf.mxu0
    %v2358 = vadd.f32 %v432, %v2357
    %v2359 = vpop.f32.mrf.mxu0
    %v2360 = vadd.f32 %v436, %v2359
    %2361 = vdwg.mxu0
    %2362 = vmatprep.subr.bf16.mxu0 %v1600
    %2363 = vmatpush1.bf16.msra.mxu0 %v1599
    %2364 = vmatprep.subr.bf16.mxu0 %v1588
    %2365 = vmatpush1.bf16.msra.mxu0 %v1587
    %2366 = vmatprep.subr.bf16.mxu0 %v1576
    %2367 = vmatpush1.bf16.msra.mxu0 %v1575
    %2368 = vmatprep.subr.bf16.mxu0 %v1564
    %2369 = vmatpush1.bf16.msra.mxu0 %v1563
    %2370 = vmatprep.subr.bf16.mxu0 %v1552
    %2371 = vmatpush1.bf16.msra.mxu0 %v1551
    %2372 = vmatprep.subr.bf16.mxu0 %v1540
    %2373 = vmatpush1.bf16.msra.mxu0 %v1539
    %2374 = vmatprep.subr.bf16.mxu0 %v1528
    %2375 = vmatpush1.bf16.msra.mxu0 %v1527
    %2376 = vmatprep.subr.bf16.mxu0 %v1516
    %2377 = vmatpush1.bf16.msra.mxu0 %v1515
    %2378 = vmatprep.subr.bf16.mxu0 0
    %2379 = vmatpush2.bf16.msra.mxu0 0
    %2380 = vmatprep.subr.bf16.mxu0 0
    %2381 = vmatpush2.bf16.msra.mxu0 0
    %2382 = vmatprep.subr.bf16.mxu0 0
    %2383 = vmatpush2.bf16.msra.mxu0 0
    %2384 = vmatprep.subr.bf16.mxu0 0
    %2385 = vmatpush2.bf16.msra.mxu0 0
    %2386 = vmatprep.subr.bf16.mxu0 0
    %2387 = vmatpush2.bf16.msra.mxu0 0
    %2388 = vmatprep.subr.bf16.mxu0 0
    %2389 = vmatpush2.bf16.msra.mxu0 0
    %2390 = vmatprep.subr.bf16.mxu0 0
    %2391 = vmatpush2.bf16.msra.mxu0 0
    %2392 = vmatprep.subr.bf16.mxu0 0
    %2393 = vmatpush2.bf16.msra.mxu0 0
    %2394 = vmatprep.mubr.bf16.mxu0 0
    %2395 = vmatmul.mubr.bf16.gmra.mxu0 %v96
    %v2396 = vpop.f32.mrf.mxu0
    %v2397 = vadd.f32 %v2354, %v2396
    %v2398 = vpop.f32.mrf.mxu0
    %v2399 = vadd.f32 %v2356, %v2398
    %v2400 = vpop.f32.mrf.mxu0
    %v2401 = vadd.f32 %v2358, %v2400
    %v2402 = vpop.f32.mrf.mxu0
    %v2403 = vadd.f32 %v2360, %v2402
    %2404 = vdwg.mxu0
    %v2405 = vmax.f32 %v1967, 0.0
    %v2406 = vmax.f32 %v1969, 0.0
    %v2407 = vmax.f32 %v2053, 0.0
    %v2408 = vmax.f32 %v2055, 0.0
    %v2409 = vmax.f32 %v2139, 0.0
    %v2410 = vmax.f32 %v2141, 0.0
    %v2411 = vmax.f32 %v2225, 0.0
    %v2412 = vmax.f32 %v2227, 0.0
    %v2413 = vmax.f32 %v2311, 0.0
    %v2414 = vmax.f32 %v2313, 0.0
    %v2415 = vmax.f32 %v2397, 0.0
    %v2416 = vmax.f32 %v2399, 0.0
    %v2417 = vmax.f32 %v1971, 0.0
    %v2418 = vmax.f32 %v1973, 0.0
    %v2419 = vmax.f32 %v2057, 0.0
    %v2420 = vmax.f32 %v2059, 0.0
    %v2421 = vmax.f32 %v2143, 0.0
    %v2422 = vmax.f32 %v2145, 0.0
    %v2423 = vmax.f32 %v2229, 0.0
    %v2424 = vmax.f32 %v2231, 0.0
    %v2425 = vmax.f32 %v2315, 0.0
    %v2426 = vmax.f32 %v2317, 0.0
    %v2427 = vmax.f32 %v2401, 0.0
    %v2428 = vmax.f32 %v2403, 0.0
    %v2429 = vpack.c.bf16 %v2417, %v2405
    %v2430 = vpack.c.bf16 %v2418, %v2406
    %v2431 = vpack.c.bf16 %v2419, %v2407
    %v2432 = vpack.c.bf16 %v2420, %v2408
    %v2433 = vpack.c.bf16 %v2421, %v2409
    %v2434 = vpack.c.bf16 %v2422, %v2410
    %v2435 = vpack.c.bf16 %v2423, %v2411
    %v2436 = vpack.c.bf16 %v2424, %v2412
    %v2437 = vpack.c.bf16 %v2425, %v2413
    %v2438 = vpack.c.bf16 %v2426, %v2414
    %v2439 = vpack.c.bf16 %v2427, %v2415
    %v2440 = vpack.c.bf16 %v2428, %v2416
    %v2441 = vld [vmem:[#allocation10] sm:$0xff]
    %v2442 = vld [vmem:[#allocation10 + $0x8] sm:$0xf]
    %v2443 = vld [vmem:[#allocation10 + $0xc] sm:$0xff]
    %v2444 = vld [vmem:[#allocation10 + $0x14] sm:$0xf]
    %v2445 = vld [vmem:[#allocation10 + $0x18] sm:$0xff]
    %v2446 = vld [vmem:[#allocation10 + $0x20] sm:$0xf]
    %v2447 = vld [vmem:[#allocation10 + $0x24] sm:$0xff]
    %v2448 = vld [vmem:[#allocation10 + $0x2c] sm:$0xf]
    %v2449 = vld [vmem:[#allocation10 + $0x30] sm:$0xff]
    %v2450 = vld [vmem:[#allocation10 + $0x38] sm:$0xf]
    %v2451 = vld [vmem:[#allocation10 + $0x3c] sm:$0xff]
    %v2452 = vld [vmem:[#allocation10 + $0x44] sm:$0xf]
    %v2453 = vld [vmem:[#allocation10 + $0x48] sm:$0xff]
    %v2454 = vld [vmem:[#allocation10 + $0x50] sm:$0xf]
    %v2455 = vld [vmem:[#allocation10 + $0x54] sm:$0xff]
    %v2456 = vld [vmem:[#allocation10 + $0x5c] sm:$0xf]
    %v2457 = vld [vmem:[#allocation10 + $0x60] sm:$0xff]
    %v2458 = vld [vmem:[#allocation10 + $0x68] sm:$0xf]
    %v2459 = vld [vmem:[#allocation10 + $0x6c] sm:$0xff]
    %v2460 = vld [vmem:[#allocation10 + $0x74] sm:$0xf]
    %v2461 = vld [vmem:[#allocation10 + $0x78] sm:$0xff]
    %v2462 = vld [vmem:[#allocation10 + $0x80] sm:$0xf]
    %v2463 = vld [vmem:[#allocation10 + $0x84] sm:$0xff]
    %v2464 = vld [vmem:[#allocation10 + $0x8c] sm:$0xf]
    %v2465 = vld [vmem:[#allocation10 + $0x90] sm:$0xff]
    %v2466 = vld [vmem:[#allocation10 + $0x98] sm:$0xf]
    %v2467 = vld [vmem:[#allocation10 + $0x9c] sm:$0xff]
    %v2468 = vld [vmem:[#allocation10 + $0xa4] sm:$0xf]
    %v2469 = vld [vmem:[#allocation10 + $0xa8] sm:$0xff]
    %v2470 = vld [vmem:[#allocation10 + $0xb0] sm:$0xf]
    %v2471 = vld [vmem:[#allocation10 + $0xb4] sm:$0xff]
    %v2472 = vld [vmem:[#allocation10 + $0xbc] sm:$0xf]
    %v2473 = vld [vmem:[#allocation10 + $0xc0] sm:$0xff]
    %v2474 = vld [vmem:[#allocation10 + $0xc8] sm:$0xf]
    %v2475 = vld [vmem:[#allocation10 + $0xcc] sm:$0xff]
    %v2476 = vld [vmem:[#allocation10 + $0xd4] sm:$0xf]
    %v2477 = vld [vmem:[#allocation10 + $0xd8] sm:$0xff]
    %v2478 = vld [vmem:[#allocation10 + $0xe0] sm:$0xf]
    %v2479 = vld [vmem:[#allocation10 + $0xe4] sm:$0xff]
    %v2480 = vld [vmem:[#allocation10 + $0xec] sm:$0xf]
    %v2481 = vld [vmem:[#allocation10 + $0xf0] sm:$0xff]
    %v2482 = vld [vmem:[#allocation10 + $0xf8] sm:$0xf]
    %v2483 = vld [vmem:[#allocation10 + $0xfc] sm:$0xff]
    %v2484 = vld [vmem:[#allocation10 + $0x104] sm:$0xf]
    %v2485 = vld [vmem:[#allocation10 + $0x108] sm:$0xff]
    %v2486 = vld [vmem:[#allocation10 + $0x110] sm:$0xf]
    %v2487 = vld [vmem:[#allocation10 + $0x114] sm:$0xff]
    %v2488 = vld [vmem:[#allocation10 + $0x11c] sm:$0xf]
    %v2489 = vld [vmem:[#allocation10 + $0x120] sm:$0xff]
    %v2490 = vld [vmem:[#allocation10 + $0x128] sm:$0xf]
    %v2491 = vld [vmem:[#allocation10 + $0x12c] sm:$0xff]
    %v2492 = vld [vmem:[#allocation10 + $0x134] sm:$0xf]
    %v2493 = vld [vmem:[#allocation10 + $0x138] sm:$0xff]
    %v2494 = vld [vmem:[#allocation10 + $0x140] sm:$0xf]
    %v2495 = vld [vmem:[#allocation10 + $0x144] sm:$0xff]
    %v2496 = vld [vmem:[#allocation10 + $0x14c] sm:$0xf]
    %v2497 = vld [vmem:[#allocation10 + $0x150] sm:$0xff]
    %v2498 = vld [vmem:[#allocation10 + $0x158] sm:$0xf]
    %v2499 = vld [vmem:[#allocation10 + $0x15c] sm:$0xff]
    %v2500 = vld [vmem:[#allocation10 + $0x164] sm:$0xf]
    %v2501 = vld [vmem:[#allocation10 + $0x168] sm:$0xff]
    %v2502 = vld [vmem:[#allocation10 + $0x170] sm:$0xf]
    %v2503 = vld [vmem:[#allocation10 + $0x174] sm:$0xff]
    %v2504 = vld [vmem:[#allocation10 + $0x17c] sm:$0xf]
    %v2505 = vld [vmem:[#allocation10 + $0x180] sm:$0xff]
    %v2506 = vld [vmem:[#allocation10 + $0x188] sm:$0xf]
    %v2507 = vld [vmem:[#allocation10 + $0x18c] sm:$0xff]
    %v2508 = vld [vmem:[#allocation10 + $0x194] sm:$0xf]
    %v2509 = vld [vmem:[#allocation10 + $0x198] sm:$0xff]
    %v2510 = vld [vmem:[#allocation10 + $0x1a0] sm:$0xf]
    %v2511 = vld [vmem:[#allocation10 + $0x1a4] sm:$0xff]
    %v2512 = vld [vmem:[#allocation10 + $0x1ac] sm:$0xf]
    %v2513 = vld [vmem:[#allocation10 + $0x1b0] sm:$0xff]
    %v2514 = vld [vmem:[#allocation10 + $0x1b8] sm:$0xf]
    %v2515 = vld [vmem:[#allocation10 + $0x1bc] sm:$0xff]
    %v2516 = vld [vmem:[#allocation10 + $0x1c4] sm:$0xf]
    %v2517 = vld [vmem:[#allocation10 + $0x1c8] sm:$0xff]
    %v2518 = vld [vmem:[#allocation10 + $0x1d0] sm:$0xf]
    %v2519 = vld [vmem:[#allocation10 + $0x1d4] sm:$0xff]
    %v2520 = vld [vmem:[#allocation10 + $0x1dc] sm:$0xf]
    %v2521 = vld [vmem:[#allocation10 + $0x1e0] sm:$0xff]
    %v2522 = vld [vmem:[#allocation10 + $0x1e8] sm:$0xf]
    %v2523 = vld [vmem:[#allocation10 + $0x1ec] sm:$0xff]
    %v2524 = vld [vmem:[#allocation10 + $0x1f4] sm:$0xf]
    %v2525 = vld [vmem:[#allocation10 + $0x1f8] sm:$0xff]
    %v2526 = vld [vmem:[#allocation10 + $0x200] sm:$0xf]
    %v2527 = vld [vmem:[#allocation10 + $0x204] sm:$0xff]
    %v2528 = vld [vmem:[#allocation10 + $0x20c] sm:$0xf]
    %v2529 = vld [vmem:[#allocation10 + $0x210] sm:$0xff]
    %v2530 = vld [vmem:[#allocation10 + $0x218] sm:$0xf]
    %v2531 = vld [vmem:[#allocation10 + $0x21c] sm:$0xff]
    %v2532 = vld [vmem:[#allocation10 + $0x224] sm:$0xf]
    %v2533 = vld [vmem:[#allocation10 + $0x228] sm:$0xff]
    %v2534 = vld [vmem:[#allocation10 + $0x230] sm:$0xf]
    %v2535 = vld [vmem:[#allocation10 + $0x234] sm:$0xff]
    %v2536 = vld [vmem:[#allocation10 + $0x23c] sm:$0xf]
    %v2537 = vld [vmem:[#allocation10 + $0x240] sm:$0xff]
    %v2538 = vld [vmem:[#allocation10 + $0x248] sm:$0xf]
    %v2539 = vld [vmem:[#allocation10 + $0x24c] sm:$0xff]
    %v2540 = vld [vmem:[#allocation10 + $0x254] sm:$0xf]
    %v2541 = vld [vmem:[#allocation10 + $0x258] sm:$0xff]
    %v2542 = vld [vmem:[#allocation10 + $0x260] sm:$0xf]
    %v2543 = vld [vmem:[#allocation10 + $0x264] sm:$0xff]
    %v2544 = vld [vmem:[#allocation10 + $0x26c] sm:$0xf]
    %v2545 = vld [vmem:[#allocation10 + $0x270] sm:$0xff]
    %v2546 = vld [vmem:[#allocation10 + $0x278] sm:$0xf]
    %v2547 = vld [vmem:[#allocation10 + $0x27c] sm:$0xff]
    %v2548 = vld [vmem:[#allocation10 + $0x284] sm:$0xf]
    %v2549 = vld [vmem:[#allocation10 + $0x288] sm:$0xff]
    %v2550 = vld [vmem:[#allocation10 + $0x290] sm:$0xf]
    %v2551 = vld [vmem:[#allocation10 + $0x294] sm:$0xff]
    %v2552 = vld [vmem:[#allocation10 + $0x29c] sm:$0xf]
    %v2553 = vld [vmem:[#allocation10 + $0x2a0] sm:$0xff]
    %v2554 = vld [vmem:[#allocation10 + $0x2a8] sm:$0xf]
    %v2555 = vld [vmem:[#allocation10 + $0x2ac] sm:$0xff]
    %v2556 = vld [vmem:[#allocation10 + $0x2b4] sm:$0xf]
    %v2557 = vld [vmem:[#allocation10 + $0x2b8] sm:$0xff]
    %v2558 = vld [vmem:[#allocation10 + $0x2c0] sm:$0xf]
    %v2559 = vld [vmem:[#allocation10 + $0x2c4] sm:$0xff]
    %v2560 = vld [vmem:[#allocation10 + $0x2cc] sm:$0xf]
    %v2561 = vld [vmem:[#allocation10 + $0x2d0] sm:$0xff]
    %v2562 = vld [vmem:[#allocation10 + $0x2d8] sm:$0xf]
    %v2563 = vld [vmem:[#allocation10 + $0x2dc] sm:$0xff]
    %v2564 = vld [vmem:[#allocation10 + $0x2e4] sm:$0xf]
    %v2565 = vld [vmem:[#allocation10 + $0x2e8] sm:$0xff]
    %v2566 = vld [vmem:[#allocation10 + $0x2f0] sm:$0xf]
    %v2567 = vld [vmem:[#allocation10 + $0x2f4] sm:$0xff]
    %v2568 = vld [vmem:[#allocation10 + $0x2fc] sm:$0xf]
    %v2569 = vld [vmem:[#allocation10 + $0x300] sm:$0xff]
    %v2570 = vld [vmem:[#allocation10 + $0x308] sm:$0xf]
    %v2571 = vld [vmem:[#allocation10 + $0x30c] sm:$0xff]
    %v2572 = vld [vmem:[#allocation10 + $0x314] sm:$0xf]
    %v2573 = vld [vmem:[#allocation10 + $0x318] sm:$0xff]
    %v2574 = vld [vmem:[#allocation10 + $0x320] sm:$0xf]
    %v2575 = vld [vmem:[#allocation10 + $0x324] sm:$0xff]
    %v2576 = vld [vmem:[#allocation10 + $0x32c] sm:$0xf]
    %v2577 = vld [vmem:[#allocation10 + $0x330] sm:$0xff]
    %v2578 = vld [vmem:[#allocation10 + $0x338] sm:$0xf]
    %v2579 = vld [vmem:[#allocation10 + $0x33c] sm:$0xff]
    %v2580 = vld [vmem:[#allocation10 + $0x344] sm:$0xf]
    %v2581 = vld [vmem:[#allocation10 + $0x348] sm:$0xff]
    %v2582 = vld [vmem:[#allocation10 + $0x350] sm:$0xf]
    %v2583 = vld [vmem:[#allocation10 + $0x354] sm:$0xff]
    %v2584 = vld [vmem:[#allocation10 + $0x35c] sm:$0xf]
    %v2585 = vld [vmem:[#allocation10 + $0x360] sm:$0xff]
    %v2586 = vld [vmem:[#allocation10 + $0x368] sm:$0xf]
    %v2587 = vld [vmem:[#allocation10 + $0x36c] sm:$0xff]
    %v2588 = vld [vmem:[#allocation10 + $0x374] sm:$0xf]
    %v2589 = vld [vmem:[#allocation10 + $0x378] sm:$0xff]
    %v2590 = vld [vmem:[#allocation10 + $0x380] sm:$0xf]
    %v2591 = vld [vmem:[#allocation10 + $0x384] sm:$0xff]
    %v2592 = vld [vmem:[#allocation10 + $0x38c] sm:$0xf]
    %v2593 = vld [vmem:[#allocation10 + $0x390] sm:$0xff]
    %v2594 = vld [vmem:[#allocation10 + $0x398] sm:$0xf]
    %v2595 = vld [vmem:[#allocation10 + $0x39c] sm:$0xff]
    %v2596 = vld [vmem:[#allocation10 + $0x3a4] sm:$0xf]
    %v2597 = vld [vmem:[#allocation10 + $0x3a8] sm:$0xff]
    %v2598 = vld [vmem:[#allocation10 + $0x3b0] sm:$0xf]
    %v2599 = vld [vmem:[#allocation10 + $0x3b4] sm:$0xff]
    %v2600 = vld [vmem:[#allocation10 + $0x3bc] sm:$0xf]
    %v2601 = vld [vmem:[#allocation10 + $0x3c0] sm:$0xff]
    %v2602 = vld [vmem:[#allocation10 + $0x3c8] sm:$0xf]
    %v2603 = vld [vmem:[#allocation10 + $0x3cc] sm:$0xff]
    %v2604 = vld [vmem:[#allocation10 + $0x3d4] sm:$0xf]
    %v2605 = vld [vmem:[#allocation10 + $0x3d8] sm:$0xff]
    %v2606 = vld [vmem:[#allocation10 + $0x3e0] sm:$0xf]
    %v2607 = vld [vmem:[#allocation10 + $0x3e4] sm:$0xff]
    %v2608 = vld [vmem:[#allocation10 + $0x3ec] sm:$0xf]
    %v2609 = vld [vmem:[#allocation10 + $0x3f0] sm:$0xff]
    %v2610 = vld [vmem:[#allocation10 + $0x3f8] sm:$0xf]
    %v2611 = vld [vmem:[#allocation10 + $0x3fc] sm:$0xff]
    %v2612 = vld [vmem:[#allocation10 + $0x404] sm:$0xf]
    %v2613 = vld [vmem:[#allocation10 + $0x408] sm:$0xff]
    %v2614 = vld [vmem:[#allocation10 + $0x410] sm:$0xf]
    %v2615 = vld [vmem:[#allocation10 + $0x414] sm:$0xff]
    %v2616 = vld [vmem:[#allocation10 + $0x41c] sm:$0xf]
    %v2617 = vld [vmem:[#allocation10 + $0x420] sm:$0xff]
    %v2618 = vld [vmem:[#allocation10 + $0x428] sm:$0xf]
    %v2619 = vld [vmem:[#allocation10 + $0x42c] sm:$0xff]
    %v2620 = vld [vmem:[#allocation10 + $0x434] sm:$0xf]
    %v2621 = vld [vmem:[#allocation10 + $0x438] sm:$0xff]
    %v2622 = vld [vmem:[#allocation10 + $0x440] sm:$0xf]
    %v2623 = vld [vmem:[#allocation10 + $0x444] sm:$0xff]
    %v2624 = vld [vmem:[#allocation10 + $0x44c] sm:$0xf]
    %v2625 = vld [vmem:[#allocation10 + $0x450] sm:$0xff]
    %v2626 = vld [vmem:[#allocation10 + $0x458] sm:$0xf]
    %v2627 = vld [vmem:[#allocation10 + $0x45c] sm:$0xff]
    %v2628 = vld [vmem:[#allocation10 + $0x464] sm:$0xf]
    %v2629 = vld [vmem:[#allocation10 + $0x468] sm:$0xff]
    %v2630 = vld [vmem:[#allocation10 + $0x470] sm:$0xf]
    %v2631 = vld [vmem:[#allocation10 + $0x474] sm:$0xff]
    %v2632 = vld [vmem:[#allocation10 + $0x47c] sm:$0xf]
    %v2633 = vld [vmem:[#allocation10 + $0x480] sm:$0xff]
    %v2634 = vld [vmem:[#allocation10 + $0x488] sm:$0xf]
    %v2635 = vld [vmem:[#allocation10 + $0x48c] sm:$0xff]
    %v2636 = vld [vmem:[#allocation10 + $0x494] sm:$0xf]
    %v2637 = vld [vmem:[#allocation10 + $0x498] sm:$0xff]
    %v2638 = vld [vmem:[#allocation10 + $0x4a0] sm:$0xf]
    %v2639 = vld [vmem:[#allocation10 + $0x4a4] sm:$0xff]
    %v2640 = vld [vmem:[#allocation10 + $0x4ac] sm:$0xf]
    %v2641 = vld [vmem:[#allocation10 + $0x4b0] sm:$0xff]
    %v2642 = vld [vmem:[#allocation10 + $0x4b8] sm:$0xf]
    %v2643 = vld [vmem:[#allocation10 + $0x4bc] sm:$0xff]
    %v2644 = vld [vmem:[#allocation10 + $0x4c4] sm:$0xf]
    %v2645 = vld [vmem:[#allocation10 + $0x4c8] sm:$0xff]
    %v2646 = vld [vmem:[#allocation10 + $0x4d0] sm:$0xf]
    %v2647 = vld [vmem:[#allocation10 + $0x4d4] sm:$0xff]
    %v2648 = vld [vmem:[#allocation10 + $0x4dc] sm:$0xf]
    %v2649 = vld [vmem:[#allocation10 + $0x4e0] sm:$0xff]
    %v2650 = vld [vmem:[#allocation10 + $0x4e8] sm:$0xf]
    %v2651 = vld [vmem:[#allocation10 + $0x4ec] sm:$0xff]
    %v2652 = vld [vmem:[#allocation10 + $0x4f4] sm:$0xf]
    %v2653 = vld [vmem:[#allocation10 + $0x4f8] sm:$0xff]
    %v2654 = vld [vmem:[#allocation10 + $0x500] sm:$0xf]
    %v2655 = vld [vmem:[#allocation10 + $0x504] sm:$0xff]
    %v2656 = vld [vmem:[#allocation10 + $0x50c] sm:$0xf]
    %v2657 = vld [vmem:[#allocation10 + $0x510] sm:$0xff]
    %v2658 = vld [vmem:[#allocation10 + $0x518] sm:$0xf]
    %v2659 = vld [vmem:[#allocation10 + $0x51c] sm:$0xff]
    %v2660 = vld [vmem:[#allocation10 + $0x524] sm:$0xf]
    %v2661 = vld [vmem:[#allocation10 + $0x528] sm:$0xff]
    %v2662 = vld [vmem:[#allocation10 + $0x530] sm:$0xf]
    %v2663 = vld [vmem:[#allocation10 + $0x534] sm:$0xff]
    %v2664 = vld [vmem:[#allocation10 + $0x53c] sm:$0xf]
    %v2665 = vld [vmem:[#allocation10 + $0x540] sm:$0xff]
    %v2666 = vld [vmem:[#allocation10 + $0x548] sm:$0xf]
    %v2667 = vld [vmem:[#allocation10 + $0x54c] sm:$0xff]
    %v2668 = vld [vmem:[#allocation10 + $0x554] sm:$0xf]
    %v2669 = vld [vmem:[#allocation10 + $0x558] sm:$0xff]
    %v2670 = vld [vmem:[#allocation10 + $0x560] sm:$0xf]
    %v2671 = vld [vmem:[#allocation10 + $0x564] sm:$0xff]
    %v2672 = vld [vmem:[#allocation10 + $0x56c] sm:$0xf]
    %v2673 = vld [vmem:[#allocation10 + $0x570] sm:$0xff]
    %v2674 = vld [vmem:[#allocation10 + $0x578] sm:$0xf]
    %v2675 = vld [vmem:[#allocation10 + $0x57c] sm:$0xff]
    %v2676 = vld [vmem:[#allocation10 + $0x584] sm:$0xf]
    %v2677 = vld [vmem:[#allocation10 + $0x588] sm:$0xff]
    %v2678 = vld [vmem:[#allocation10 + $0x590] sm:$0xf]
    %v2679 = vld [vmem:[#allocation10 + $0x594] sm:$0xff]
    %v2680 = vld [vmem:[#allocation10 + $0x59c] sm:$0xf]
    %v2681 = vld [vmem:[#allocation10 + $0x5a0] sm:$0xff]
    %v2682 = vld [vmem:[#allocation10 + $0x5a8] sm:$0xf]
    %v2683 = vld [vmem:[#allocation10 + $0x5ac] sm:$0xff]
    %v2684 = vld [vmem:[#allocation10 + $0x5b4] sm:$0xf]
    %v2685 = vld [vmem:[#allocation10 + $0x5b8] sm:$0xff]
    %v2686 = vld [vmem:[#allocation10 + $0x5c0] sm:$0xf]
    %v2687 = vld [vmem:[#allocation10 + $0x5c4] sm:$0xff]
    %v2688 = vld [vmem:[#allocation10 + $0x5cc] sm:$0xf]
    %v2689 = vld [vmem:[#allocation10 + $0x5d0] sm:$0xff]
    %v2690 = vld [vmem:[#allocation10 + $0x5d8] sm:$0xf]
    %v2691 = vld [vmem:[#allocation10 + $0x5dc] sm:$0xff]
    %v2692 = vld [vmem:[#allocation10 + $0x5e4] sm:$0xf]
    %v2693 = vld [vmem:[#allocation10 + $0x5e8] sm:$0xff]
    %v2694 = vld [vmem:[#allocation10 + $0x5f0] sm:$0xf]
    %v2695 = vld [vmem:[#allocation10 + $0x5f4] sm:$0xff]
    %v2696 = vld [vmem:[#allocation10 + $0x5fc] sm:$0xf]
    %v2697 = vld [vmem:[#allocation10 + $0x600] sm:$0xff]
    %v2698 = vld [vmem:[#allocation10 + $0x608] sm:$0xf]
    %v2699 = vld [vmem:[#allocation10 + $0x60c] sm:$0xff]
    %v2700 = vld [vmem:[#allocation10 + $0x614] sm:$0xf]
    %v2701 = vld [vmem:[#allocation10 + $0x618] sm:$0xff]
    %v2702 = vld [vmem:[#allocation10 + $0x620] sm:$0xf]
    %v2703 = vld [vmem:[#allocation10 + $0x624] sm:$0xff]
    %v2704 = vld [vmem:[#allocation10 + $0x62c] sm:$0xf]
    %v2705 = vld [vmem:[#allocation10 + $0x630] sm:$0xff]
    %v2706 = vld [vmem:[#allocation10 + $0x638] sm:$0xf]
    %v2707 = vld [vmem:[#allocation10 + $0x63c] sm:$0xff]
    %v2708 = vld [vmem:[#allocation10 + $0x644] sm:$0xf]
    %v2709 = vld [vmem:[#allocation10 + $0x648] sm:$0xff]
    %v2710 = vld [vmem:[#allocation10 + $0x650] sm:$0xf]
    %v2711 = vld [vmem:[#allocation10 + $0x654] sm:$0xff]
    %v2712 = vld [vmem:[#allocation10 + $0x65c] sm:$0xf]
    %v2713 = vld [vmem:[#allocation10 + $0x660] sm:$0xff]
    %v2714 = vld [vmem:[#allocation10 + $0x668] sm:$0xf]
    %v2715 = vld [vmem:[#allocation10 + $0x66c] sm:$0xff]
    %v2716 = vld [vmem:[#allocation10 + $0x674] sm:$0xf]
    %v2717 = vld [vmem:[#allocation10 + $0x678] sm:$0xff]
    %v2718 = vld [vmem:[#allocation10 + $0x680] sm:$0xf]
    %v2719 = vld [vmem:[#allocation10 + $0x684] sm:$0xff]
    %v2720 = vld [vmem:[#allocation10 + $0x68c] sm:$0xf]
    %v2721 = vld [vmem:[#allocation10 + $0x690] sm:$0xff]
    %v2722 = vld [vmem:[#allocation10 + $0x698] sm:$0xf]
    %v2723 = vld [vmem:[#allocation10 + $0x69c] sm:$0xff]
    %v2724 = vld [vmem:[#allocation10 + $0x6a4] sm:$0xf]
    %v2725 = vld [vmem:[#allocation10 + $0x6a8] sm:$0xff]
    %v2726 = vld [vmem:[#allocation10 + $0x6b0] sm:$0xf]
    %v2727 = vld [vmem:[#allocation10 + $0x6b4] sm:$0xff]
    %v2728 = vld [vmem:[#allocation10 + $0x6bc] sm:$0xf]
    %v2729 = vld [vmem:[#allocation10 + $0x6c0] sm:$0xff]
    %v2730 = vld [vmem:[#allocation10 + $0x6c8] sm:$0xf]
    %v2731 = vld [vmem:[#allocation10 + $0x6cc] sm:$0xff]
    %v2732 = vld [vmem:[#allocation10 + $0x6d4] sm:$0xf]
    %v2733 = vld [vmem:[#allocation10 + $0x6d8] sm:$0xff]
    %v2734 = vld [vmem:[#allocation10 + $0x6e0] sm:$0xf]
    %v2735 = vld [vmem:[#allocation10 + $0x6e4] sm:$0xff]
    %v2736 = vld [vmem:[#allocation10 + $0x6ec] sm:$0xf]
    %v2737 = vld [vmem:[#allocation10 + $0x6f0] sm:$0xff]
    %v2738 = vld [vmem:[#allocation10 + $0x6f8] sm:$0xf]
    %v2739 = vld [vmem:[#allocation10 + $0x6fc] sm:$0xff]
    %v2740 = vld [vmem:[#allocation10 + $0x704] sm:$0xf]
    %v2741 = vld [vmem:[#allocation10 + $0x708] sm:$0xff]
    %v2742 = vld [vmem:[#allocation10 + $0x710] sm:$0xf]
    %v2743 = vld [vmem:[#allocation10 + $0x714] sm:$0xff]
    %v2744 = vld [vmem:[#allocation10 + $0x71c] sm:$0xf]
    %v2745 = vld [vmem:[#allocation10 + $0x720] sm:$0xff]
    %v2746 = vld [vmem:[#allocation10 + $0x728] sm:$0xf]
    %v2747 = vld [vmem:[#allocation10 + $0x72c] sm:$0xff]
    %v2748 = vld [vmem:[#allocation10 + $0x734] sm:$0xf]
    %v2749 = vld [vmem:[#allocation10 + $0x738] sm:$0xff]
    %v2750 = vld [vmem:[#allocation10 + $0x740] sm:$0xf]
    %v2751 = vld [vmem:[#allocation10 + $0x744] sm:$0xff]
    %v2752 = vld [vmem:[#allocation10 + $0x74c] sm:$0xf]
    %v2753 = vld [vmem:[#allocation10 + $0x750] sm:$0xff]
    %v2754 = vld [vmem:[#allocation10 + $0x758] sm:$0xf]
    %v2755 = vld [vmem:[#allocation10 + $0x75c] sm:$0xff]
    %v2756 = vld [vmem:[#allocation10 + $0x764] sm:$0xf]
    %v2757 = vld [vmem:[#allocation10 + $0x768] sm:$0xff]
    %v2758 = vld [vmem:[#allocation10 + $0x770] sm:$0xf]
    %v2759 = vld [vmem:[#allocation10 + $0x774] sm:$0xff]
    %v2760 = vld [vmem:[#allocation10 + $0x77c] sm:$0xf]
    %v2761 = vld [vmem:[#allocation10 + $0x780] sm:$0xff]
    %v2762 = vld [vmem:[#allocation10 + $0x788] sm:$0xf]
    %v2763 = vld [vmem:[#allocation10 + $0x78c] sm:$0xff]
    %v2764 = vld [vmem:[#allocation10 + $0x794] sm:$0xf]
    %v2765 = vld [vmem:[#allocation10 + $0x798] sm:$0xff]
    %v2766 = vld [vmem:[#allocation10 + $0x7a0] sm:$0xf]
    %v2767 = vld [vmem:[#allocation10 + $0x7a4] sm:$0xff]
    %v2768 = vld [vmem:[#allocation10 + $0x7ac] sm:$0xf]
    %v2769 = vld [vmem:[#allocation10 + $0x7b0] sm:$0xff]
    %v2770 = vld [vmem:[#allocation10 + $0x7b8] sm:$0xf]
    %v2771 = vld [vmem:[#allocation10 + $0x7bc] sm:$0xff]
    %v2772 = vld [vmem:[#allocation10 + $0x7c4] sm:$0xf]
    %v2773 = vld [vmem:[#allocation10 + $0x7c8] sm:$0xff]
    %v2774 = vld [vmem:[#allocation10 + $0x7d0] sm:$0xf]
    %v2775 = vld [vmem:[#allocation10 + $0x7d4] sm:$0xff]
    %v2776 = vld [vmem:[#allocation10 + $0x7dc] sm:$0xf]
    %v2777 = vld [vmem:[#allocation10 + $0x7e0] sm:$0xff]
    %v2778 = vld [vmem:[#allocation10 + $0x7e8] sm:$0xf]
    %v2779 = vld [vmem:[#allocation10 + $0x7ec] sm:$0xff]
    %v2780 = vld [vmem:[#allocation10 + $0x7f4] sm:$0xf]
    %v2781 = vld [vmem:[#allocation10 + $0x7f8] sm:$0xff]
    %v2782 = vld [vmem:[#allocation10 + $0x800] sm:$0xf]
    %v2783 = vld [vmem:[#allocation10 + $0x804] sm:$0xff]
    %v2784 = vld [vmem:[#allocation10 + $0x80c] sm:$0xf]
    %v2785 = vld [vmem:[#allocation10 + $0x810] sm:$0xff]
    %v2786 = vld [vmem:[#allocation10 + $0x818] sm:$0xf]
    %v2787 = vld [vmem:[#allocation10 + $0x81c] sm:$0xff]
    %v2788 = vld [vmem:[#allocation10 + $0x824] sm:$0xf]
    %v2789 = vld [vmem:[#allocation10 + $0x828] sm:$0xff]
    %v2790 = vld [vmem:[#allocation10 + $0x830] sm:$0xf]
    %v2791 = vld [vmem:[#allocation10 + $0x834] sm:$0xff]
    %v2792 = vld [vmem:[#allocation10 + $0x83c] sm:$0xf]
    %v2793 = vld [vmem:[#allocation10 + $0x840] sm:$0xff]
    %v2794 = vld [vmem:[#allocation10 + $0x848] sm:$0xf]
    %v2795 = vld [vmem:[#allocation10 + $0x84c] sm:$0xff]
    %v2796 = vld [vmem:[#allocation10 + $0x854] sm:$0xf]
    %v2797 = vld [vmem:[#allocation10 + $0x858] sm:$0xff]
    %v2798 = vld [vmem:[#allocation10 + $0x860] sm:$0xf]
    %v2799 = vld [vmem:[#allocation10 + $0x864] sm:$0xff]
    %v2800 = vld [vmem:[#allocation10 + $0x86c] sm:$0xf]
    %v2801 = vld [vmem:[#allocation10 + $0x870] sm:$0xff]
    %v2802 = vld [vmem:[#allocation10 + $0x878] sm:$0xf]
    %v2803 = vld [vmem:[#allocation10 + $0x87c] sm:$0xff]
    %v2804 = vld [vmem:[#allocation10 + $0x884] sm:$0xf]
    %v2805 = vld [vmem:[#allocation10 + $0x888] sm:$0xff]
    %v2806 = vld [vmem:[#allocation10 + $0x890] sm:$0xf]
    %v2807 = vld [vmem:[#allocation10 + $0x894] sm:$0xff]
    %v2808 = vld [vmem:[#allocation10 + $0x89c] sm:$0xf]
    %v2809 = vld [vmem:[#allocation10 + $0x8a0] sm:$0xff]
    %v2810 = vld [vmem:[#allocation10 + $0x8a8] sm:$0xf]
    %v2811 = vld [vmem:[#allocation10 + $0x8ac] sm:$0xff]
    %v2812 = vld [vmem:[#allocation10 + $0x8b4] sm:$0xf]
    %v2813 = vld [vmem:[#allocation10 + $0x8b8] sm:$0xff]
    %v2814 = vld [vmem:[#allocation10 + $0x8c0] sm:$0xf]
    %v2815 = vld [vmem:[#allocation10 + $0x8c4] sm:$0xff]
    %v2816 = vld [vmem:[#allocation10 + $0x8cc] sm:$0xf]
    %v2817 = vld [vmem:[#allocation10 + $0x8d0] sm:$0xff]
    %v2818 = vld [vmem:[#allocation10 + $0x8d8] sm:$0xf]
    %v2819 = vld [vmem:[#allocation10 + $0x8dc] sm:$0xff]
    %v2820 = vld [vmem:[#allocation10 + $0x8e4] sm:$0xf]
    %v2821 = vld [vmem:[#allocation10 + $0x8e8] sm:$0xff]
    %v2822 = vld [vmem:[#allocation10 + $0x8f0] sm:$0xf]
    %v2823 = vld [vmem:[#allocation10 + $0x8f4] sm:$0xff]
    %v2824 = vld [vmem:[#allocation10 + $0x8fc] sm:$0xf]
    %v2825 = vld [vmem:[#allocation12] sm:$0x7]
    %v2827 = vlaneseq
    %v2828 = vshrl.u32 %v2827, 7
    %v2829 = vsub.s32 0, %v2828
    %v2830 = vrot.slane %v2825, %v2829
    %v2831 = vlaneseq
    %v2832 = vshrl.u32 %v2831, 7
    %v2833 = vsub.s32 1, %v2832
    %v2834 = vrot.slane %v2825, %v2833
    %v2835 = vlaneseq
    %v2836 = vshrl.u32 %v2835, 7
    %v2837 = vsub.s32 2, %v2836
    %v2838 = vrot.slane %v2825, %v2837
    %v3226 = vunpack.c.l.b16 %v2441
    %v3227 = vunpack.c.h.b16 %v2441
    %v3228 = vunpack.c.l.b16 %v2442
    %v3229 = vunpack.c.l.b16 %v2443
    %v3230 = vunpack.c.h.b16 %v2443
    %v3231 = vunpack.c.l.b16 %v2444
    %v3232 = vunpack.c.l.b16 %v2445
    %v3233 = vunpack.c.h.b16 %v2445
    %v3234 = vunpack.c.l.b16 %v2446
    %v3235 = vunpack.c.l.b16 %v2447
    %v3236 = vunpack.c.h.b16 %v2447
    %v3237 = vunpack.c.l.b16 %v2448
    %v3238 = vunpack.c.l.b16 %v2449
    %v3239 = vunpack.c.h.b16 %v2449
    %v3240 = vunpack.c.l.b16 %v2450
    %v3241 = vunpack.c.l.b16 %v2451
    %v3242 = vunpack.c.h.b16 %v2451
    %v3243 = vunpack.c.l.b16 %v2452
    %v3244 = vunpack.c.l.b16 %v2453
    %v3245 = vunpack.c.h.b16 %v2453
    %v3246 = vunpack.c.l.b16 %v2454
    %v3247 = vunpack.c.l.b16 %v2455
    %v3248 = vunpack.c.h.b16 %v2455
    %v3249 = vunpack.c.l.b16 %v2456
    %v3250 = vunpack.c.l.b16 %v2457
    %v3251 = vunpack.c.h.b16 %v2457
    %v3252 = vunpack.c.l.b16 %v2458
    %v3253 = vunpack.c.l.b16 %v2459
    %v3254 = vunpack.c.h.b16 %v2459
    %v3255 = vunpack.c.l.b16 %v2460
    %v3256 = vunpack.c.l.b16 %v2461
    %v3257 = vunpack.c.h.b16 %v2461
    %v3258 = vunpack.c.l.b16 %v2462
    %v3259 = vunpack.c.l.b16 %v2463
    %v3260 = vunpack.c.h.b16 %v2463
    %v3261 = vunpack.c.l.b16 %v2464
    %v3262 = vunpack.c.l.b16 %v2465
    %v3263 = vunpack.c.h.b16 %v2465
    %v3264 = vunpack.c.l.b16 %v2466
    %v3265 = vunpack.c.l.b16 %v2467
    %v3266 = vunpack.c.h.b16 %v2467
    %v3267 = vunpack.c.l.b16 %v2468
    %v3268 = vunpack.c.l.b16 %v2469
    %v3269 = vunpack.c.h.b16 %v2469
    %v3270 = vunpack.c.l.b16 %v2470
    %v3271 = vunpack.c.l.b16 %v2471
    %v3272 = vunpack.c.h.b16 %v2471
    %v3273 = vunpack.c.l.b16 %v2472
    %v3274 = vunpack.c.l.b16 %v2473
    %v3275 = vunpack.c.h.b16 %v2473
    %v3276 = vunpack.c.l.b16 %v2474
    %v3277 = vunpack.c.l.b16 %v2475
    %v3278 = vunpack.c.h.b16 %v2475
    %v3279 = vunpack.c.l.b16 %v2476
    %v3280 = vunpack.c.l.b16 %v2477
    %v3281 = vunpack.c.h.b16 %v2477
    %v3282 = vunpack.c.l.b16 %v2478
    %v3283 = vunpack.c.l.b16 %v2479
    %v3284 = vunpack.c.h.b16 %v2479
    %v3285 = vunpack.c.l.b16 %v2480
    %v3286 = vunpack.c.l.b16 %v2481
    %v3287 = vunpack.c.h.b16 %v2481
    %v3288 = vunpack.c.l.b16 %v2482
    %v3289 = vunpack.c.l.b16 %v2483
    %v3290 = vunpack.c.h.b16 %v2483
    %v3291 = vunpack.c.l.b16 %v2484
    %v3292 = vunpack.c.l.b16 %v2485
    %v3293 = vunpack.c.h.b16 %v2485
    %v3294 = vunpack.c.l.b16 %v2486
    %v3295 = vunpack.c.l.b16 %v2487
    %v3296 = vunpack.c.h.b16 %v2487
    %v3297 = vunpack.c.l.b16 %v2488
    %v3298 = vunpack.c.l.b16 %v2489
    %v3299 = vunpack.c.h.b16 %v2489
    %v3300 = vunpack.c.l.b16 %v2490
    %v3301 = vunpack.c.l.b16 %v2491
    %v3302 = vunpack.c.h.b16 %v2491
    %v3303 = vunpack.c.l.b16 %v2492
    %v3304 = vunpack.c.l.b16 %v2493
    %v3305 = vunpack.c.h.b16 %v2493
    %v3306 = vunpack.c.l.b16 %v2494
    %v3307 = vunpack.c.l.b16 %v2495
    %v3308 = vunpack.c.h.b16 %v2495
    %v3309 = vunpack.c.l.b16 %v2496
    %v3310 = vunpack.c.l.b16 %v2497
    %v3311 = vunpack.c.h.b16 %v2497
    %v3312 = vunpack.c.l.b16 %v2498
    %v3313 = vunpack.c.l.b16 %v2499
    %v3314 = vunpack.c.h.b16 %v2499
    %v3315 = vunpack.c.l.b16 %v2500
    %v3316 = vunpack.c.l.b16 %v2501
    %v3317 = vunpack.c.h.b16 %v2501
    %v3318 = vunpack.c.l.b16 %v2502
    %v3319 = vunpack.c.l.b16 %v2503
    %v3320 = vunpack.c.h.b16 %v2503
    %v3321 = vunpack.c.l.b16 %v2504
    %v3322 = vunpack.c.l.b16 %v2505
    %v3323 = vunpack.c.h.b16 %v2505
    %v3324 = vunpack.c.l.b16 %v2506
    %v3325 = vunpack.c.l.b16 %v2507
    %v3326 = vunpack.c.h.b16 %v2507
    %v3327 = vunpack.c.l.b16 %v2508
    %v3328 = vunpack.c.l.b16 %v2509
    %v3329 = vunpack.c.h.b16 %v2509
    %v3330 = vunpack.c.l.b16 %v2510
    %v3331 = vunpack.c.l.b16 %v2511
    %v3332 = vunpack.c.h.b16 %v2511
    %v3333 = vunpack.c.l.b16 %v2512
    %v3334 = vunpack.c.l.b16 %v2513
    %v3335 = vunpack.c.h.b16 %v2513
    %v3336 = vunpack.c.l.b16 %v2514
    %v3337 = vunpack.c.l.b16 %v2515
    %v3338 = vunpack.c.h.b16 %v2515
    %v3339 = vunpack.c.l.b16 %v2516
    %v3340 = vunpack.c.l.b16 %v2517
    %v3341 = vunpack.c.h.b16 %v2517
    %v3342 = vunpack.c.l.b16 %v2518
    %v3343 = vunpack.c.l.b16 %v2519
    %v3344 = vunpack.c.h.b16 %v2519
    %v3345 = vunpack.c.l.b16 %v2520
    %v3346 = vunpack.c.l.b16 %v2521
    %v3347 = vunpack.c.h.b16 %v2521
    %v3348 = vunpack.c.l.b16 %v2522
    %v3349 = vunpack.c.l.b16 %v2523
    %v3350 = vunpack.c.h.b16 %v2523
    %v3351 = vunpack.c.l.b16 %v2524
    %v3352 = vunpack.c.l.b16 %v2525
    %v3353 = vunpack.c.h.b16 %v2525
    %v3354 = vunpack.c.l.b16 %v2526
    %v3355 = vunpack.c.l.b16 %v2527
    %v3356 = vunpack.c.h.b16 %v2527
    %v3357 = vunpack.c.l.b16 %v2528
    %v3358 = vunpack.c.l.b16 %v2529
    %v3359 = vunpack.c.h.b16 %v2529
    %v3360 = vunpack.c.l.b16 %v2530
    %v3361 = vunpack.c.l.b16 %v2531
    %v3362 = vunpack.c.h.b16 %v2531
    %v3363 = vunpack.c.l.b16 %v2532
    %v3364 = vunpack.c.l.b16 %v2533
    %v3365 = vunpack.c.h.b16 %v2533
    %v3366 = vunpack.c.l.b16 %v2534
    %v3367 = vunpack.c.l.b16 %v2535
    %v3368 = vunpack.c.h.b16 %v2535
    %v3369 = vunpack.c.l.b16 %v2536
    %v3370 = vunpack.c.l.b16 %v2537
    %v3371 = vunpack.c.h.b16 %v2537
    %v3372 = vunpack.c.l.b16 %v2538
    %v3373 = vunpack.c.l.b16 %v2539
    %v3374 = vunpack.c.h.b16 %v2539
    %v3375 = vunpack.c.l.b16 %v2540
    %v3376 = vunpack.c.l.b16 %v2541
    %v3377 = vunpack.c.h.b16 %v2541
    %v3378 = vunpack.c.l.b16 %v2542
    %v3379 = vunpack.c.l.b16 %v2543
    %v3380 = vunpack.c.h.b16 %v2543
    %v3381 = vunpack.c.l.b16 %v2544
    %v3382 = vunpack.c.l.b16 %v2545
    %v3383 = vunpack.c.h.b16 %v2545
    %v3384 = vunpack.c.l.b16 %v2546
    %v3385 = vunpack.c.l.b16 %v2547
    %v3386 = vunpack.c.h.b16 %v2547
    %v3387 = vunpack.c.l.b16 %v2548
    %v3388 = vunpack.c.l.b16 %v2549
    %v3389 = vunpack.c.h.b16 %v2549
    %v3390 = vunpack.c.l.b16 %v2550
    %v3391 = vunpack.c.l.b16 %v2551
    %v3392 = vunpack.c.h.b16 %v2551
    %v3393 = vunpack.c.l.b16 %v2552
    %v3394 = vunpack.c.l.b16 %v2553
    %v3395 = vunpack.c.h.b16 %v2553
    %v3396 = vunpack.c.l.b16 %v2554
    %v3397 = vunpack.c.l.b16 %v2555
    %v3398 = vunpack.c.h.b16 %v2555
    %v3399 = vunpack.c.l.b16 %v2556
    %v3400 = vunpack.c.l.b16 %v2557
    %v3401 = vunpack.c.h.b16 %v2557
    %v3402 = vunpack.c.l.b16 %v2558
    %v3403 = vunpack.c.l.b16 %v2559
    %v3404 = vunpack.c.h.b16 %v2559
    %v3405 = vunpack.c.l.b16 %v2560
    %v3406 = vunpack.c.l.b16 %v2561
    %v3407 = vunpack.c.h.b16 %v2561
    %v3408 = vunpack.c.l.b16 %v2562
    %v3409 = vunpack.c.l.b16 %v2563
    %v3410 = vunpack.c.h.b16 %v2563
    %v3411 = vunpack.c.l.b16 %v2564
    %v3412 = vunpack.c.l.b16 %v2565
    %v3413 = vunpack.c.h.b16 %v2565
    %v3414 = vunpack.c.l.b16 %v2566
    %v3415 = vunpack.c.l.b16 %v2567
    %v3416 = vunpack.c.h.b16 %v2567
    %v3417 = vunpack.c.l.b16 %v2568
    %v3418 = vunpack.c.l.b16 %v2569
    %v3419 = vunpack.c.h.b16 %v2569
    %v3420 = vunpack.c.l.b16 %v2570
    %v3421 = vunpack.c.l.b16 %v2571
    %v3422 = vunpack.c.h.b16 %v2571
    %v3423 = vunpack.c.l.b16 %v2572
    %v3424 = vunpack.c.l.b16 %v2573
    %v3425 = vunpack.c.h.b16 %v2573
    %v3426 = vunpack.c.l.b16 %v2574
    %v3427 = vunpack.c.l.b16 %v2575
    %v3428 = vunpack.c.h.b16 %v2575
    %v3429 = vunpack.c.l.b16 %v2576
    %v3430 = vunpack.c.l.b16 %v2577
    %v3431 = vunpack.c.h.b16 %v2577
    %v3432 = vunpack.c.l.b16 %v2578
    %v3433 = vunpack.c.l.b16 %v2579
    %v3434 = vunpack.c.h.b16 %v2579
    %v3435 = vunpack.c.l.b16 %v2580
    %v3436 = vunpack.c.l.b16 %v2581
    %v3437 = vunpack.c.h.b16 %v2581
    %v3438 = vunpack.c.l.b16 %v2582
    %v3439 = vunpack.c.l.b16 %v2583
    %v3440 = vunpack.c.h.b16 %v2583
    %v3441 = vunpack.c.l.b16 %v2584
    %v3442 = vunpack.c.l.b16 %v2585
    %v3443 = vunpack.c.h.b16 %v2585
    %v3444 = vunpack.c.l.b16 %v2586
    %v3445 = vunpack.c.l.b16 %v2587
    %v3446 = vunpack.c.h.b16 %v2587
    %v3447 = vunpack.c.l.b16 %v2588
    %v3448 = vunpack.c.l.b16 %v2589
    %v3449 = vunpack.c.h.b16 %v2589
    %v3450 = vunpack.c.l.b16 %v2590
    %v3451 = vunpack.c.l.b16 %v2591
    %v3452 = vunpack.c.h.b16 %v2591
    %v3453 = vunpack.c.l.b16 %v2592
    %v3454 = vunpack.c.l.b16 %v2593
    %v3455 = vunpack.c.h.b16 %v2593
    %v3456 = vunpack.c.l.b16 %v2594
    %v3457 = vunpack.c.l.b16 %v2595
    %v3458 = vunpack.c.h.b16 %v2595
    %v3459 = vunpack.c.l.b16 %v2596
    %v3460 = vunpack.c.l.b16 %v2597
    %v3461 = vunpack.c.h.b16 %v2597
    %v3462 = vunpack.c.l.b16 %v2598
    %v3463 = vunpack.c.l.b16 %v2599
    %v3464 = vunpack.c.h.b16 %v2599
    %v3465 = vunpack.c.l.b16 %v2600
    %v3466 = vunpack.c.l.b16 %v2601
    %v3467 = vunpack.c.h.b16 %v2601
    %v3468 = vunpack.c.l.b16 %v2602
    %v3469 = vunpack.c.l.b16 %v2603
    %v3470 = vunpack.c.h.b16 %v2603
    %v3471 = vunpack.c.l.b16 %v2604
    %v3472 = vunpack.c.l.b16 %v2605
    %v3473 = vunpack.c.h.b16 %v2605
    %v3474 = vunpack.c.l.b16 %v2606
    %v3475 = vunpack.c.l.b16 %v2607
    %v3476 = vunpack.c.h.b16 %v2607
    %v3477 = vunpack.c.l.b16 %v2608
    %v3478 = vunpack.c.l.b16 %v2609
    %v3479 = vunpack.c.h.b16 %v2609
    %v3480 = vunpack.c.l.b16 %v2610
    %v3481 = vunpack.c.l.b16 %v2611
    %v3482 = vunpack.c.h.b16 %v2611
    %v3483 = vunpack.c.l.b16 %v2612
    %v3484 = vunpack.c.l.b16 %v2613
    %v3485 = vunpack.c.h.b16 %v2613
    %v3486 = vunpack.c.l.b16 %v2614
    %v3487 = vunpack.c.l.b16 %v2615
    %v3488 = vunpack.c.h.b16 %v2615
    %v3489 = vunpack.c.l.b16 %v2616
    %v3490 = vunpack.c.l.b16 %v2617
    %v3491 = vunpack.c.h.b16 %v2617
    %v3492 = vunpack.c.l.b16 %v2618
    %v3493 = vunpack.c.l.b16 %v2619
    %v3494 = vunpack.c.h.b16 %v2619
    %v3495 = vunpack.c.l.b16 %v2620
    %v3496 = vunpack.c.l.b16 %v2621
    %v3497 = vunpack.c.h.b16 %v2621
    %v3498 = vunpack.c.l.b16 %v2622
    %v3499 = vunpack.c.l.b16 %v2623
    %v3500 = vunpack.c.h.b16 %v2623
    %v3501 = vunpack.c.l.b16 %v2624
    %v3502 = vunpack.c.l.b16 %v2625
    %v3503 = vunpack.c.h.b16 %v2625
    %v3504 = vunpack.c.l.b16 %v2626
    %v3505 = vunpack.c.l.b16 %v2627
    %v3506 = vunpack.c.h.b16 %v2627
    %v3507 = vunpack.c.l.b16 %v2628
    %v3508 = vunpack.c.l.b16 %v2629
    %v3509 = vunpack.c.h.b16 %v2629
    %v3510 = vunpack.c.l.b16 %v2630
    %v3511 = vunpack.c.l.b16 %v2631
    %v3512 = vunpack.c.h.b16 %v2631
    %v3513 = vunpack.c.l.b16 %v2632
    %v3514 = vunpack.c.l.b16 %v2633
    %v3515 = vunpack.c.h.b16 %v2633
    %v3516 = vunpack.c.l.b16 %v2634
    %v3517 = vunpack.c.l.b16 %v2635
    %v3518 = vunpack.c.h.b16 %v2635
    %v3519 = vunpack.c.l.b16 %v2636
    %v3520 = vunpack.c.l.b16 %v2637
    %v3521 = vunpack.c.h.b16 %v2637
    %v3522 = vunpack.c.l.b16 %v2638
    %v3523 = vunpack.c.l.b16 %v2639
    %v3524 = vunpack.c.h.b16 %v2639
    %v3525 = vunpack.c.l.b16 %v2640
    %v3526 = vunpack.c.l.b16 %v2641
    %v3527 = vunpack.c.h.b16 %v2641
    %v3528 = vunpack.c.l.b16 %v2642
    %v3529 = vunpack.c.l.b16 %v2643
    %v3530 = vunpack.c.h.b16 %v2643
    %v3531 = vunpack.c.l.b16 %v2644
    %v3532 = vunpack.c.l.b16 %v2645
    %v3533 = vunpack.c.h.b16 %v2645
    %v3534 = vunpack.c.l.b16 %v2646
    %v3535 = vunpack.c.l.b16 %v2647
    %v3536 = vunpack.c.h.b16 %v2647
    %v3537 = vunpack.c.l.b16 %v2648
    %v3538 = vunpack.c.l.b16 %v2649
    %v3539 = vunpack.c.h.b16 %v2649
    %v3540 = vunpack.c.l.b16 %v2650
    %v3541 = vunpack.c.l.b16 %v2651
    %v3542 = vunpack.c.h.b16 %v2651
    %v3543 = vunpack.c.l.b16 %v2652
    %v3544 = vunpack.c.l.b16 %v2653
    %v3545 = vunpack.c.h.b16 %v2653
    %v3546 = vunpack.c.l.b16 %v2654
    %v3547 = vunpack.c.l.b16 %v2655
    %v3548 = vunpack.c.h.b16 %v2655
    %v3549 = vunpack.c.l.b16 %v2656
    %v3550 = vunpack.c.l.b16 %v2657
    %v3551 = vunpack.c.h.b16 %v2657
    %v3552 = vunpack.c.l.b16 %v2658
    %v3553 = vunpack.c.l.b16 %v2659
    %v3554 = vunpack.c.h.b16 %v2659
    %v3555 = vunpack.c.l.b16 %v2660
    %v3556 = vunpack.c.l.b16 %v2661
    %v3557 = vunpack.c.h.b16 %v2661
    %v3558 = vunpack.c.l.b16 %v2662
    %v3559 = vunpack.c.l.b16 %v2663
    %v3560 = vunpack.c.h.b16 %v2663
    %v3561 = vunpack.c.l.b16 %v2664
    %v3562 = vunpack.c.l.b16 %v2665
    %v3563 = vunpack.c.h.b16 %v2665
    %v3564 = vunpack.c.l.b16 %v2666
    %v3565 = vunpack.c.l.b16 %v2667
    %v3566 = vunpack.c.h.b16 %v2667
    %v3567 = vunpack.c.l.b16 %v2668
    %v3568 = vunpack.c.l.b16 %v2669
    %v3569 = vunpack.c.h.b16 %v2669
    %v3570 = vunpack.c.l.b16 %v2670
    %v3571 = vunpack.c.l.b16 %v2671
    %v3572 = vunpack.c.h.b16 %v2671
    %v3573 = vunpack.c.l.b16 %v2672
    %v3574 = vunpack.c.l.b16 %v2673
    %v3575 = vunpack.c.h.b16 %v2673
    %v3576 = vunpack.c.l.b16 %v2674
    %v3577 = vunpack.c.l.b16 %v2675
    %v3578 = vunpack.c.h.b16 %v2675
    %v3579 = vunpack.c.l.b16 %v2676
    %v3580 = vunpack.c.l.b16 %v2677
    %v3581 = vunpack.c.h.b16 %v2677
    %v3582 = vunpack.c.l.b16 %v2678
    %v3583 = vunpack.c.l.b16 %v2679
    %v3584 = vunpack.c.h.b16 %v2679
    %v3585 = vunpack.c.l.b16 %v2680
    %v3586 = vunpack.c.l.b16 %v2681
    %v3587 = vunpack.c.h.b16 %v2681
    %v3588 = vunpack.c.l.b16 %v2682
    %v3589 = vunpack.c.l.b16 %v2683
    %v3590 = vunpack.c.h.b16 %v2683
    %v3591 = vunpack.c.l.b16 %v2684
    %v3592 = vunpack.c.l.b16 %v2685
    %v3593 = vunpack.c.h.b16 %v2685
    %v3594 = vunpack.c.l.b16 %v2686
    %v3595 = vunpack.c.l.b16 %v2687
    %v3596 = vunpack.c.h.b16 %v2687
    %v3597 = vunpack.c.l.b16 %v2688
    %v3598 = vunpack.c.l.b16 %v2689
    %v3599 = vunpack.c.h.b16 %v2689
    %v3600 = vunpack.c.l.b16 %v2690
    %v3601 = vunpack.c.l.b16 %v2691
    %v3602 = vunpack.c.h.b16 %v2691
    %v3603 = vunpack.c.l.b16 %v2692
    %v3604 = vunpack.c.l.b16 %v2693
    %v3605 = vunpack.c.h.b16 %v2693
    %v3606 = vunpack.c.l.b16 %v2694
    %v3607 = vunpack.c.l.b16 %v2695
    %v3608 = vunpack.c.h.b16 %v2695
    %v3609 = vunpack.c.l.b16 %v2696
    %v3610 = vunpack.c.l.b16 %v2697
    %v3611 = vunpack.c.h.b16 %v2697
    %v3612 = vunpack.c.l.b16 %v2698
    %v3613 = vunpack.c.l.b16 %v2699
    %v3614 = vunpack.c.h.b16 %v2699
    %v3615 = vunpack.c.l.b16 %v2700
    %v3616 = vunpack.c.l.b16 %v2701
    %v3617 = vunpack.c.h.b16 %v2701
    %v3618 = vunpack.c.l.b16 %v2702
    %v3619 = vunpack.c.l.b16 %v2703
    %v3620 = vunpack.c.h.b16 %v2703
    %v3621 = vunpack.c.l.b16 %v2704
    %v3622 = vunpack.c.l.b16 %v2705
    %v3623 = vunpack.c.h.b16 %v2705
    %v3624 = vunpack.c.l.b16 %v2706
    %v3625 = vunpack.c.l.b16 %v2707
    %v3626 = vunpack.c.h.b16 %v2707
    %v3627 = vunpack.c.l.b16 %v2708
    %v3628 = vunpack.c.l.b16 %v2709
    %v3629 = vunpack.c.h.b16 %v2709
    %v3630 = vunpack.c.l.b16 %v2710
    %v3631 = vunpack.c.l.b16 %v2711
    %v3632 = vunpack.c.h.b16 %v2711
    %v3633 = vunpack.c.l.b16 %v2712
    %v3634 = vunpack.c.l.b16 %v2713
    %v3635 = vunpack.c.h.b16 %v2713
    %v3636 = vunpack.c.l.b16 %v2714
    %v3637 = vunpack.c.l.b16 %v2715
    %v3638 = vunpack.c.h.b16 %v2715
    %v3639 = vunpack.c.l.b16 %v2716
    %v3640 = vunpack.c.l.b16 %v2717
    %v3641 = vunpack.c.h.b16 %v2717
    %v3642 = vunpack.c.l.b16 %v2718
    %v3643 = vunpack.c.l.b16 %v2719
    %v3644 = vunpack.c.h.b16 %v2719
    %v3645 = vunpack.c.l.b16 %v2720
    %v3646 = vunpack.c.l.b16 %v2721
    %v3647 = vunpack.c.h.b16 %v2721
    %v3648 = vunpack.c.l.b16 %v2722
    %v3649 = vunpack.c.l.b16 %v2723
    %v3650 = vunpack.c.h.b16 %v2723
    %v3651 = vunpack.c.l.b16 %v2724
    %v3652 = vunpack.c.l.b16 %v2725
    %v3653 = vunpack.c.h.b16 %v2725
    %v3654 = vunpack.c.l.b16 %v2726
    %v3655 = vunpack.c.l.b16 %v2727
    %v3656 = vunpack.c.h.b16 %v2727
    %v3657 = vunpack.c.l.b16 %v2728
    %v3658 = vunpack.c.l.b16 %v2729
    %v3659 = vunpack.c.h.b16 %v2729
    %v3660 = vunpack.c.l.b16 %v2730
    %v3661 = vunpack.c.l.b16 %v2731
    %v3662 = vunpack.c.h.b16 %v2731
    %v3663 = vunpack.c.l.b16 %v2732
    %v3664 = vunpack.c.l.b16 %v2733
    %v3665 = vunpack.c.h.b16 %v2733
    %v3666 = vunpack.c.l.b16 %v2734
    %v3667 = vunpack.c.l.b16 %v2735
    %v3668 = vunpack.c.h.b16 %v2735
    %v3669 = vunpack.c.l.b16 %v2736
    %v3670 = vunpack.c.l.b16 %v2737
    %v3671 = vunpack.c.h.b16 %v2737
    %v3672 = vunpack.c.l.b16 %v2738
    %v3673 = vunpack.c.l.b16 %v2739
    %v3674 = vunpack.c.h.b16 %v2739
    %v3675 = vunpack.c.l.b16 %v2740
    %v3676 = vunpack.c.l.b16 %v2741
    %v3677 = vunpack.c.h.b16 %v2741
    %v3678 = vunpack.c.l.b16 %v2742
    %v3679 = vunpack.c.l.b16 %v2743
    %v3680 = vunpack.c.h.b16 %v2743
    %v3681 = vunpack.c.l.b16 %v2744
    %v3682 = vunpack.c.l.b16 %v2745
    %v3683 = vunpack.c.h.b16 %v2745
    %v3684 = vunpack.c.l.b16 %v2746
    %v3685 = vunpack.c.l.b16 %v2747
    %v3686 = vunpack.c.h.b16 %v2747
    %v3687 = vunpack.c.l.b16 %v2748
    %v3688 = vunpack.c.l.b16 %v2749
    %v3689 = vunpack.c.h.b16 %v2749
    %v3690 = vunpack.c.l.b16 %v2750
    %v3691 = vunpack.c.l.b16 %v2751
    %v3692 = vunpack.c.h.b16 %v2751
    %v3693 = vunpack.c.l.b16 %v2752
    %v3694 = vunpack.c.l.b16 %v2753
    %v3695 = vunpack.c.h.b16 %v2753
    %v3696 = vunpack.c.l.b16 %v2754
    %v3697 = vunpack.c.l.b16 %v2755
    %v3698 = vunpack.c.h.b16 %v2755
    %v3699 = vunpack.c.l.b16 %v2756
    %v3700 = vunpack.c.l.b16 %v2757
    %v3701 = vunpack.c.h.b16 %v2757
    %v3702 = vunpack.c.l.b16 %v2758
    %v3703 = vunpack.c.l.b16 %v2759
    %v3704 = vunpack.c.h.b16 %v2759
    %v3705 = vunpack.c.l.b16 %v2760
    %v3706 = vunpack.c.l.b16 %v2761
    %v3707 = vunpack.c.h.b16 %v2761
    %v3708 = vunpack.c.l.b16 %v2762
    %v3709 = vunpack.c.l.b16 %v2763
    %v3710 = vunpack.c.h.b16 %v2763
    %v3711 = vunpack.c.l.b16 %v2764
    %v3712 = vunpack.c.l.b16 %v2765
    %v3713 = vunpack.c.h.b16 %v2765
    %v3714 = vunpack.c.l.b16 %v2766
    %v3715 = vunpack.c.l.b16 %v2767
    %v3716 = vunpack.c.h.b16 %v2767
    %v3717 = vunpack.c.l.b16 %v2768
    %v3718 = vunpack.c.l.b16 %v2769
    %v3719 = vunpack.c.h.b16 %v2769
    %v3720 = vunpack.c.l.b16 %v2770
    %v3721 = vunpack.c.l.b16 %v2771
    %v3722 = vunpack.c.h.b16 %v2771
    %v3723 = vunpack.c.l.b16 %v2772
    %v3724 = vunpack.c.l.b16 %v2773
    %v3725 = vunpack.c.h.b16 %v2773
    %v3726 = vunpack.c.l.b16 %v2774
    %v3727 = vunpack.c.l.b16 %v2775
    %v3728 = vunpack.c.h.b16 %v2775
    %v3729 = vunpack.c.l.b16 %v2776
    %v3730 = vunpack.c.l.b16 %v2777
    %v3731 = vunpack.c.h.b16 %v2777
    %v3732 = vunpack.c.l.b16 %v2778
    %v3733 = vunpack.c.l.b16 %v2779
    %v3734 = vunpack.c.h.b16 %v2779
    %v3735 = vunpack.c.l.b16 %v2780
    %v3736 = vunpack.c.l.b16 %v2781
    %v3737 = vunpack.c.h.b16 %v2781
    %v3738 = vunpack.c.l.b16 %v2782
    %v3739 = vunpack.c.l.b16 %v2783
    %v3740 = vunpack.c.h.b16 %v2783
    %v3741 = vunpack.c.l.b16 %v2784
    %v3742 = vunpack.c.l.b16 %v2785
    %v3743 = vunpack.c.h.b16 %v2785
    %v3744 = vunpack.c.l.b16 %v2786
    %v3745 = vunpack.c.l.b16 %v2787
    %v3746 = vunpack.c.h.b16 %v2787
    %v3747 = vunpack.c.l.b16 %v2788
    %v3748 = vunpack.c.l.b16 %v2789
    %v3749 = vunpack.c.h.b16 %v2789
    %v3750 = vunpack.c.l.b16 %v2790
    %v3751 = vunpack.c.l.b16 %v2791
    %v3752 = vunpack.c.h.b16 %v2791
    %v3753 = vunpack.c.l.b16 %v2792
    %v3754 = vunpack.c.l.b16 %v2793
    %v3755 = vunpack.c.h.b16 %v2793
    %v3756 = vunpack.c.l.b16 %v2794
    %v3757 = vunpack.c.l.b16 %v2795
    %v3758 = vunpack.c.h.b16 %v2795
    %v3759 = vunpack.c.l.b16 %v2796
    %v3760 = vunpack.c.l.b16 %v2797
    %v3761 = vunpack.c.h.b16 %v2797
    %v3762 = vunpack.c.l.b16 %v2798
    %v3763 = vunpack.c.l.b16 %v2799
    %v3764 = vunpack.c.h.b16 %v2799
    %v3765 = vunpack.c.l.b16 %v2800
    %v3766 = vunpack.c.l.b16 %v2801
    %v3767 = vunpack.c.h.b16 %v2801
    %v3768 = vunpack.c.l.b16 %v2802
    %v3769 = vunpack.c.l.b16 %v2803
    %v3770 = vunpack.c.h.b16 %v2803
    %v3771 = vunpack.c.l.b16 %v2804
    %v3772 = vunpack.c.l.b16 %v2805
    %v3773 = vunpack.c.h.b16 %v2805
    %v3774 = vunpack.c.l.b16 %v2806
    %v3775 = vunpack.c.l.b16 %v2807
    %v3776 = vunpack.c.h.b16 %v2807
    %v3777 = vunpack.c.l.b16 %v2808
    %v3778 = vunpack.c.l.b16 %v2809
    %v3779 = vunpack.c.h.b16 %v2809
    %v3780 = vunpack.c.l.b16 %v2810
    %v3781 = vunpack.c.l.b16 %v2811
    %v3782 = vunpack.c.h.b16 %v2811
    %v3783 = vunpack.c.l.b16 %v2812
    %v3784 = vunpack.c.l.b16 %v2813
    %v3785 = vunpack.c.h.b16 %v2813
    %v3786 = vunpack.c.l.b16 %v2814
    %v3787 = vunpack.c.l.b16 %v2815
    %v3788 = vunpack.c.h.b16 %v2815
    %v3789 = vunpack.c.l.b16 %v2816
    %v3790 = vunpack.c.l.b16 %v2817
    %v3791 = vunpack.c.h.b16 %v2817
    %v3792 = vunpack.c.l.b16 %v2818
    %v3793 = vunpack.c.l.b16 %v2819
    %v3794 = vunpack.c.h.b16 %v2819
    %v3795 = vunpack.c.l.b16 %v2820
    %v3796 = vunpack.c.l.b16 %v2821
    %v3797 = vunpack.c.h.b16 %v2821
    %v3798 = vunpack.c.l.b16 %v2822
    %v3799 = vunpack.c.l.b16 %v2823
    %v3800 = vunpack.c.h.b16 %v2823
    %v3801 = vunpack.c.l.b16 %v2824
    %v3802 = vpack.c.b16 %v3229, %v3226
    %v3803 = vpack.c.b16 %v3230, %v3227
    %v3804 = vpack.c.b16 %v3231, %v3228
    %v3805 = vpack.c.b16 %v3235, %v3232
    %v3806 = vpack.c.b16 %v3236, %v3233
    %v3807 = vpack.c.b16 %v3237, %v3234
    %v3808 = vpack.c.b16 %v3241, %v3238
    %v3809 = vpack.c.b16 %v3242, %v3239
    %v3810 = vpack.c.b16 %v3243, %v3240
    %v3811 = vpack.c.b16 %v3247, %v3244
    %v3812 = vpack.c.b16 %v3248, %v3245
    %v3813 = vpack.c.b16 %v3249, %v3246
    %v3814 = vpack.c.b16 %v3253, %v3250
    %v3815 = vpack.c.b16 %v3254, %v3251
    %v3816 = vpack.c.b16 %v3255, %v3252
    %v3817 = vpack.c.b16 %v3259, %v3256
    %v3818 = vpack.c.b16 %v3260, %v3257
    %v3819 = vpack.c.b16 %v3261, %v3258
    %v3820 = vpack.c.b16 %v3265, %v3262
    %v3821 = vpack.c.b16 %v3266, %v3263
    %v3822 = vpack.c.b16 %v3267, %v3264
    %v3823 = vpack.c.b16 %v3271, %v3268
    %v3824 = vpack.c.b16 %v3272, %v3269
    %v3825 = vpack.c.b16 %v3273, %v3270
    %v3826 = vpack.c.b16 %v3277, %v3274
    %v3827 = vpack.c.b16 %v3278, %v3275
    %v3828 = vpack.c.b16 %v3279, %v3276
    %v3829 = vpack.c.b16 %v3283, %v3280
    %v3830 = vpack.c.b16 %v3284, %v3281
    %v3831 = vpack.c.b16 %v3285, %v3282
    %v3832 = vpack.c.b16 %v3289, %v3286
    %v3833 = vpack.c.b16 %v3290, %v3287
    %v3834 = vpack.c.b16 %v3291, %v3288
    %v3835 = vpack.c.b16 %v3295, %v3292
    %v3836 = vpack.c.b16 %v3296, %v3293
    %v3837 = vpack.c.b16 %v3297, %v3294
    %v3838 = vpack.c.b16 %v3301, %v3298
    %v3839 = vpack.c.b16 %v3302, %v3299
    %v3840 = vpack.c.b16 %v3303, %v3300
    %v3841 = vpack.c.b16 %v3307, %v3304
    %v3842 = vpack.c.b16 %v3308, %v3305
    %v3843 = vpack.c.b16 %v3309, %v3306
    %v3844 = vpack.c.b16 %v3313, %v3310
    %v3845 = vpack.c.b16 %v3314, %v3311
    %v3846 = vpack.c.b16 %v3315, %v3312
    %v3847 = vpack.c.b16 %v3319, %v3316
    %v3848 = vpack.c.b16 %v3320, %v3317
    %v3849 = vpack.c.b16 %v3321, %v3318
    %v3850 = vpack.c.b16 %v3325, %v3322
    %v3851 = vpack.c.b16 %v3326, %v3323
    %v3852 = vpack.c.b16 %v3327, %v3324
    %v3853 = vpack.c.b16 %v3331, %v3328
    %v3854 = vpack.c.b16 %v3332, %v3329
    %v3855 = vpack.c.b16 %v3333, %v3330
    %v3856 = vpack.c.b16 %v3337, %v3334
    %v3857 = vpack.c.b16 %v3338, %v3335
    %v3858 = vpack.c.b16 %v3339, %v3336
    %v3859 = vpack.c.b16 %v3343, %v3340
    %v3860 = vpack.c.b16 %v3344, %v3341
    %v3861 = vpack.c.b16 %v3345, %v3342
    %v3862 = vpack.c.b16 %v3349, %v3346
    %v3863 = vpack.c.b16 %v3350, %v3347
    %v3864 = vpack.c.b16 %v3351, %v3348
    %v3865 = vpack.c.b16 %v3355, %v3352
    %v3866 = vpack.c.b16 %v3356, %v3353
    %v3867 = vpack.c.b16 %v3357, %v3354
    %v3868 = vpack.c.b16 %v3361, %v3358
    %v3869 = vpack.c.b16 %v3362, %v3359
    %v3870 = vpack.c.b16 %v3363, %v3360
    %v3871 = vpack.c.b16 %v3367, %v3364
    %v3872 = vpack.c.b16 %v3368, %v3365
    %v3873 = vpack.c.b16 %v3369, %v3366
    %v3874 = vpack.c.b16 %v3373, %v3370
    %v3875 = vpack.c.b16 %v3374, %v3371
    %v3876 = vpack.c.b16 %v3375, %v3372
    %v3877 = vpack.c.b16 %v3379, %v3376
    %v3878 = vpack.c.b16 %v3380, %v3377
    %v3879 = vpack.c.b16 %v3381, %v3378
    %v3880 = vpack.c.b16 %v3385, %v3382
    %v3881 = vpack.c.b16 %v3386, %v3383
    %v3882 = vpack.c.b16 %v3387, %v3384
    %v3883 = vpack.c.b16 %v3391, %v3388
    %v3884 = vpack.c.b16 %v3392, %v3389
    %v3885 = vpack.c.b16 %v3393, %v3390
    %v3886 = vpack.c.b16 %v3397, %v3394
    %v3887 = vpack.c.b16 %v3398, %v3395
    %v3888 = vpack.c.b16 %v3399, %v3396
    %v3889 = vpack.c.b16 %v3403, %v3400
    %v3890 = vpack.c.b16 %v3404, %v3401
    %v3891 = vpack.c.b16 %v3405, %v3402
    %v3892 = vpack.c.b16 %v3409, %v3406
    %v3893 = vpack.c.b16 %v3410, %v3407
    %v3894 = vpack.c.b16 %v3411, %v3408
    %v3895 = vpack.c.b16 %v3415, %v3412
    %v3896 = vpack.c.b16 %v3416, %v3413
    %v3897 = vpack.c.b16 %v3417, %v3414
    %v3898 = vpack.c.b16 %v3421, %v3418
    %v3899 = vpack.c.b16 %v3422, %v3419
    %v3900 = vpack.c.b16 %v3423, %v3420
    %v3901 = vpack.c.b16 %v3427, %v3424
    %v3902 = vpack.c.b16 %v3428, %v3425
    %v3903 = vpack.c.b16 %v3429, %v3426
    %v3904 = vpack.c.b16 %v3433, %v3430
    %v3905 = vpack.c.b16 %v3434, %v3431
    %v3906 = vpack.c.b16 %v3435, %v3432
    %v3907 = vpack.c.b16 %v3439, %v3436
    %v3908 = vpack.c.b16 %v3440, %v3437
    %v3909 = vpack.c.b16 %v3441, %v3438
    %v3910 = vpack.c.b16 %v3445, %v3442
    %v3911 = vpack.c.b16 %v3446, %v3443
    %v3912 = vpack.c.b16 %v3447, %v3444
    %v3913 = vpack.c.b16 %v3451, %v3448
    %v3914 = vpack.c.b16 %v3452, %v3449
    %v3915 = vpack.c.b16 %v3453, %v3450
    %v3916 = vpack.c.b16 %v3457, %v3454
    %v3917 = vpack.c.b16 %v3458, %v3455
    %v3918 = vpack.c.b16 %v3459, %v3456
    %v3919 = vpack.c.b16 %v3463, %v3460
    %v3920 = vpack.c.b16 %v3464, %v3461
    %v3921 = vpack.c.b16 %v3465, %v3462
    %v3922 = vpack.c.b16 %v3469, %v3466
    %v3923 = vpack.c.b16 %v3470, %v3467
    %v3924 = vpack.c.b16 %v3471, %v3468
    %v3925 = vpack.c.b16 %v3475, %v3472
    %v3926 = vpack.c.b16 %v3476, %v3473
    %v3927 = vpack.c.b16 %v3477, %v3474
    %v3928 = vpack.c.b16 %v3481, %v3478
    %v3929 = vpack.c.b16 %v3482, %v3479
    %v3930 = vpack.c.b16 %v3483, %v3480
    %v3931 = vpack.c.b16 %v3487, %v3484
    %v3932 = vpack.c.b16 %v3488, %v3485
    %v3933 = vpack.c.b16 %v3489, %v3486
    %v3934 = vpack.c.b16 %v3493, %v3490
    %v3935 = vpack.c.b16 %v3494, %v3491
    %v3936 = vpack.c.b16 %v3495, %v3492
    %v3937 = vpack.c.b16 %v3499, %v3496
    %v3938 = vpack.c.b16 %v3500, %v3497
    %v3939 = vpack.c.b16 %v3501, %v3498
    %v3940 = vpack.c.b16 %v3505, %v3502
    %v3941 = vpack.c.b16 %v3506, %v3503
    %v3942 = vpack.c.b16 %v3507, %v3504
    %v3943 = vpack.c.b16 %v3511, %v3508
    %v3944 = vpack.c.b16 %v3512, %v3509
    %v3945 = vpack.c.b16 %v3513, %v3510
    %v3946 = vpack.c.b16 %v3517, %v3514
    %v3947 = vpack.c.b16 %v3518, %v3515
    %v3948 = vpack.c.b16 %v3519, %v3516
    %v3949 = vpack.c.b16 %v3523, %v3520
    %v3950 = vpack.c.b16 %v3524, %v3521
    %v3951 = vpack.c.b16 %v3525, %v3522
    %v3952 = vpack.c.b16 %v3529, %v3526
    %v3953 = vpack.c.b16 %v3530, %v3527
    %v3954 = vpack.c.b16 %v3531, %v3528
    %v3955 = vpack.c.b16 %v3535, %v3532
    %v3956 = vpack.c.b16 %v3536, %v3533
    %v3957 = vpack.c.b16 %v3537, %v3534
    %v3958 = vpack.c.b16 %v3541, %v3538
    %v3959 = vpack.c.b16 %v3542, %v3539
    %v3960 = vpack.c.b16 %v3543, %v3540
    %v3961 = vpack.c.b16 %v3547, %v3544
    %v3962 = vpack.c.b16 %v3548, %v3545
    %v3963 = vpack.c.b16 %v3549, %v3546
    %v3964 = vpack.c.b16 %v3553, %v3550
    %v3965 = vpack.c.b16 %v3554, %v3551
    %v3966 = vpack.c.b16 %v3555, %v3552
    %v3967 = vpack.c.b16 %v3559, %v3556
    %v3968 = vpack.c.b16 %v3560, %v3557
    %v3969 = vpack.c.b16 %v3561, %v3558
    %v3970 = vpack.c.b16 %v3565, %v3562
    %v3971 = vpack.c.b16 %v3566, %v3563
    %v3972 = vpack.c.b16 %v3567, %v3564
    %v3973 = vpack.c.b16 %v3571, %v3568
    %v3974 = vpack.c.b16 %v3572, %v3569
    %v3975 = vpack.c.b16 %v3573, %v3570
    %v3976 = vpack.c.b16 %v3577, %v3574
    %v3977 = vpack.c.b16 %v3578, %v3575
    %v3978 = vpack.c.b16 %v3579, %v3576
    %v3979 = vpack.c.b16 %v3583, %v3580
    %v3980 = vpack.c.b16 %v3584, %v3581
    %v3981 = vpack.c.b16 %v3585, %v3582
    %v3982 = vpack.c.b16 %v3589, %v3586
    %v3983 = vpack.c.b16 %v3590, %v3587
    %v3984 = vpack.c.b16 %v3591, %v3588
    %v3985 = vpack.c.b16 %v3595, %v3592
    %v3986 = vpack.c.b16 %v3596, %v3593
    %v3987 = vpack.c.b16 %v3597, %v3594
    %v3988 = vpack.c.b16 %v3601, %v3598
    %v3989 = vpack.c.b16 %v3602, %v3599
    %v3990 = vpack.c.b16 %v3603, %v3600
    %v3991 = vpack.c.b16 %v3607, %v3604
    %v3992 = vpack.c.b16 %v3608, %v3605
    %v3993 = vpack.c.b16 %v3609, %v3606
    %v3994 = vpack.c.b16 %v3613, %v3610
    %v3995 = vpack.c.b16 %v3614, %v3611
    %v3996 = vpack.c.b16 %v3615, %v3612
    %v3997 = vpack.c.b16 %v3619, %v3616
    %v3998 = vpack.c.b16 %v3620, %v3617
    %v3999 = vpack.c.b16 %v3621, %v3618
    %v4000 = vpack.c.b16 %v3625, %v3622
    %v4001 = vpack.c.b16 %v3626, %v3623
    %v4002 = vpack.c.b16 %v3627, %v3624
    %v4003 = vpack.c.b16 %v3631, %v3628
    %v4004 = vpack.c.b16 %v3632, %v3629
    %v4005 = vpack.c.b16 %v3633, %v3630
    %v4006 = vpack.c.b16 %v3637, %v3634
    %v4007 = vpack.c.b16 %v3638, %v3635
    %v4008 = vpack.c.b16 %v3639, %v3636
    %v4009 = vpack.c.b16 %v3643, %v3640
    %v4010 = vpack.c.b16 %v3644, %v3641
    %v4011 = vpack.c.b16 %v3645, %v3642
    %v4012 = vpack.c.b16 %v3649, %v3646
    %v4013 = vpack.c.b16 %v3650, %v3647
    %v4014 = vpack.c.b16 %v3651, %v3648
    %v4015 = vpack.c.b16 %v3655, %v3652
    %v4016 = vpack.c.b16 %v3656, %v3653
    %v4017 = vpack.c.b16 %v3657, %v3654
    %v4018 = vpack.c.b16 %v3661, %v3658
    %v4019 = vpack.c.b16 %v3662, %v3659
    %v4020 = vpack.c.b16 %v3663, %v3660
    %v4021 = vpack.c.b16 %v3667, %v3664
    %v4022 = vpack.c.b16 %v3668, %v3665
    %v4023 = vpack.c.b16 %v3669, %v3666
    %v4024 = vpack.c.b16 %v3673, %v3670
    %v4025 = vpack.c.b16 %v3674, %v3671
    %v4026 = vpack.c.b16 %v3675, %v3672
    %v4027 = vpack.c.b16 %v3679, %v3676
    %v4028 = vpack.c.b16 %v3680, %v3677
    %v4029 = vpack.c.b16 %v3681, %v3678
    %v4030 = vpack.c.b16 %v3685, %v3682
    %v4031 = vpack.c.b16 %v3686, %v3683
    %v4032 = vpack.c.b16 %v3687, %v3684
    %v4033 = vpack.c.b16 %v3691, %v3688
    %v4034 = vpack.c.b16 %v3692, %v3689
    %v4035 = vpack.c.b16 %v3693, %v3690
    %v4036 = vpack.c.b16 %v3697, %v3694
    %v4037 = vpack.c.b16 %v3698, %v3695
    %v4038 = vpack.c.b16 %v3699, %v3696
    %v4039 = vpack.c.b16 %v3703, %v3700
    %v4040 = vpack.c.b16 %v3704, %v3701
    %v4041 = vpack.c.b16 %v3705, %v3702
    %v4042 = vpack.c.b16 %v3709, %v3706
    %v4043 = vpack.c.b16 %v3710, %v3707
    %v4044 = vpack.c.b16 %v3711, %v3708
    %v4045 = vpack.c.b16 %v3715, %v3712
    %v4046 = vpack.c.b16 %v3716, %v3713
    %v4047 = vpack.c.b16 %v3717, %v3714
    %v4048 = vpack.c.b16 %v3721, %v3718
    %v4049 = vpack.c.b16 %v3722, %v3719
    %v4050 = vpack.c.b16 %v3723, %v3720
    %v4051 = vpack.c.b16 %v3727, %v3724
    %v4052 = vpack.c.b16 %v3728, %v3725
    %v4053 = vpack.c.b16 %v3729, %v3726
    %v4054 = vpack.c.b16 %v3733, %v3730
    %v4055 = vpack.c.b16 %v3734, %v3731
    %v4056 = vpack.c.b16 %v3735, %v3732
    %v4057 = vpack.c.b16 %v3739, %v3736
    %v4058 = vpack.c.b16 %v3740, %v3737
    %v4059 = vpack.c.b16 %v3741, %v3738
    %v4060 = vpack.c.b16 %v3745, %v3742
    %v4061 = vpack.c.b16 %v3746, %v3743
    %v4062 = vpack.c.b16 %v3747, %v3744
    %v4063 = vpack.c.b16 %v3751, %v3748
    %v4064 = vpack.c.b16 %v3752, %v3749
    %v4065 = vpack.c.b16 %v3753, %v3750
    %v4066 = vpack.c.b16 %v3757, %v3754
    %v4067 = vpack.c.b16 %v3758, %v3755
    %v4068 = vpack.c.b16 %v3759, %v3756
    %v4069 = vpack.c.b16 %v3763, %v3760
    %v4070 = vpack.c.b16 %v3764, %v3761
    %v4071 = vpack.c.b16 %v3765, %v3762
    %v4072 = vpack.c.b16 %v3769, %v3766
    %v4073 = vpack.c.b16 %v3770, %v3767
    %v4074 = vpack.c.b16 %v3771, %v3768
    %v4075 = vpack.c.b16 %v3775, %v3772
    %v4076 = vpack.c.b16 %v3776, %v3773
    %v4077 = vpack.c.b16 %v3777, %v3774
    %v4078 = vpack.c.b16 %v3781, %v3778
    %v4079 = vpack.c.b16 %v3782, %v3779
    %v4080 = vpack.c.b16 %v3783, %v3780
    %v4081 = vpack.c.b16 %v3787, %v3784
    %v4082 = vpack.c.b16 %v3788, %v3785
    %v4083 = vpack.c.b16 %v3789, %v3786
    %v4084 = vpack.c.b16 %v3793, %v3790
    %v4085 = vpack.c.b16 %v3794, %v3791
    %v4086 = vpack.c.b16 %v3795, %v3792
    %v4087 = vpack.c.b16 %v3799, %v3796
    %v4088 = vpack.c.b16 %v3800, %v3797
    %v4089 = vpack.c.b16 %v3801, %v3798
    %4378 = vmatprep.subr.bf16.mxu0 %v3824
    %4379 = vmatpush1.bf16.msra.mxu0 %v3823
    %4380 = vmatprep.subr.bf16.mxu0 %v3821
    %4381 = vmatpush1.bf16.msra.mxu0 %v3820
    %4382 = vmatprep.subr.bf16.mxu0 %v3818
    %4383 = vmatpush1.bf16.msra.mxu0 %v3817
    %4384 = vmatprep.subr.bf16.mxu0 %v3815
    %4385 = vmatpush1.bf16.msra.mxu0 %v3814
    %4386 = vmatprep.subr.bf16.mxu0 %v3812
    %4387 = vmatpush1.bf16.msra.mxu0 %v3811
    %4388 = vmatprep.subr.bf16.mxu0 %v3809
    %4389 = vmatpush1.bf16.msra.mxu0 %v3808
    %4390 = vmatprep.subr.bf16.mxu0 %v3806
    %4391 = vmatpush1.bf16.msra.mxu0 %v3805
    %4392 = vmatprep.subr.bf16.mxu0 %v3803
    %4393 = vmatpush1.bf16.msra.mxu0 %v3802
    %4394 = vmatprep.subr.bf16.mxu0 %v3848
    %4395 = vmatpush2.bf16.msra.mxu0 %v3847
    %4396 = vmatprep.subr.bf16.mxu0 %v3845
    %4397 = vmatpush2.bf16.msra.mxu0 %v3844
    %4398 = vmatprep.subr.bf16.mxu0 %v3842
    %4399 = vmatpush2.bf16.msra.mxu0 %v3841
    %4400 = vmatprep.subr.bf16.mxu0 %v3839
    %4401 = vmatpush2.bf16.msra.mxu0 %v3838
    %4402 = vmatprep.subr.bf16.mxu0 %v3836
    %4403 = vmatpush2.bf16.msra.mxu0 %v3835
    %4404 = vmatprep.subr.bf16.mxu0 %v3833
    %4405 = vmatpush2.bf16.msra.mxu0 %v3832
    %4406 = vmatprep.subr.bf16.mxu0 %v3830
    %4407 = vmatpush2.bf16.msra.mxu0 %v3829
    %4408 = vmatprep.subr.bf16.mxu0 %v3827
    %4409 = vmatpush2.bf16.msra.mxu0 %v3826
    %4410 = vmatprep.mubr.bf16.mxu0 %v2430
    %4411 = vmatmul.mubr.bf16.gmra.mxu0 %v2429
    %v4412 = vpop.f32.mrf.mxu0
    %v4413 = vadd.f32 %v2830, %v4412
    %v4414 = vpop.f32.mrf.mxu0
    %v4415 = vadd.f32 %v2834, %v4414
    %v4416 = vpop.f32.mrf.mxu0
    %v4417 = vadd.f32 %v2830, %v4416
    %v4418 = vpop.f32.mrf.mxu0
    %v4419 = vadd.f32 %v2834, %v4418
    %4420 = vdwg.mxu0
    %4421 = vmatprep.subr.bf16.mxu0 %v3872
    %4422 = vmatpush1.bf16.msra.mxu0 %v3871
    %4423 = vmatprep.subr.bf16.mxu0 %v3869
    %4424 = vmatpush1.bf16.msra.mxu0 %v3868
    %4425 = vmatprep.subr.bf16.mxu0 %v3866
    %4426 = vmatpush1.bf16.msra.mxu0 %v3865
    %4427 = vmatprep.subr.bf16.mxu0 %v3863
    %4428 = vmatpush1.bf16.msra.mxu0 %v3862
    %4429 = vmatprep.subr.bf16.mxu0 %v3860
    %4430 = vmatpush1.bf16.msra.mxu0 %v3859
    %4431 = vmatprep.subr.bf16.mxu0 %v3857
    %4432 = vmatpush1.bf16.msra.mxu0 %v3856
    %4433 = vmatprep.subr.bf16.mxu0 %v3854
    %4434 = vmatpush1.bf16.msra.mxu0 %v3853
    %4435 = vmatprep.subr.bf16.mxu0 %v3851
    %4436 = vmatpush1.bf16.msra.mxu0 %v3850
    %4437 = vmatprep.subr.bf16.mxu0 %v3896
    %4438 = vmatpush2.bf16.msra.mxu0 %v3895
    %4439 = vmatprep.subr.bf16.mxu0 %v3893
    %4440 = vmatpush2.bf16.msra.mxu0 %v3892
    %4441 = vmatprep.subr.bf16.mxu0 %v3890
    %4442 = vmatpush2.bf16.msra.mxu0 %v3889
    %4443 = vmatprep.subr.bf16.mxu0 %v3887
    %4444 = vmatpush2.bf16.msra.mxu0 %v3886
    %4445 = vmatprep.subr.bf16.mxu0 %v3884
    %4446 = vmatpush2.bf16.msra.mxu0 %v3883
    %4447 = vmatprep.subr.bf16.mxu0 %v3881
    %4448 = vmatpush2.bf16.msra.mxu0 %v3880
    %4449 = vmatprep.subr.bf16.mxu0 %v3878
    %4450 = vmatpush2.bf16.msra.mxu0 %v3877
    %4451 = vmatprep.subr.bf16.mxu0 %v3875
    %4452 = vmatpush2.bf16.msra.mxu0 %v3874
    %4453 = vmatprep.mubr.bf16.mxu0 %v2432
    %4454 = vmatmul.mubr.bf16.gmra.mxu0 %v2431
    %v4455 = vpop.f32.mrf.mxu0
    %v4456 = vadd.f32 %v4413, %v4455
    %v4457 = vpop.f32.mrf.mxu0
    %v4458 = vadd.f32 %v4415, %v4457
    %v4459 = vpop.f32.mrf.mxu0
    %v4460 = vadd.f32 %v4417, %v4459
    %v4461 = vpop.f32.mrf.mxu0
    %v4462 = vadd.f32 %v4419, %v4461
    %4463 = vdwg.mxu0
    %4464 = vmatprep.subr.bf16.mxu0 %v3920
    %4465 = vmatpush1.bf16.msra.mxu0 %v3919
    %4466 = vmatprep.subr.bf16.mxu0 %v3917
    %4467 = vmatpush1.bf16.msra.mxu0 %v3916
    %4468 = vmatprep.subr.bf16.mxu0 %v3914
    %4469 = vmatpush1.bf16.msra.mxu0 %v3913
    %4470 = vmatprep.subr.bf16.mxu0 %v3911
    %4471 = vmatpush1.bf16.msra.mxu0 %v3910
    %4472 = vmatprep.subr.bf16.mxu0 %v3908
    %4473 = vmatpush1.bf16.msra.mxu0 %v3907
    %4474 = vmatprep.subr.bf16.mxu0 %v3905
    %4475 = vmatpush1.bf16.msra.mxu0 %v3904
    %4476 = vmatprep.subr.bf16.mxu0 %v3902
    %4477 = vmatpush1.bf16.msra.mxu0 %v3901
    %4478 = vmatprep.subr.bf16.mxu0 %v3899
    %4479 = vmatpush1.bf16.msra.mxu0 %v3898
    %4480 = vmatprep.subr.bf16.mxu0 %v3944
    %4481 = vmatpush2.bf16.msra.mxu0 %v3943
    %4482 = vmatprep.subr.bf16.mxu0 %v3941
    %4483 = vmatpush2.bf16.msra.mxu0 %v3940
    %4484 = vmatprep.subr.bf16.mxu0 %v3938
    %4485 = vmatpush2.bf16.msra.mxu0 %v3937
    %4486 = vmatprep.subr.bf16.mxu0 %v3935
    %4487 = vmatpush2.bf16.msra.mxu0 %v3934
    %4488 = vmatprep.subr.bf16.mxu0 %v3932
    %4489 = vmatpush2.bf16.msra.mxu0 %v3931
    %4490 = vmatprep.subr.bf16.mxu0 %v3929
    %4491 = vmatpush2.bf16.msra.mxu0 %v3928
    %4492 = vmatprep.subr.bf16.mxu0 %v3926
    %4493 = vmatpush2.bf16.msra.mxu0 %v3925
    %4494 = vmatprep.subr.bf16.mxu0 %v3923
    %4495 = vmatpush2.bf16.msra.mxu0 %v3922
    %4496 = vmatprep.mubr.bf16.mxu0 %v2434
    %4497 = vmatmul.mubr.bf16.gmra.mxu0 %v2433
    %v4498 = vpop.f32.mrf.mxu0
    %v4499 = vadd.f32 %v4456, %v4498
    %v4500 = vpop.f32.mrf.mxu0
    %v4501 = vadd.f32 %v4458, %v4500
    %v4502 = vpop.f32.mrf.mxu0
    %v4503 = vadd.f32 %v4460, %v4502
    %v4504 = vpop.f32.mrf.mxu0
    %v4505 = vadd.f32 %v4462, %v4504
    %4506 = vdwg.mxu0
    %4507 = vmatprep.subr.bf16.mxu0 %v3968
    %4508 = vmatpush1.bf16.msra.mxu0 %v3967
    %4509 = vmatprep.subr.bf16.mxu0 %v3965
    %4510 = vmatpush1.bf16.msra.mxu0 %v3964
    %4511 = vmatprep.subr.bf16.mxu0 %v3962
    %4512 = vmatpush1.bf16.msra.mxu0 %v3961
    %4513 = vmatprep.subr.bf16.mxu0 %v3959
    %4514 = vmatpush1.bf16.msra.mxu0 %v3958
    %4515 = vmatprep.subr.bf16.mxu0 %v3956
    %4516 = vmatpush1.bf16.msra.mxu0 %v3955
    %4517 = vmatprep.subr.bf16.mxu0 %v3953
    %4518 = vmatpush1.bf16.msra.mxu0 %v3952
    %4519 = vmatprep.subr.bf16.mxu0 %v3950
    %4520 = vmatpush1.bf16.msra.mxu0 %v3949
    %4521 = vmatprep.subr.bf16.mxu0 %v3947
    %4522 = vmatpush1.bf16.msra.mxu0 %v3946
    %4523 = vmatprep.subr.bf16.mxu0 %v3992
    %4524 = vmatpush2.bf16.msra.mxu0 %v3991
    %4525 = vmatprep.subr.bf16.mxu0 %v3989
    %4526 = vmatpush2.bf16.msra.mxu0 %v3988
    %4527 = vmatprep.subr.bf16.mxu0 %v3986
    %4528 = vmatpush2.bf16.msra.mxu0 %v3985
    %4529 = vmatprep.subr.bf16.mxu0 %v3983
    %4530 = vmatpush2.bf16.msra.mxu0 %v3982
    %4531 = vmatprep.subr.bf16.mxu0 %v3980
    %4532 = vmatpush2.bf16.msra.mxu0 %v3979
    %4533 = vmatprep.subr.bf16.mxu0 %v3977
    %4534 = vmatpush2.bf16.msra.mxu0 %v3976
    %4535 = vmatprep.subr.bf16.mxu0 %v3974
    %4536 = vmatpush2.bf16.msra.mxu0 %v3973
    %4537 = vmatprep.subr.bf16.mxu0 %v3971
    %4538 = vmatpush2.bf16.msra.mxu0 %v3970
    %4539 = vmatprep.mubr.bf16.mxu0 %v2436
    %4540 = vmatmul.mubr.bf16.gmra.mxu0 %v2435
    %v4541 = vpop.f32.mrf.mxu0
    %v4542 = vadd.f32 %v4499, %v4541
    %v4543 = vpop.f32.mrf.mxu0
    %v4544 = vadd.f32 %v4501, %v4543
    %v4545 = vpop.f32.mrf.mxu0
    %v4546 = vadd.f32 %v4503, %v4545
    %v4547 = vpop.f32.mrf.mxu0
    %v4548 = vadd.f32 %v4505, %v4547
    %4549 = vdwg.mxu0
    %4550 = vmatprep.subr.bf16.mxu0 %v4016
    %4551 = vmatpush1.bf16.msra.mxu0 %v4015
    %4552 = vmatprep.subr.bf16.mxu0 %v4013
    %4553 = vmatpush1.bf16.msra.mxu0 %v4012
    %4554 = vmatprep.subr.bf16.mxu0 %v4010
    %4555 = vmatpush1.bf16.msra.mxu0 %v4009
    %4556 = vmatprep.subr.bf16.mxu0 %v4007
    %4557 = vmatpush1.bf16.msra.mxu0 %v4006
    %4558 = vmatprep.subr.bf16.mxu0 %v4004
    %4559 = vmatpush1.bf16.msra.mxu0 %v4003
    %4560 = vmatprep.subr.bf16.mxu0 %v4001
    %4561 = vmatpush1.bf16.msra.mxu0 %v4000
    %4562 = vmatprep.subr.bf16.mxu0 %v3998
    %4563 = vmatpush1.bf16.msra.mxu0 %v3997
    %4564 = vmatprep.subr.bf16.mxu0 %v3995
    %4565 = vmatpush1.bf16.msra.mxu0 %v3994
    %4566 = vmatprep.subr.bf16.mxu0 %v4040
    %4567 = vmatpush2.bf16.msra.mxu0 %v4039
    %4568 = vmatprep.subr.bf16.mxu0 %v4037
    %4569 = vmatpush2.bf16.msra.mxu0 %v4036
    %4570 = vmatprep.subr.bf16.mxu0 %v4034
    %4571 = vmatpush2.bf16.msra.mxu0 %v4033
    %4572 = vmatprep.subr.bf16.mxu0 %v4031
    %4573 = vmatpush2.bf16.msra.mxu0 %v4030
    %4574 = vmatprep.subr.bf16.mxu0 %v4028
    %4575 = vmatpush2.bf16.msra.mxu0 %v4027
    %4576 = vmatprep.subr.bf16.mxu0 %v4025
    %4577 = vmatpush2.bf16.msra.mxu0 %v4024
    %4578 = vmatprep.subr.bf16.mxu0 %v4022
    %4579 = vmatpush2.bf16.msra.mxu0 %v4021
    %4580 = vmatprep.subr.bf16.mxu0 %v4019
    %4581 = vmatpush2.bf16.msra.mxu0 %v4018
    %4582 = vmatprep.mubr.bf16.mxu0 %v2438
    %4583 = vmatmul.mubr.bf16.gmra.mxu0 %v2437
    %v4584 = vpop.f32.mrf.mxu0
    %v4585 = vadd.f32 %v4542, %v4584
    %v4586 = vpop.f32.mrf.mxu0
    %v4587 = vadd.f32 %v4544, %v4586
    %v4588 = vpop.f32.mrf.mxu0
    %v4589 = vadd.f32 %v4546, %v4588
    %v4590 = vpop.f32.mrf.mxu0
    %v4591 = vadd.f32 %v4548, %v4590
    %4592 = vdwg.mxu0
    %4593 = vmatprep.subr.bf16.mxu0 %v4064
    %4594 = vmatpush1.bf16.msra.mxu0 %v4063
    %4595 = vmatprep.subr.bf16.mxu0 %v4061
    %4596 = vmatpush1.bf16.msra.mxu0 %v4060
    %4597 = vmatprep.subr.bf16.mxu0 %v4058
    %4598 = vmatpush1.bf16.msra.mxu0 %v4057
    %4599 = vmatprep.subr.bf16.mxu0 %v4055
    %4600 = vmatpush1.bf16.msra.mxu0 %v4054
    %4601 = vmatprep.subr.bf16.mxu0 %v4052
    %4602 = vmatpush1.bf16.msra.mxu0 %v4051
    %4603 = vmatprep.subr.bf16.mxu0 %v4049
    %4604 = vmatpush1.bf16.msra.mxu0 %v4048
    %4605 = vmatprep.subr.bf16.mxu0 %v4046
    %4606 = vmatpush1.bf16.msra.mxu0 %v4045
    %4607 = vmatprep.subr.bf16.mxu0 %v4043
    %4608 = vmatpush1.bf16.msra.mxu0 %v4042
    %4609 = vmatprep.subr.bf16.mxu0 %v4088
    %4610 = vmatpush2.bf16.msra.mxu0 %v4087
    %4611 = vmatprep.subr.bf16.mxu0 %v4085
    %4612 = vmatpush2.bf16.msra.mxu0 %v4084
    %4613 = vmatprep.subr.bf16.mxu0 %v4082
    %4614 = vmatpush2.bf16.msra.mxu0 %v4081
    %4615 = vmatprep.subr.bf16.mxu0 %v4079
    %4616 = vmatpush2.bf16.msra.mxu0 %v4078
    %4617 = vmatprep.subr.bf16.mxu0 %v4076
    %4618 = vmatpush2.bf16.msra.mxu0 %v4075
    %4619 = vmatprep.subr.bf16.mxu0 %v4073
    %4620 = vmatpush2.bf16.msra.mxu0 %v4072
    %4621 = vmatprep.subr.bf16.mxu0 %v4070
    %4622 = vmatpush2.bf16.msra.mxu0 %v4069
    %4623 = vmatprep.subr.bf16.mxu0 %v4067
    %4624 = vmatpush2.bf16.msra.mxu0 %v4066
    %4625 = vmatprep.mubr.bf16.mxu0 %v2440
    %4626 = vmatmul.mubr.bf16.gmra.mxu0 %v2439
    %v4627 = vpop.f32.mrf.mxu0
    %v4628 = vadd.f32 %v4585, %v4627
    %v4629 = vpop.f32.mrf.mxu0
    %v4630 = vadd.f32 %v4587, %v4629
    %v4631 = vpop.f32.mrf.mxu0
    %v4632 = vadd.f32 %v4589, %v4631
    %v4633 = vpop.f32.mrf.mxu0
    %v4634 = vadd.f32 %v4591, %v4633
    %4635 = vdwg.mxu0
    %4636 = vmatprep.subr.bf16.mxu0 0
    %4637 = vmatpush1.bf16.msra.mxu0 %v3825
    %4638 = vmatprep.subr.bf16.mxu0 0
    %4639 = vmatpush1.bf16.msra.mxu0 %v3822
    %4640 = vmatprep.subr.bf16.mxu0 0
    %4641 = vmatpush1.bf16.msra.mxu0 %v3819
    %4642 = vmatprep.subr.bf16.mxu0 0
    %4643 = vmatpush1.bf16.msra.mxu0 %v3816
    %4644 = vmatprep.subr.bf16.mxu0 0
    %4645 = vmatpush1.bf16.msra.mxu0 %v3813
    %4646 = vmatprep.subr.bf16.mxu0 0
    %4647 = vmatpush1.bf16.msra.mxu0 %v3810
    %4648 = vmatprep.subr.bf16.mxu0 0
    %4649 = vmatpush1.bf16.msra.mxu0 %v3807
    %4650 = vmatprep.subr.bf16.mxu0 0
    %4651 = vmatpush1.bf16.msra.mxu0 %v3804
    %4652 = vmatprep.subr.bf16.mxu0 0
    %4653 = vmatpush2.bf16.msra.mxu0 %v3849
    %4654 = vmatprep.subr.bf16.mxu0 0
    %4655 = vmatpush2.bf16.msra.mxu0 %v3846
    %4656 = vmatprep.subr.bf16.mxu0 0
    %4657 = vmatpush2.bf16.msra.mxu0 %v3843
    %4658 = vmatprep.subr.bf16.mxu0 0
    %4659 = vmatpush2.bf16.msra.mxu0 %v3840
    %4660 = vmatprep.subr.bf16.mxu0 0
    %4661 = vmatpush2.bf16.msra.mxu0 %v3837
    %4662 = vmatprep.subr.bf16.mxu0 0
    %4663 = vmatpush2.bf16.msra.mxu0 %v3834
    %4664 = vmatprep.subr.bf16.mxu0 0
    %4665 = vmatpush2.bf16.msra.mxu0 %v3831
    %4666 = vmatprep.subr.bf16.mxu0 0
    %4667 = vmatpush2.bf16.msra.mxu0 %v3828
    %4668 = vmatprep.mubr.bf16.mxu0 %v2430
    %4669 = vmatmul.mubr.bf16.gmra.mxu0 %v2429
    %v4670 = vpop.f32.mrf.mxu0
    %v4671 = vadd.f32 %v2838, %v4670
    %v4672 = vpop.f32.mrf.mxu0
    %v4673 = vpop.f32.mrf.mxu0
    %v4674 = vadd.f32 %v2838, %v4673
    %v4675 = vpop.f32.mrf.mxu0
    %4676 = vdwg.mxu0
    %4677 = vmatprep.subr.bf16.mxu0 0
    %4678 = vmatpush1.bf16.msra.mxu0 %v3873
    %4679 = vmatprep.subr.bf16.mxu0 0
    %4680 = vmatpush1.bf16.msra.mxu0 %v3870
    %4681 = vmatprep.subr.bf16.mxu0 0
    %4682 = vmatpush1.bf16.msra.mxu0 %v3867
    %4683 = vmatprep.subr.bf16.mxu0 0
    %4684 = vmatpush1.bf16.msra.mxu0 %v3864
    %4685 = vmatprep.subr.bf16.mxu0 0
    %4686 = vmatpush1.bf16.msra.mxu0 %v3861
    %4687 = vmatprep.subr.bf16.mxu0 0
    %4688 = vmatpush1.bf16.msra.mxu0 %v3858
    %4689 = vmatprep.subr.bf16.mxu0 0
    %4690 = vmatpush1.bf16.msra.mxu0 %v3855
    %4691 = vmatprep.subr.bf16.mxu0 0
    %4692 = vmatpush1.bf16.msra.mxu0 %v3852
    %4693 = vmatprep.subr.bf16.mxu0 0
    %4694 = vmatpush2.bf16.msra.mxu0 %v3897
    %4695 = vmatprep.subr.bf16.mxu0 0
    %4696 = vmatpush2.bf16.msra.mxu0 %v3894
    %4697 = vmatprep.subr.bf16.mxu0 0
    %4698 = vmatpush2.bf16.msra.mxu0 %v3891
    %4699 = vmatprep.subr.bf16.mxu0 0
    %4700 = vmatpush2.bf16.msra.mxu0 %v3888
    %4701 = vmatprep.subr.bf16.mxu0 0
    %4702 = vmatpush2.bf16.msra.mxu0 %v3885
    %4703 = vmatprep.subr.bf16.mxu0 0
    %4704 = vmatpush2.bf16.msra.mxu0 %v3882
    %4705 = vmatprep.subr.bf16.mxu0 0
    %4706 = vmatpush2.bf16.msra.mxu0 %v3879
    %4707 = vmatprep.subr.bf16.mxu0 0
    %4708 = vmatpush2.bf16.msra.mxu0 %v3876
    %4709 = vmatprep.mubr.bf16.mxu0 %v2432
    %4710 = vmatmul.mubr.bf16.gmra.mxu0 %v2431
    %v4711 = vpop.f32.mrf.mxu0
    %v4712 = vadd.f32 %v4671, %v4711
    %v4713 = vpop.f32.mrf.mxu0
    %v4714 = vpop.f32.mrf.mxu0
    %v4715 = vadd.f32 %v4674, %v4714
    %v4716 = vpop.f32.mrf.mxu0
    %4717 = vdwg.mxu0
    %4718 = vmatprep.subr.bf16.mxu0 0
    %4719 = vmatpush1.bf16.msra.mxu0 %v3921
    %4720 = vmatprep.subr.bf16.mxu0 0
    %4721 = vmatpush1.bf16.msra.mxu0 %v3918
    %4722 = vmatprep.subr.bf16.mxu0 0
    %4723 = vmatpush1.bf16.msra.mxu0 %v3915
    %4724 = vmatprep.subr.bf16.mxu0 0
    %4725 = vmatpush1.bf16.msra.mxu0 %v3912
    %4726 = vmatprep.subr.bf16.mxu0 0
    %4727 = vmatpush1.bf16.msra.mxu0 %v3909
    %4728 = vmatprep.subr.bf16.mxu0 0
    %4729 = vmatpush1.bf16.msra.mxu0 %v3906
    %4730 = vmatprep.subr.bf16.mxu0 0
    %4731 = vmatpush1.bf16.msra.mxu0 %v3903
    %4732 = vmatprep.subr.bf16.mxu0 0
    %4733 = vmatpush1.bf16.msra.mxu0 %v3900
    %4734 = vmatprep.subr.bf16.mxu0 0
    %4735 = vmatpush2.bf16.msra.mxu0 %v3945
    %4736 = vmatprep.subr.bf16.mxu0 0
    %4737 = vmatpush2.bf16.msra.mxu0 %v3942
    %4738 = vmatprep.subr.bf16.mxu0 0
    %4739 = vmatpush2.bf16.msra.mxu0 %v3939
    %4740 = vmatprep.subr.bf16.mxu0 0
    %4741 = vmatpush2.bf16.msra.mxu0 %v3936
    %4742 = vmatprep.subr.bf16.mxu0 0
    %4743 = vmatpush2.bf16.msra.mxu0 %v3933
    %4744 = vmatprep.subr.bf16.mxu0 0
    %4745 = vmatpush2.bf16.msra.mxu0 %v3930
    %4746 = vmatprep.subr.bf16.mxu0 0
    %4747 = vmatpush2.bf16.msra.mxu0 %v3927
    %4748 = vmatprep.subr.bf16.mxu0 0
    %4749 = vmatpush2.bf16.msra.mxu0 %v3924
    %4750 = vmatprep.mubr.bf16.mxu0 %v2434
    %4751 = vmatmul.mubr.bf16.gmra.mxu0 %v2433
    %v4752 = vpop.f32.mrf.mxu0
    %v4753 = vadd.f32 %v4712, %v4752
    %v4754 = vpop.f32.mrf.mxu0
    %v4755 = vpop.f32.mrf.mxu0
    %v4756 = vadd.f32 %v4715, %v4755
    %v4757 = vpop.f32.mrf.mxu0
    %4758 = vdwg.mxu0
    %4759 = vmatprep.subr.bf16.mxu0 0
    %4760 = vmatpush1.bf16.msra.mxu0 %v3969
    %4761 = vmatprep.subr.bf16.mxu0 0
    %4762 = vmatpush1.bf16.msra.mxu0 %v3966
    %4763 = vmatprep.subr.bf16.mxu0 0
    %4764 = vmatpush1.bf16.msra.mxu0 %v3963
    %4765 = vmatprep.subr.bf16.mxu0 0
    %4766 = vmatpush1.bf16.msra.mxu0 %v3960
    %4767 = vmatprep.subr.bf16.mxu0 0
    %4768 = vmatpush1.bf16.msra.mxu0 %v3957
    %4769 = vmatprep.subr.bf16.mxu0 0
    %4770 = vmatpush1.bf16.msra.mxu0 %v3954
    %4771 = vmatprep.subr.bf16.mxu0 0
    %4772 = vmatpush1.bf16.msra.mxu0 %v3951
    %4773 = vmatprep.subr.bf16.mxu0 0
    %4774 = vmatpush1.bf16.msra.mxu0 %v3948
    %4775 = vmatprep.subr.bf16.mxu0 0
    %4776 = vmatpush2.bf16.msra.mxu0 %v3993
    %4777 = vmatprep.subr.bf16.mxu0 0
    %4778 = vmatpush2.bf16.msra.mxu0 %v3990
    %4779 = vmatprep.subr.bf16.mxu0 0
    %4780 = vmatpush2.bf16.msra.mxu0 %v3987
    %4781 = vmatprep.subr.bf16.mxu0 0
    %4782 = vmatpush2.bf16.msra.mxu0 %v3984
    %4783 = vmatprep.subr.bf16.mxu0 0
    %4784 = vmatpush2.bf16.msra.mxu0 %v3981
    %4785 = vmatprep.subr.bf16.mxu0 0
    %4786 = vmatpush2.bf16.msra.mxu0 %v3978
    %4787 = vmatprep.subr.bf16.mxu0 0
    %4788 = vmatpush2.bf16.msra.mxu0 %v3975
    %4789 = vmatprep.subr.bf16.mxu0 0
    %4790 = vmatpush2.bf16.msra.mxu0 %v3972
    %4791 = vmatprep.mubr.bf16.mxu0 %v2436
    %4792 = vmatmul.mubr.bf16.gmra.mxu0 %v2435
    %v4793 = vpop.f32.mrf.mxu0
    %v4794 = vadd.f32 %v4753, %v4793
    %v4795 = vpop.f32.mrf.mxu0
    %v4796 = vpop.f32.mrf.mxu0
    %v4797 = vadd.f32 %v4756, %v4796
    %v4798 = vpop.f32.mrf.mxu0
    %4799 = vdwg.mxu0
    %4800 = vmatprep.subr.bf16.mxu0 0
    %4801 = vmatpush1.bf16.msra.mxu0 %v4017
    %4802 = vmatprep.subr.bf16.mxu0 0
    %4803 = vmatpush1.bf16.msra.mxu0 %v4014
    %4804 = vmatprep.subr.bf16.mxu0 0
    %4805 = vmatpush1.bf16.msra.mxu0 %v4011
    %4806 = vmatprep.subr.bf16.mxu0 0
    %4807 = vmatpush1.bf16.msra.mxu0 %v4008
    %4808 = vmatprep.subr.bf16.mxu0 0
    %4809 = vmatpush1.bf16.msra.mxu0 %v4005
    %4810 = vmatprep.subr.bf16.mxu0 0
    %4811 = vmatpush1.bf16.msra.mxu0 %v4002
    %4812 = vmatprep.subr.bf16.mxu0 0
    %4813 = vmatpush1.bf16.msra.mxu0 %v3999
    %4814 = vmatprep.subr.bf16.mxu0 0
    %4815 = vmatpush1.bf16.msra.mxu0 %v3996
    %4816 = vmatprep.subr.bf16.mxu0 0
    %4817 = vmatpush2.bf16.msra.mxu0 %v4041
    %4818 = vmatprep.subr.bf16.mxu0 0
    %4819 = vmatpush2.bf16.msra.mxu0 %v4038
    %4820 = vmatprep.subr.bf16.mxu0 0
    %4821 = vmatpush2.bf16.msra.mxu0 %v4035
    %4822 = vmatprep.subr.bf16.mxu0 0
    %4823 = vmatpush2.bf16.msra.mxu0 %v4032
    %4824 = vmatprep.subr.bf16.mxu0 0
    %4825 = vmatpush2.bf16.msra.mxu0 %v4029
    %4826 = vmatprep.subr.bf16.mxu0 0
    %4827 = vmatpush2.bf16.msra.mxu0 %v4026
    %4828 = vmatprep.subr.bf16.mxu0 0
    %4829 = vmatpush2.bf16.msra.mxu0 %v4023
    %4830 = vmatprep.subr.bf16.mxu0 0
    %4831 = vmatpush2.bf16.msra.mxu0 %v4020
    %4832 = vmatprep.mubr.bf16.mxu0 %v2438
    %4833 = vmatmul.mubr.bf16.gmra.mxu0 %v2437
    %v4834 = vpop.f32.mrf.mxu0
    %v4835 = vadd.f32 %v4794, %v4834
    %v4836 = vpop.f32.mrf.mxu0
    %v4837 = vpop.f32.mrf.mxu0
    %v4838 = vadd.f32 %v4797, %v4837
    %v4839 = vpop.f32.mrf.mxu0
    %4840 = vdwg.mxu0
    %4841 = vmatprep.subr.bf16.mxu0 0
    %4842 = vmatpush1.bf16.msra.mxu0 %v4065
    %4843 = vmatprep.subr.bf16.mxu0 0
    %4844 = vmatpush1.bf16.msra.mxu0 %v4062
    %4845 = vmatprep.subr.bf16.mxu0 0
    %4846 = vmatpush1.bf16.msra.mxu0 %v4059
    %4847 = vmatprep.subr.bf16.mxu0 0
    %4848 = vmatpush1.bf16.msra.mxu0 %v4056
    %4849 = vmatprep.subr.bf16.mxu0 0
    %4850 = vmatpush1.bf16.msra.mxu0 %v4053
    %4851 = vmatprep.subr.bf16.mxu0 0
    %4852 = vmatpush1.bf16.msra.mxu0 %v4050
    %4853 = vmatprep.subr.bf16.mxu0 0
    %4854 = vmatpush1.bf16.msra.mxu0 %v4047
    %4855 = vmatprep.subr.bf16.mxu0 0
    %4856 = vmatpush1.bf16.msra.mxu0 %v4044
    %4857 = vmatprep.subr.bf16.mxu0 0
    %4858 = vmatpush2.bf16.msra.mxu0 %v4089
    %4859 = vmatprep.subr.bf16.mxu0 0
    %4860 = vmatpush2.bf16.msra.mxu0 %v4086
    %4861 = vmatprep.subr.bf16.mxu0 0
    %4862 = vmatpush2.bf16.msra.mxu0 %v4083
    %4863 = vmatprep.subr.bf16.mxu0 0
    %4864 = vmatpush2.bf16.msra.mxu0 %v4080
    %4865 = vmatprep.subr.bf16.mxu0 0
    %4866 = vmatpush2.bf16.msra.mxu0 %v4077
    %4867 = vmatprep.subr.bf16.mxu0 0
    %4868 = vmatpush2.bf16.msra.mxu0 %v4074
    %4869 = vmatprep.subr.bf16.mxu0 0
    %4870 = vmatpush2.bf16.msra.mxu0 %v4071
    %4871 = vmatprep.subr.bf16.mxu0 0
    %4872 = vmatpush2.bf16.msra.mxu0 %v4068
    %4873 = vmatprep.mubr.bf16.mxu0 %v2440
    %4874 = vmatmul.mubr.bf16.gmra.mxu0 %v2439
    %v4875 = vpop.f32.mrf.mxu0
    %v4876 = vadd.f32 %v4835, %v4875
    %v4877 = vpop.f32.mrf.mxu0
    %v4878 = vpop.f32.mrf.mxu0
    %v4879 = vadd.f32 %v4838, %v4878
    %v4880 = vpop.f32.mrf.mxu0
    %4881 = vdwg.mxu0
    %v4882 = vmax.f32 %v4628, 0.0
    %v4883 = vmax.f32 %v4630, 0.0
    %v4884 = vmax.f32 %v4876, 0.0
    %v4885 = vmax.f32 %v4632, 0.0
    %v4886 = vmax.f32 %v4634, 0.0
    %v4887 = vmax.f32 %v4879, 0.0
    %4888 = vst [vmem:[#allocation13] sm:$0xff] %v4882
    %4889 = vst [vmem:[#allocation13 + $0x8] sm:$0xff] %v4883
    %4890 = vst [vmem:[#allocation13 + $0x10] sm:$0xff] %v4884
    %4891 = vst [vmem:[#allocation13 + $0x18] sm:$0xff] %v4885
    %4892 = vst [vmem:[#allocation13 + $0x20] sm:$0xff] %v4886
    %4893 = vst [vmem:[#allocation13 + $0x28] sm:$0xff] %v4887
    // Predicated region
    $region42: #{tpu_custom_call.1} parent=1 // pred_check
      _
    $region43: #{tpu_custom_call.1} parent=1 // pred_check_branch
      %4895 = sbr.rel (0) target = $region45
    $region44: #{tpu_custom_call.1} parent=1 // pred_region
      %s4897 = ssub.s32 768, 768
      %4898 = vsyncadd [#allocation6], %s4897
      %s4899 = sshll.u32 [#allocation13], 4
      %s4900 = int_to_ptr.vmem [resolvable:$true] %s4899
      %4905 = dma.vmem_to_hbm [thread:$0]  %s4900, 768, %s6, [#allocation6], 384, 384, 24
    $region45: #{tpu_custom_call.1} parent=1 // pred_fallthru
      _
    // Predicated region
    $region46: #{tpu_custom_call.1} parent=1 // pred_check
      _
    $region47: #{tpu_custom_call.1} parent=1 // pred_check_branch
      %4907 = sbr.rel (0) target = $region49
    $region48: #{tpu_custom_call.1} parent=1 // pred_region
      %4908 = dma.done [#allocation6], 768
    $region49: #{tpu_custom_call.1} parent=1 // pred_fallthru
      _
    %4909 = vsyncpa [#allocation5], 1
    %4910 = vsyncpa [#allocation8], 1
    %4911 = vsyncpa [#allocation11], 1
    %4912 = vsyncpa [#allocation6], 1

</llo_original>
